<compile_context>
chip_gen: v7x
topology: tpu7x:2x2x1
jax: 0.10.0
libtpu: 0.0.40
codegen_flags: <defaults>
</compile_context>

<pallas_src>
import functools
import math

import jax
import jax.numpy as jnp
from jax.experimental import pallas as pl
from jax.experimental.pallas import tpu as pltpu

_LANE = 128


def _round_up(v, m):
    return (v + m - 1) // m * m


def _ffb_kernel(x_ref, w1_ref, b1_ref, w2_ref, b2_ref, wo_ref, bo_ref, out_ref,
                *, H, W):
    """One image per grid step; flat (H*W, Cp) lane-dense layout throughout."""
    HW = H * W
    Cp = x_ref.shape[-1]

    x = x_ref[0]                                    # (HW, Cp) f32

    # Column masks for the +/-1 horizontal shifts (computed once, reused by
    # both convs).  w_col is the within-row position of each flat index.
    w_col = jax.lax.broadcasted_iota(jnp.int32, (HW, 1), 0) % W
    ok_left = w_col > 0              # dx = -1 stays inside the row
    ok_right = w_col < (W - 1)       # dx = +1 stays inside the row

    def conv3x3(a, w_ref, b_ref):
        # a: (HW, Cp) f32 activation.
        # Horizontal taps -> one K = 3*Cp im2col slab (bf16 for the MXU).
        zrow = jnp.zeros((1, Cp), jnp.float32)
        a_m1 = jnp.where(ok_left, jnp.concatenate([zrow, a[:HW - 1]], axis=0), 0.0)
        a_p1 = jnp.where(ok_right, jnp.concatenate([a[1:], zrow], axis=0), 0.0)
        a3 = jnp.concatenate([a_m1.astype(jnp.bfloat16),
                              a.astype(jnp.bfloat16),
                              a_p1.astype(jnp.bfloat16)], axis=1)   # (HW, 3*Cp)
        # Vertical taps are aligned row shifts of the slab (W rows), with zero
        # bands supplying the conv's top/bottom zero padding.
        zband = jnp.zeros((W, 3 * Cp), jnp.bfloat16)
        a3_up = jnp.concatenate([zband, a3[:HW - W]], axis=0)       # ky = 0 (dy=-1)
        a3_dn = jnp.concatenate([a3[W:], zband], axis=0)            # ky = 2 (dy=+1)
        # Clean chain of MXU dots, f32 accumulation, bias last.
        acc = jnp.dot(a3_up, w_ref[0], preferred_element_type=jnp.float32)
        acc = acc + jnp.dot(a3, w_ref[1], preferred_element_type=jnp.float32)
        acc = acc + jnp.dot(a3_dn, w_ref[2], preferred_element_type=jnp.float32)
        return acc + b_ref[...].astype(jnp.float32)

    # ResidualConvUnit_custom (bn=False, groups=1)
    out = conv3x3(jnp.maximum(x, 0.0), w1_ref, b1_ref)
    out = conv3x3(jnp.maximum(out, 0.0), w2_ref, b2_ref)
    out = out + x                                   # skip_add.add(out, x), f32

    # out_conv: 1x1 convolution == channel matmul (lane-dense Cout).
    y = jnp.dot(out.astype(jnp.bfloat16), wo_ref[...],
                preferred_element_type=jnp.float32)
    out_ref[0] = (y + bo_ref[...].astype(jnp.float32)).astype(out_ref.dtype)


def feature_fusion_block(x, w1, b1, w2, b2, wo, bo):
    """x: (N, H, W, C) NHWC f32; w1/w2: (3,3,C,C) HWIO; wo: (C, Cout)."""
    N, H, W, C = x.shape
    Cout = wo.shape[1]
    HW = H * W
    Cp = _round_up(C, _LANE)
    Cop = _round_up(Cout, _LANE)

    # Lane-dense channel padding (zeros) + spatial flattening in the wrapper.
    xf = jnp.pad(x, ((0, 0), (0, 0), (0, 0), (0, Cp - C))).reshape(N, HW, Cp)

    def pack3x3(w):
        # HWIO (3,3,C,C) -> (3, 3*Cp, Cp): row index = kx*Cp + cin, matching
        # the in-kernel [dx=-1 | dx=0 | dx=+1] slab layout; bf16 for the MXU.
        wp = jnp.pad(w, ((0, 0), (0, 0), (0, Cp - C), (0, Cp - C)))
        return wp.reshape(3, 3 * Cp, Cp).astype(jnp.bfloat16)

    w1p, w2p = pack3x3(w1), pack3x3(w2)
    b1p = jnp.pad(b1, (0, Cp - C)).reshape(1, Cp)
    b2p = jnp.pad(b2, (0, Cp - C)).reshape(1, Cp)
    wop = jnp.pad(wo, ((0, Cp - C), (0, Cop - Cout))).astype(jnp.bfloat16)
    bop = jnp.pad(bo, (0, Cop - Cout)).reshape(1, Cop)

    kernel = functools.partial(_ffb_kernel, H=H, W=W)
    out = pl.pallas_call(
        kernel,
        out_shape=jax.ShapeDtypeStruct((N, HW, Cop), x.dtype),
        grid_spec=pltpu.PrefetchScalarGridSpec(
            num_scalar_prefetch=0,
            grid=(N,),
            in_specs=[
                pl.BlockSpec((1, HW, Cp), lambda n: (n, 0, 0)),
                pl.BlockSpec((3, 3 * Cp, Cp), lambda n: (0, 0, 0)),
                pl.BlockSpec((1, Cp), lambda n: (0, 0)),
                pl.BlockSpec((3, 3 * Cp, Cp), lambda n: (0, 0, 0)),
                pl.BlockSpec((1, Cp), lambda n: (0, 0)),
                pl.BlockSpec((Cp, Cop), lambda n: (0, 0)),
                pl.BlockSpec((1, Cop), lambda n: (0, 0)),
            ],
            out_specs=pl.BlockSpec((1, HW, Cop), lambda n: (n, 0, 0)),
        ),
        compiler_params=pltpu.CompilerParams(
            dimension_semantics=("parallel",)),
    )(xf, w1p, b1p, w2p, b2p, wop, bop)

    # TODO(synk): add a row-block grid axis (2-row halo) for production-size H*W so the im2col slab fits v7x's 64 MiB VMEM.
    return out.reshape(N, H, W, Cop)[..., :Cout]


def _init_params(key, features, out_features):
    # weights_init: conv weight ~ N(0, sqrt(2 / (kH*kW*out_channels))), bias = 0
    k1, k2, k3 = jax.random.split(key, 3)
    std3 = math.sqrt(2.0 / (3 * 3 * features))
    std1 = math.sqrt(2.0 / (1 * 1 * out_features))
    w1 = std3 * jax.random.normal(k1, (3, 3, features, features), jnp.float32)  # HWIO
    w2 = std3 * jax.random.normal(k2, (3, 3, features, features), jnp.float32)  # HWIO
    wo = std1 * jax.random.normal(k3, (features, out_features), jnp.float32)    # (Cin, Cout)
    b1 = jnp.zeros((features,), jnp.float32)
    b2 = jnp.zeros((features,), jnp.float32)
    bo = jnp.zeros((out_features,), jnp.float32)
    return w1, b1, w2, b2, wo, bo


def _reference(x, w1, b1, w2, b2, wo, bo):
    """Pure-JAX NHWC reference mirroring the PyTorch forward (f32)."""
    def conv3x3(a, w, b):
        y = jax.lax.conv_general_dilated(
            a, w, window_strides=(1, 1), padding=((1, 1), (1, 1)),
            dimension_numbers=("NHWC", "HWIO", "NHWC"))
        return y + b
    out = jnp.maximum(x, 0.0)
    out = conv3x3(out, w1, b1)
    out = jnp.maximum(out, 0.0)
    out = conv3x3(out, w2, b2)
    out = out + x
    return jnp.einsum("nhwc,co->nhwo", out, wo) + bo


if __name__ == "__main__":
    N, H, W = 2, 16, 16
    features, out_features = 32, 32

    key = jax.random.PRNGKey(0)
    kx, kp = jax.random.split(key)
    x = jax.random.normal(kx, (N, H, W, features), jnp.float32)
    w1, b1, w2, b2, wo, bo = _init_params(kp, features, out_features)

    out = feature_fusion_block(x, w1, b1, w2, b2, wo, bo)
    out = jax.block_until_ready(out)

    ref = _reference(x, w1, b1, w2, b2, wo, bo)
    assert out.shape == (N, H, W, out_features)
    # bf16 MXU operands vs f32 reference -> loosened tolerance.
    assert jnp.allclose(out, ref, atol=5e-2, rtol=5e-2), (
        "mismatch vs reference, max abs err = %e"
        % float(jnp.max(jnp.abs(out - ref))))

    print("KERNEL_OK")
</pallas_src>

<mosaic_0001>
module attributes {stable_mosaic.version = 11 : i64} {
  func.func @_ffb_kernel(%arg0: i32, %arg1: memref<1x256x128xf32, #tpu.memory_space<vmem>>, %arg2: memref<3x384x128xbf16, #tpu.memory_space<vmem>>, %arg3: memref<1x128xf32, #tpu.memory_space<vmem>>, %arg4: memref<3x384x128xbf16, #tpu.memory_space<vmem>>, %arg5: memref<1x128xf32, #tpu.memory_space<vmem>>, %arg6: memref<128x128xbf16, #tpu.memory_space<vmem>>, %arg7: memref<1x128xf32, #tpu.memory_space<vmem>>, %arg8: memref<1x256x128xf32, #tpu.memory_space<vmem>>) attributes {dimension_semantics = [#tpu.dimension_semantics<parallel>], iteration_bounds = array<i64: 2>, scalar_prefetch = 0 : i64, scratch_operands = 0 : i64, tpu.core_type = #tpu.core_type<tc>, window_params = [{transform_indices = @transform_0, window_bounds = array<i64: 1, 256, 128>}, {pipeline_mode = #tpu.pipeline_mode<synchronous>, transform_indices = @transform_1, window_bounds = array<i64: 3, 384, 128>}, {pipeline_mode = #tpu.pipeline_mode<synchronous>, transform_indices = @transform_2, window_bounds = array<i64: 1, 128>}, {pipeline_mode = #tpu.pipeline_mode<synchronous>, transform_indices = @transform_3, window_bounds = array<i64: 3, 384, 128>}, {pipeline_mode = #tpu.pipeline_mode<synchronous>, transform_indices = @transform_4, window_bounds = array<i64: 1, 128>}, {pipeline_mode = #tpu.pipeline_mode<synchronous>, transform_indices = @transform_5, window_bounds = array<i64: 128, 128>}, {pipeline_mode = #tpu.pipeline_mode<synchronous>, transform_indices = @transform_6, window_bounds = array<i64: 1, 128>}, {transform_indices = @transform_7, window_bounds = array<i64: 1, 256, 128>}]} {
    %c0 = arith.constant 0 : index
    %c0_0 = arith.constant 0 : index
    %c0_1 = arith.constant 0 : index
    %0 = vector.load %arg1[%c0, %c0_0, %c0_1] : memref<1x256x128xf32, #tpu.memory_space<vmem>>, vector<1x256x128xf32>
    %1 = vector.shape_cast %0 : vector<1x256x128xf32> to vector<256x128xf32>
    %2 = tpu.iota {dimensions = array<i32: 0>} : vector<256x1xi32>
    %c16_i32 = arith.constant 16 : i32
    %c0_i32 = arith.constant 0 : i32
    %3 = arith.cmpi eq, %c16_i32, %c0_i32 : i32
    %c1_i32 = arith.constant 1 : i32
    %4 = arith.select %3, %c1_i32, %c16_i32 : i32
    %5 = vector.broadcast %4 : i32 to vector<256x1xi32>
    %6 = arith.remsi %2, %5 : vector<256x1xi32>
    %c0_i32_2 = arith.constant 0 : i32
    %7 = vector.broadcast %c0_i32_2 : i32 to vector<256x1xi32>
    %8 = arith.cmpi ne, %6, %7 : vector<256x1xi32>
    %c0_i32_3 = arith.constant 0 : i32
    %9 = vector.broadcast %c0_i32_3 : i32 to vector<256x1xi32>
    %10 = arith.cmpi slt, %6, %9 : vector<256x1xi32>
    %c0_i32_4 = arith.constant 0 : i32
    %11 = arith.cmpi slt, %4, %c0_i32_4 : i32
    %12 = vector.broadcast %11 : i1 to vector<256x1xi1>
    %13 = vector.broadcast %12 : vector<256x1xi1> to vector<256x1xi1>
    %14 = arith.xori %10, %13 : vector<256x1xi1>
    %15 = arith.andi %14, %8 : vector<256x1xi1>
    %16 = vector.broadcast %4 : i32 to vector<256x1xi32>
    %17 = arith.addi %6, %16 : vector<256x1xi32>
    %18 = arith.select %15, %17, %6 : vector<256x1xi1>, vector<256x1xi32>
    %c0_i32_5 = arith.constant 0 : i32
    %19 = vector.broadcast %c0_i32_5 : i32 to vector<256x1xi32>
    %20 = arith.cmpi sgt, %18, %19 : vector<256x1xi32>
    %c15_i32 = arith.constant 15 : i32
    %21 = vector.broadcast %c15_i32 : i32 to vector<256x1xi32>
    %22 = arith.cmpi slt, %18, %21 : vector<256x1xi32>
    %cst = arith.constant 0.000000e+00 : f32
    %23 = vector.broadcast %cst : f32 to vector<256x128xf32>
    %24 = arith.maximumf %1, %23 : vector<256x128xf32>
    %cst_6 = arith.constant 0.000000e+00 : f32
    %25 = vector.broadcast %cst_6 : f32 to vector<1x128xf32>
    %26 = vector.extract_strided_slice %24 {offsets = [0, 0], sizes = [255, 128], strides = [1, 1]} : vector<256x128xf32> to vector<255x128xf32>
    %27 = tpu.concatenate %25, %26 in 0 : vector<1x128xf32>, vector<255x128xf32> -> vector<256x128xf32>
    %cst_7 = arith.constant 0.000000e+00 : f32
    %28 = vector.shape_cast %20 : vector<256x1xi1> to vector<256x1xi1>
    %29 = vector.broadcast %28 : vector<256x1xi1> to vector<256x128xi1>
    %30 = vector.broadcast %cst_7 : f32 to vector<256x128xf32>
    %31 = arith.select %29, %27, %30 : vector<256x128xi1>, vector<256x128xf32>
    %32 = vector.extract_strided_slice %24 {offsets = [1, 0], sizes = [255, 128], strides = [1, 1]} : vector<256x128xf32> to vector<255x128xf32>
    %33 = tpu.concatenate %32, %25 in 0 : vector<255x128xf32>, vector<1x128xf32> -> vector<256x128xf32>
    %cst_8 = arith.constant 0.000000e+00 : f32
    %34 = vector.shape_cast %22 : vector<256x1xi1> to vector<256x1xi1>
    %35 = vector.broadcast %34 : vector<256x1xi1> to vector<256x128xi1>
    %36 = vector.broadcast %cst_8 : f32 to vector<256x128xf32>
    %37 = arith.select %35, %33, %36 : vector<256x128xi1>, vector<256x128xf32>
    %38 = arith.truncf %31 : vector<256x128xf32> to vector<256x128xbf16>
    %39 = arith.truncf %24 : vector<256x128xf32> to vector<256x128xbf16>
    %40 = arith.truncf %37 : vector<256x128xf32> to vector<256x128xbf16>
    %41 = tpu.concatenate %38, %39, %40 in 1 : vector<256x128xbf16>, vector<256x128xbf16>, vector<256x128xbf16> -> vector<256x384xbf16>
    %cst_9 = arith.constant 0.000000e+00 : bf16
    %42 = vector.broadcast %cst_9 : bf16 to vector<16x384xbf16>
    %43 = vector.extract_strided_slice %41 {offsets = [0, 0], sizes = [240, 384], strides = [1, 1]} : vector<256x384xbf16> to vector<240x384xbf16>
    %44 = tpu.concatenate %42, %43 in 0 : vector<16x384xbf16>, vector<240x384xbf16> -> vector<256x384xbf16>
    %45 = vector.extract_strided_slice %41 {offsets = [16, 0], sizes = [240, 384], strides = [1, 1]} : vector<256x384xbf16> to vector<240x384xbf16>
    %46 = tpu.concatenate %45, %42 in 0 : vector<240x384xbf16>, vector<16x384xbf16> -> vector<256x384xbf16>
    %c0_10 = arith.constant 0 : index
    %c0_11 = arith.constant 0 : index
    %c0_12 = arith.constant 0 : index
    %47 = vector.load %arg2[%c0_10, %c0_11, %c0_12] : memref<3x384x128xbf16, #tpu.memory_space<vmem>>, vector<1x384x128xbf16>
    %48 = vector.shape_cast %47 : vector<1x384x128xbf16> to vector<384x128xbf16>
    %cst_13 = arith.constant dense<0.000000e+00> : vector<256x128xf32>
    %49 = tpu.matmul %44, %48, %cst_13 {dimension_numbers = #tpu.dot_dimension_numbers<[1], [0], [0], [1], [0, 0, 1, 1], [], []>} : vector<256x384xbf16>, vector<384x128xbf16>, vector<256x128xf32> -> vector<256x128xf32>
    %c1 = arith.constant 1 : index
    %c0_14 = arith.constant 0 : index
    %c0_15 = arith.constant 0 : index
    %50 = vector.load %arg2[%c1, %c0_14, %c0_15] : memref<3x384x128xbf16, #tpu.memory_space<vmem>>, vector<1x384x128xbf16>
    %51 = vector.shape_cast %50 : vector<1x384x128xbf16> to vector<384x128xbf16>
    %cst_16 = arith.constant dense<0.000000e+00> : vector<256x128xf32>
    %52 = tpu.matmul %41, %51, %cst_16 {dimension_numbers = #tpu.dot_dimension_numbers<[1], [0], [0], [1], [0, 0, 1, 1], [], []>} : vector<256x384xbf16>, vector<384x128xbf16>, vector<256x128xf32> -> vector<256x128xf32>
    %53 = arith.addf %49, %52 : vector<256x128xf32>
    %c2 = arith.constant 2 : index
    %c0_17 = arith.constant 0 : index
    %c0_18 = arith.constant 0 : index
    %54 = vector.load %arg2[%c2, %c0_17, %c0_18] : memref<3x384x128xbf16, #tpu.memory_space<vmem>>, vector<1x384x128xbf16>
    %55 = vector.shape_cast %54 : vector<1x384x128xbf16> to vector<384x128xbf16>
    %cst_19 = arith.constant dense<0.000000e+00> : vector<256x128xf32>
    %56 = tpu.matmul %46, %55, %cst_19 {dimension_numbers = #tpu.dot_dimension_numbers<[1], [0], [0], [1], [0, 0, 1, 1], [], []>} : vector<256x384xbf16>, vector<384x128xbf16>, vector<256x128xf32> -> vector<256x128xf32>
    %57 = arith.addf %53, %56 : vector<256x128xf32>
    %c0_20 = arith.constant 0 : index
    %c0_21 = arith.constant 0 : index
    %58 = vector.load %arg3[%c0_20, %c0_21] : memref<1x128xf32, #tpu.memory_space<vmem>>, vector<1x128xf32>
    %59 = vector.broadcast %58 : vector<1x128xf32> to vector<256x128xf32>
    %60 = arith.addf %57, %59 : vector<256x128xf32>
    %cst_22 = arith.constant 0.000000e+00 : f32
    %61 = vector.broadcast %cst_22 : f32 to vector<256x128xf32>
    %62 = arith.maximumf %60, %61 : vector<256x128xf32>
    %cst_23 = arith.constant 0.000000e+00 : f32
    %63 = vector.broadcast %cst_23 : f32 to vector<1x128xf32>
    %64 = vector.extract_strided_slice %62 {offsets = [0, 0], sizes = [255, 128], strides = [1, 1]} : vector<256x128xf32> to vector<255x128xf32>
    %65 = tpu.concatenate %63, %64 in 0 : vector<1x128xf32>, vector<255x128xf32> -> vector<256x128xf32>
    %cst_24 = arith.constant 0.000000e+00 : f32
    %66 = vector.shape_cast %20 : vector<256x1xi1> to vector<256x1xi1>
    %67 = vector.broadcast %66 : vector<256x1xi1> to vector<256x128xi1>
    %68 = vector.broadcast %cst_24 : f32 to vector<256x128xf32>
    %69 = arith.select %67, %65, %68 : vector<256x128xi1>, vector<256x128xf32>
    %70 = vector.extract_strided_slice %62 {offsets = [1, 0], sizes = [255, 128], strides = [1, 1]} : vector<256x128xf32> to vector<255x128xf32>
    %71 = tpu.concatenate %70, %63 in 0 : vector<255x128xf32>, vector<1x128xf32> -> vector<256x128xf32>
    %cst_25 = arith.constant 0.000000e+00 : f32
    %72 = vector.shape_cast %22 : vector<256x1xi1> to vector<256x1xi1>
    %73 = vector.broadcast %72 : vector<256x1xi1> to vector<256x128xi1>
    %74 = vector.broadcast %cst_25 : f32 to vector<256x128xf32>
    %75 = arith.select %73, %71, %74 : vector<256x128xi1>, vector<256x128xf32>
    %76 = arith.truncf %69 : vector<256x128xf32> to vector<256x128xbf16>
    %77 = arith.truncf %62 : vector<256x128xf32> to vector<256x128xbf16>
    %78 = arith.truncf %75 : vector<256x128xf32> to vector<256x128xbf16>
    %79 = tpu.concatenate %76, %77, %78 in 1 : vector<256x128xbf16>, vector<256x128xbf16>, vector<256x128xbf16> -> vector<256x384xbf16>
    %cst_26 = arith.constant 0.000000e+00 : bf16
    %80 = vector.broadcast %cst_26 : bf16 to vector<16x384xbf16>
    %81 = vector.extract_strided_slice %79 {offsets = [0, 0], sizes = [240, 384], strides = [1, 1]} : vector<256x384xbf16> to vector<240x384xbf16>
    %82 = tpu.concatenate %80, %81 in 0 : vector<16x384xbf16>, vector<240x384xbf16> -> vector<256x384xbf16>
    %83 = vector.extract_strided_slice %79 {offsets = [16, 0], sizes = [240, 384], strides = [1, 1]} : vector<256x384xbf16> to vector<240x384xbf16>
    %84 = tpu.concatenate %83, %80 in 0 : vector<240x384xbf16>, vector<16x384xbf16> -> vector<256x384xbf16>
    %c0_27 = arith.constant 0 : index
    %c0_28 = arith.constant 0 : index
    %c0_29 = arith.constant 0 : index
    %85 = vector.load %arg4[%c0_27, %c0_28, %c0_29] : memref<3x384x128xbf16, #tpu.memory_space<vmem>>, vector<1x384x128xbf16>
    %86 = vector.shape_cast %85 : vector<1x384x128xbf16> to vector<384x128xbf16>
    %cst_30 = arith.constant dense<0.000000e+00> : vector<256x128xf32>
    %87 = tpu.matmul %82, %86, %cst_30 {dimension_numbers = #tpu.dot_dimension_numbers<[1], [0], [0], [1], [0, 0, 1, 1], [], []>} : vector<256x384xbf16>, vector<384x128xbf16>, vector<256x128xf32> -> vector<256x128xf32>
    %c1_31 = arith.constant 1 : index
    %c0_32 = arith.constant 0 : index
    %c0_33 = arith.constant 0 : index
    %88 = vector.load %arg4[%c1_31, %c0_32, %c0_33] : memref<3x384x128xbf16, #tpu.memory_space<vmem>>, vector<1x384x128xbf16>
    %89 = vector.shape_cast %88 : vector<1x384x128xbf16> to vector<384x128xbf16>
    %cst_34 = arith.constant dense<0.000000e+00> : vector<256x128xf32>
    %90 = tpu.matmul %79, %89, %cst_34 {dimension_numbers = #tpu.dot_dimension_numbers<[1], [0], [0], [1], [0, 0, 1, 1], [], []>} : vector<256x384xbf16>, vector<384x128xbf16>, vector<256x128xf32> -> vector<256x128xf32>
    %91 = arith.addf %87, %90 : vector<256x128xf32>
    %c2_35 = arith.constant 2 : index
    %c0_36 = arith.constant 0 : index
    %c0_37 = arith.constant 0 : index
    %92 = vector.load %arg4[%c2_35, %c0_36, %c0_37] : memref<3x384x128xbf16, #tpu.memory_space<vmem>>, vector<1x384x128xbf16>
    %93 = vector.shape_cast %92 : vector<1x384x128xbf16> to vector<384x128xbf16>
    %cst_38 = arith.constant dense<0.000000e+00> : vector<256x128xf32>
    %94 = tpu.matmul %84, %93, %cst_38 {dimension_numbers = #tpu.dot_dimension_numbers<[1], [0], [0], [1], [0, 0, 1, 1], [], []>} : vector<256x384xbf16>, vector<384x128xbf16>, vector<256x128xf32> -> vector<256x128xf32>
    %95 = arith.addf %91, %94 : vector<256x128xf32>
    %c0_39 = arith.constant 0 : index
    %c0_40 = arith.constant 0 : index
    %96 = vector.load %arg5[%c0_39, %c0_40] : memref<1x128xf32, #tpu.memory_space<vmem>>, vector<1x128xf32>
    %97 = vector.broadcast %96 : vector<1x128xf32> to vector<256x128xf32>
    %98 = arith.addf %95, %97 : vector<256x128xf32>
    %99 = arith.addf %98, %1 : vector<256x128xf32>
    %100 = arith.truncf %99 : vector<256x128xf32> to vector<256x128xbf16>
    %c0_41 = arith.constant 0 : index
    %c0_42 = arith.constant 0 : index
    %101 = vector.load %arg6[%c0_41, %c0_42] : memref<128x128xbf16, #tpu.memory_space<vmem>>, vector<128x128xbf16>
    %cst_43 = arith.constant dense<0.000000e+00> : vector<256x128xf32>
    %102 = tpu.matmul %100, %101, %cst_43 {dimension_numbers = #tpu.dot_dimension_numbers<[1], [0], [0], [1], [0, 0, 1, 1], [], []>} : vector<256x128xbf16>, vector<128x128xbf16>, vector<256x128xf32> -> vector<256x128xf32>
    %c0_44 = arith.constant 0 : index
    %c0_45 = arith.constant 0 : index
    %103 = vector.load %arg7[%c0_44, %c0_45] : memref<1x128xf32, #tpu.memory_space<vmem>>, vector<1x128xf32>
    %104 = vector.broadcast %103 : vector<1x128xf32> to vector<256x128xf32>
    %105 = arith.addf %102, %104 : vector<256x128xf32>
    %c0_46 = arith.constant 0 : index
    %c0_47 = arith.constant 0 : index
    %c0_48 = arith.constant 0 : index
    %106 = vector.load %arg8[%c0_46, %c0_47, %c0_48] : memref<1x256x128xf32, #tpu.memory_space<vmem>>, vector<1x256x128xf32>
    %107 = vector.shape_cast %106 : vector<1x256x128xf32> to vector<256x128xf32>
    %108 = vector.shape_cast %105 : vector<256x128xf32> to vector<1x256x128xf32>
    tpu.vector_store %arg8[%c0_46, %c0_47, %c0_48], %108 {strides = array<i32>} : memref<1x256x128xf32, #tpu.memory_space<vmem>>, vector<1x256x128xf32>,
    return
  }
  func.func @transform_0(%arg0: i32) -> (i32, i32, i32) {
    %c0_i32 = arith.constant 0 : i32
    %c0_i32_0 = arith.constant 0 : i32
    %c0_i32_1 = arith.constant 0 : i32
    return %arg0, %c0_i32, %c0_i32_0 : i32, i32, i32
  }
  func.func @transform_1(%arg0: i32) -> (i32, i32, i32) {
    %c0_i32 = arith.constant 0 : i32
    %c0_i32_0 = arith.constant 0 : i32
    %c0_i32_1 = arith.constant 0 : i32
    %c0_i32_2 = arith.constant 0 : i32
    return %c0_i32, %c0_i32_0, %c0_i32_1 : i32, i32, i32
  }
  func.func @transform_2(%arg0: i32) -> (i32, i32) {
    %c0_i32 = arith.constant 0 : i32
    %c0_i32_0 = arith.constant 0 : i32
    %c0_i32_1 = arith.constant 0 : i32
    return %c0_i32, %c0_i32_0 : i32, i32
  }
  func.func @transform_3(%arg0: i32) -> (i32, i32, i32) {
    %c0_i32 = arith.constant 0 : i32
    %c0_i32_0 = arith.constant 0 : i32
    %c0_i32_1 = arith.constant 0 : i32
    %c0_i32_2 = arith.constant 0 : i32
    return %c0_i32, %c0_i32_0, %c0_i32_1 : i32, i32, i32
  }
  func.func @transform_4(%arg0: i32) -> (i32, i32) {
    %c0_i32 = arith.constant 0 : i32
    %c0_i32_0 = arith.constant 0 : i32
    %c0_i32_1 = arith.constant 0 : i32
    return %c0_i32, %c0_i32_0 : i32, i32
  }
  func.func @transform_5(%arg0: i32) -> (i32, i32) {
    %c0_i32 = arith.constant 0 : i32
    %c0_i32_0 = arith.constant 0 : i32
    %c0_i32_1 = arith.constant 0 : i32
    return %c0_i32, %c0_i32_0 : i32, i32
  }
  func.func @transform_6(%arg0: i32) -> (i32, i32) {
    %c0_i32 = arith.constant 0 : i32
    %c0_i32_0 = arith.constant 0 : i32
    %c0_i32_1 = arith.constant 0 : i32
    return %c0_i32, %c0_i32_0 : i32, i32
  }
  func.func @transform_7(%arg0: i32) -> (i32, i32, i32) {
    %c0_i32 = arith.constant 0 : i32
    %c0_i32_0 = arith.constant 0 : i32
    %c0_i32_1 = arith.constant 0 : i32
    return %arg0, %c0_i32, %c0_i32_0 : i32, i32, i32
  }
}

</mosaic_0001>

<llo_original>
// kernel: tpu_custom_call.1
$region0: #{tpu_custom_call.1}
  #allocation0 [shape = 'u32[]', space=smem, size = 0x4, offset = 0x4, fixed_abs, tag = 'smem constant byte address 0x4 - core index']
  #allocation1 [shape = 'u32[144,128]{1,0:T(1,128)}', space=vmem, size = 0x12000, scoped, tag = 'internal scratch']
  %s0 = inlined_call_operand.hbm [shape: f32[2,256,128], index: 0, kind: input, shape index: {}]
  %s1 = inlined_call_operand.hbm [shape: bf16[3,384,128], index: 1, kind: input, shape index: {}]
  %s2 = inlined_call_operand.vmem [shape: f32[1,128], index: 2, kind: input, shape index: {}]
  %s3 = inlined_call_operand.hbm [shape: bf16[3,384,128], index: 3, kind: input, shape index: {}]
  %s4 = inlined_call_operand.vmem [shape: f32[1,128], index: 4, kind: input, shape index: {}]
  %s5 = inlined_call_operand.hbm [shape: bf16[128,128], index: 5, kind: input, shape index: {}]
  %s6 = inlined_call_operand.vmem [shape: f32[1,128], index: 6, kind: input, shape index: {}]
  %s7 = inlined_call_operand.hbm [shape: f32[2,256,128], index: 7, kind: output, shape index: {}]
  %s8 = sld [smem:[#allocation0]]
  $region77: #{tpu_custom_call.1} parent=0
    _
  %s10 = ssub.s32 1, %s8
  %s11 = scalar_select 0, %s10, %s8
  $region1: #{tpu_custom_call.1} parent=0
    #allocation2 [shape = 'u8[262144]{0}', space=vmem, size = 0x40000, scoped, tag = 'input window, operand 0']
    #allocation3 [shape = 's32[2]{0}', space=sflag, size = 0x8, scoped, tag = 'scoped memory for tpu_custom_call.1']
    #allocation4 [shape = 's32[2]{0}', space=sflag, size = 0x8, scoped, tag = 'scoped memory for tpu_custom_call.1']
    #allocation5 [shape = 'u8[294912]{0}', space=vmem, size = 0x48000, scoped, tag = 'input window, operand 1, single buffered']
    #allocation6 [shape = 's32[1]{0}', space=sflag, size = 0x4, scoped, tag = 'scoped memory for tpu_custom_call.1']
    #allocation7 [shape = 'u8[294912]{0}', space=vmem, size = 0x48000, scoped, tag = 'input window, operand 3, single buffered']
    #allocation8 [shape = 'u8[32768]{0}', space=vmem, size = 0x8000, scoped, tag = 'input window, operand 5, single buffered']
    #allocation9 [shape = 's32[1]{0}', space=sflag, size = 0x4, scoped, tag = 'scoped memory for tpu_custom_call.1']
    #allocation10 [shape = 'u8[262144]{0}', space=vmem, size = 0x40000, scoped, tag = 'output window, operand 0']
    %12 = vsyncpa [#allocation3], 0
    %s13 = scalar_lea.sflag [#allocation3], 1
    %14 = vsyncpa %s13, 0
    %15 = vsyncpa [#allocation6], 0
    %16 = vsyncpa [#allocation9], 0
    %17 = vsyncpa [#allocation4], 0
    %s18 = scalar_lea.sflag [#allocation4], 1
    %19 = vsyncpa %s18, 0
    loop: start=0, step=1, limit=4
    $region2: #{tpu_custom_call.1} parent=1 // loop_pre_header
      _
    $region3: #{tpu_custom_call.1} parent=1 // loop_header
      %s21 = sphi 0, %s25
      %p22 = scmp.ge.s32.totalorder %s21, 4
      %s31 = sphi 0, %s33
      %s34 = sphi 0, %s31
      %s35 = sphi 0, %s34
      %s51 = sphi 0, %s35
      %s55 = sphi 0, %s55
      %s57 = sphi 0, %s55
      %s58 = sphi 0, %s57
      %s72 = sphi 0, %s58
      %s76 = sphi 0, %s76
      %s78 = sphi 0, %s76
      %s79 = sphi 0, %s78
      %s93 = sphi 0, %s79
      %s97 = sphi 0, %s97
      %s99 = sphi 0, %s97
      %s100 = sphi 0, %s99
      %s114 = sphi 0, %s100
      %s118 = sphi 0, %s118
      %s120 = sphi 0, %s118
      %s121 = sphi 0, %s120
      %s135 = sphi 0, %s121
      %s139 = sphi 0, %s139
      %s141 = sphi 0, %s139
      %s142 = sphi 0, %s141
      %s156 = sphi 0, %s142
      %s160 = sphi 0, %s160
      %s162 = sphi 0, %s160
      %s163 = sphi 0, %s162
      %s177 = sphi 0, %s163
      %s183 = sphi 0, %s185
      %s186 = sphi 0, %s183
      %s187 = sphi 0, %s186
      %s203 = sphi 0, %s187
    $region4: #{tpu_custom_call.1} parent=1 // loop_header_branch
      %24 = sbr.rel (%p22) target = $region8
    $region5: #{tpu_custom_call.1} parent=1 // loop_body
      %s26 = ssub.s32 %s21, 1
      %s27 = ssub.s32 %s21, 2
      %s28 = sadd.s32 %s21, 1
      %s29 = ssub.s32 %s21, %s28
      %p30 = scmp.eq.s32.totalorder %s29, 0
      %s32 = sadd.s32 %s31, 1
      %s33 = scalar_select %p30, %s31, %s32
      %p36 = pneg %p30
      %p37 = scmp.eq.s32.totalorder %s21, 1
      %p38 = por %p36, %p37
      %p39 = scmp.ne.s32.totalorder %s31, %s34
      %p40 = scmp.eq.s32.totalorder %s21, 0
      %p41 = por %p39, %p40
      %p42 = scmp.ne.s32.totalorder %s31, %s34
      %p43 = scmp.eq.s32.totalorder %s26, 1
      %p44 = por %p42, %p43
      %p45 = scmp.ne.s32.totalorder %s34, %s35
      %p46 = scmp.eq.s32.totalorder %s26, 0
      %p47 = por %p45, %p46
      %p48 = scmp.ne.s32.totalorder %s34, %s35
      %p49 = scmp.eq.s32.totalorder %s27, 1
      %p50 = por %p48, %p49
      %p52 = scmp.ne.s32.totalorder %s35, %s51
      %p53 = scmp.eq.s32.totalorder %s27, 0
      %p54 = por %p52, %p53
      %s56 = sadd.s32 %s55, 1
      %p59 = scmp.eq.s32.totalorder %s21, 1
      %p60 = scmp.ne.s32.totalorder %s55, %s57
      %p61 = scmp.eq.s32.totalorder %s21, 0
      %p62 = por %p60, %p61
      %p63 = scmp.ne.s32.totalorder %s55, %s57
      %p64 = scmp.eq.s32.totalorder %s26, 1
      %p65 = por %p63, %p64
      %p66 = scmp.ne.s32.totalorder %s57, %s58
      %p67 = scmp.eq.s32.totalorder %s26, 0
      %p68 = por %p66, %p67
      %p69 = scmp.ne.s32.totalorder %s57, %s58
      %p70 = scmp.eq.s32.totalorder %s27, 1
      %p71 = por %p69, %p70
      %p73 = scmp.ne.s32.totalorder %s58, %s72
      %p74 = scmp.eq.s32.totalorder %s27, 0
      %p75 = por %p73, %p74
      %s77 = sadd.s32 %s76, 1
      %p80 = scmp.eq.s32.totalorder %s21, 1
      %p81 = scmp.ne.s32.totalorder %s76, %s78
      %p82 = scmp.eq.s32.totalorder %s21, 0
      %p83 = por %p81, %p82
      %p84 = scmp.ne.s32.totalorder %s76, %s78
      %p85 = scmp.eq.s32.totalorder %s26, 1
      %p86 = por %p84, %p85
      %p87 = scmp.ne.s32.totalorder %s78, %s79
      %p88 = scmp.eq.s32.totalorder %s26, 0
      %p89 = por %p87, %p88
      %p90 = scmp.ne.s32.totalorder %s78, %s79
      %p91 = scmp.eq.s32.totalorder %s27, 1
      %p92 = por %p90, %p91
      %p94 = scmp.ne.s32.totalorder %s79, %s93
      %p95 = scmp.eq.s32.totalorder %s27, 0
      %p96 = por %p94, %p95
      %s98 = sadd.s32 %s97, 1
      %p101 = scmp.eq.s32.totalorder %s21, 1
      %p102 = scmp.ne.s32.totalorder %s97, %s99
      %p103 = scmp.eq.s32.totalorder %s21, 0
      %p104 = por %p102, %p103
      %p105 = scmp.ne.s32.totalorder %s97, %s99
      %p106 = scmp.eq.s32.totalorder %s26, 1
      %p107 = por %p105, %p106
      %p108 = scmp.ne.s32.totalorder %s99, %s100
      %p109 = scmp.eq.s32.totalorder %s26, 0
      %p110 = por %p108, %p109
      %p111 = scmp.ne.s32.totalorder %s99, %s100
      %p112 = scmp.eq.s32.totalorder %s27, 1
      %p113 = por %p111, %p112
      %p115 = scmp.ne.s32.totalorder %s100, %s114
      %p116 = scmp.eq.s32.totalorder %s27, 0
      %p117 = por %p115, %p116
      %s119 = sadd.s32 %s118, 1
      %p122 = scmp.eq.s32.totalorder %s21, 1
      %p123 = scmp.ne.s32.totalorder %s118, %s120
      %p124 = scmp.eq.s32.totalorder %s21, 0
      %p125 = por %p123, %p124
      %p126 = scmp.ne.s32.totalorder %s118, %s120
      %p127 = scmp.eq.s32.totalorder %s26, 1
      %p128 = por %p126, %p127
      %p129 = scmp.ne.s32.totalorder %s120, %s121
      %p130 = scmp.eq.s32.totalorder %s26, 0
      %p131 = por %p129, %p130
      %p132 = scmp.ne.s32.totalorder %s120, %s121
      %p133 = scmp.eq.s32.totalorder %s27, 1
      %p134 = por %p132, %p133
      %p136 = scmp.ne.s32.totalorder %s121, %s135
      %p137 = scmp.eq.s32.totalorder %s27, 0
      %p138 = por %p136, %p137
      %s140 = sadd.s32 %s139, 1
      %p143 = scmp.eq.s32.totalorder %s21, 1
      %p144 = scmp.ne.s32.totalorder %s139, %s141
      %p145 = scmp.eq.s32.totalorder %s21, 0
      %p146 = por %p144, %p145
      %p147 = scmp.ne.s32.totalorder %s139, %s141
      %p148 = scmp.eq.s32.totalorder %s26, 1
      %p149 = por %p147, %p148
      %p150 = scmp.ne.s32.totalorder %s141, %s142
      %p151 = scmp.eq.s32.totalorder %s26, 0
      %p152 = por %p150, %p151
      %p153 = scmp.ne.s32.totalorder %s141, %s142
      %p154 = scmp.eq.s32.totalorder %s27, 1
      %p155 = por %p153, %p154
      %p157 = scmp.ne.s32.totalorder %s142, %s156
      %p158 = scmp.eq.s32.totalorder %s27, 0
      %p159 = por %p157, %p158
      %s161 = sadd.s32 %s160, 1
      %p164 = scmp.eq.s32.totalorder %s21, 1
      %p165 = scmp.ne.s32.totalorder %s160, %s162
      %p166 = scmp.eq.s32.totalorder %s21, 0
      %p167 = por %p165, %p166
      %p168 = scmp.ne.s32.totalorder %s160, %s162
      %p169 = scmp.eq.s32.totalorder %s26, 1
      %p170 = por %p168, %p169
      %p171 = scmp.ne.s32.totalorder %s162, %s163
      %p172 = scmp.eq.s32.totalorder %s26, 0
      %p173 = por %p171, %p172
      %p174 = scmp.ne.s32.totalorder %s162, %s163
      %p175 = scmp.eq.s32.totalorder %s27, 1
      %p176 = por %p174, %p175
      %p178 = scmp.ne.s32.totalorder %s163, %s177
      %p179 = scmp.eq.s32.totalorder %s27, 0
      %p180 = por %p178, %p179
      %s181 = ssub.s32 %s21, %s28
      %p182 = scmp.eq.s32.totalorder %s181, 0
      %s184 = sadd.s32 %s183, 1
      %s185 = scalar_select %p182, %s183, %s184
      %p188 = pneg %p182
      %p189 = scmp.eq.s32.totalorder %s21, 1
      %p190 = por %p188, %p189
      %p191 = scmp.ne.s32.totalorder %s183, %s186
      %p192 = scmp.eq.s32.totalorder %s21, 0
      %p193 = por %p191, %p192
      %p194 = scmp.ne.s32.totalorder %s183, %s186
      %p195 = scmp.eq.s32.totalorder %s26, 1
      %p196 = por %p194, %p195
      %p197 = scmp.ne.s32.totalorder %s186, %s187
      %p198 = scmp.eq.s32.totalorder %s26, 0
      %p199 = por %p197, %p198
      %p200 = scmp.ne.s32.totalorder %s186, %s187
      %p201 = scmp.eq.s32.totalorder %s27, 1
      %p202 = por %p200, %p201
      %p204 = scmp.ne.s32.totalorder %s187, %s203
      %p205 = scmp.eq.s32.totalorder %s27, 0
      %p206 = por %p204, %p205
      %p207 = scmp.le.s32.totalorder 1, %s21
      %p208 = scmp.lt.s32.totalorder %s21, 3
      %p209 = pnand %p207, %p208
      %p210 = pneg %p209
      // Predicated region
      $region9: #{tpu_custom_call.1} parent=5 // pred_check
        _
      $region10: #{tpu_custom_call.1} parent=5 // pred_check_branch
        %212 = sbr.rel (%p209) target = $region12
      $region11: #{tpu_custom_call.1} parent=5 // pred_region
        %s213 = ssub.s32 %s21, 1
        // Predicated region
        $region13: #{tpu_custom_call.1} parent=11 // pred_check
          %p214 = pneg %p68
        $region14: #{tpu_custom_call.1} parent=11 // pred_check_branch
          %216 = sbr.rel (%p214) target = $region16
        $region15: #{tpu_custom_call.1} parent=11 // pred_region
          %s218 = ssub.s32 9216, 9216
          %219 = vsyncadd [#allocation6], %s218
          %s220 = sshll.u32 [#allocation5], 4
          %s221 = int_to_ptr.vmem [resolvable:$true] %s220
          %226 = dma.hbm_to_vmem [thread:$0]  %s1, 9216, %s221, [#allocation6], 64, 64, 4
        $region16: #{tpu_custom_call.1} parent=11 // pred_fallthru
          _
        // Predicated region
        $region17: #{tpu_custom_call.1} parent=11 // pred_check
          %p227 = pneg %p89
        $region18: #{tpu_custom_call.1} parent=11 // pred_check_branch
          %229 = sbr.rel (%p227) target = $region20
        $region19: #{tpu_custom_call.1} parent=11 // pred_region
          _
        $region20: #{tpu_custom_call.1} parent=11 // pred_fallthru
          _
        // Predicated region
        $region21: #{tpu_custom_call.1} parent=11 // pred_check
          %p230 = pneg %p110
        $region22: #{tpu_custom_call.1} parent=11 // pred_check_branch
          %232 = sbr.rel (%p230) target = $region24
        $region23: #{tpu_custom_call.1} parent=11 // pred_region
          %s234 = ssub.s32 9216, 9216
          %235 = vsyncadd [#allocation6], %s234
          %s236 = sshll.u32 [#allocation7], 4
          %s237 = int_to_ptr.vmem [resolvable:$true] %s236
          %242 = dma.hbm_to_vmem [thread:$0]  %s3, 9216, %s237, [#allocation6], 64, 64, 4
        $region24: #{tpu_custom_call.1} parent=11 // pred_fallthru
          _
        // Predicated region
        $region25: #{tpu_custom_call.1} parent=11 // pred_check
          %p243 = pneg %p131
        $region26: #{tpu_custom_call.1} parent=11 // pred_check_branch
          %245 = sbr.rel (%p243) target = $region28
        $region27: #{tpu_custom_call.1} parent=11 // pred_region
          _
        $region28: #{tpu_custom_call.1} parent=11 // pred_fallthru
          _
        // Predicated region
        $region29: #{tpu_custom_call.1} parent=11 // pred_check
          %p246 = pneg %p152
        $region30: #{tpu_custom_call.1} parent=11 // pred_check_branch
          %248 = sbr.rel (%p246) target = $region32
        $region31: #{tpu_custom_call.1} parent=11 // pred_region
          %s250 = ssub.s32 1024, 1024
          %251 = vsyncadd [#allocation9], %s250
          %s252 = sshll.u32 [#allocation8], 4
          %s253 = int_to_ptr.vmem [resolvable:$true] %s252
          %258 = dma.hbm_to_vmem [thread:$0]  %s5, 1024, %s253, [#allocation9], 64, 64, 4
        $region32: #{tpu_custom_call.1} parent=11 // pred_fallthru
          _
        // Predicated region
        $region33: #{tpu_custom_call.1} parent=11 // pred_check
          %p259 = pneg %p173
        $region34: #{tpu_custom_call.1} parent=11 // pred_check_branch
          %261 = sbr.rel (%p259) target = $region36
        $region35: #{tpu_custom_call.1} parent=11 // pred_region
          _
        $region36: #{tpu_custom_call.1} parent=11 // pred_fallthru
          _
      $region12: #{tpu_custom_call.1} parent=5 // pred_fallthru
        _
      %p262 = scmp.lt.s32.totalorder %s21, 2
      // Predicated region
      $region37: #{tpu_custom_call.1} parent=5 // pred_check
        %p263 = pneg %p262
      $region38: #{tpu_custom_call.1} parent=5 // pred_check_branch
        %265 = sbr.rel (%p263) target = $region40
      $region39: #{tpu_custom_call.1} parent=5 // pred_region
        // Predicated region
        $region41: #{tpu_custom_call.1} parent=39 // pred_check
          %p266 = pneg %p41
        $region42: #{tpu_custom_call.1} parent=39 // pred_check_branch
          %268 = sbr.rel (%p266) target = $region44
        $region43: #{tpu_custom_call.1} parent=39 // pred_region
          %s269 = sand.u32 %s31, 1
          %s270 = scalar_lea.sflag [#allocation3], %s269
          %s271 = sand.u32 %s31, 1
          %s272 = smul.addr %s271, 256
          %s273 = scalar_lea.vmem [#allocation2], %s272
          %s275 = ssub.s32 4096, 4096
          %276 = vsyncadd %s270, %s275
          %s277 = smul.addr %s21, 32
          %s278 = smul.addr %s277, 128
          %s279 = scalar_lea.hbm %s0, %s278
          %s280 = sshll.u32 %s273, 4
          %s281 = int_to_ptr.vmem [resolvable:$true] %s280
          %286 = dma.hbm_to_vmem [thread:$0]  %s279, 4096, %s281, %s270, 128, 128, 8
        $region44: #{tpu_custom_call.1} parent=39 // pred_fallthru
          _
      $region40: #{tpu_custom_call.1} parent=5 // pred_fallthru
        _
      %p287 = scmp.le.s32.totalorder 1, %s21
      %p288 = scmp.lt.s32.totalorder %s21, 3
      %p289 = pnand %p287, %p288
      %p290 = pneg %p289
      // Predicated region
      $region45: #{tpu_custom_call.1} parent=5 // pred_check
        _
      $region46: #{tpu_custom_call.1} parent=5 // pred_check_branch
        %292 = sbr.rel (%p289) target = $region48
      $region47: #{tpu_custom_call.1} parent=5 // pred_region
        %s293 = ssub.s32 %s21, 1
        %s294 = sand.u32 %s34, 1
        %s295 = scalar_lea.sflag [#allocation3], %s294
        %s296 = sand.u32 %s34, 1
        %s297 = smul.addr %s296, 256
        %s298 = scalar_lea.vmem [#allocation2], %s297
        // Predicated region
        $region49: #{tpu_custom_call.1} parent=47 // pred_check
          %p299 = pneg %p47
        $region50: #{tpu_custom_call.1} parent=47 // pred_check_branch
          %301 = sbr.rel (%p299) target = $region52
        $region51: #{tpu_custom_call.1} parent=47 // pred_region
          %302 = dma.done %s295, 4096
        $region52: #{tpu_custom_call.1} parent=47 // pred_fallthru
          _
        // Predicated region
        $region53: #{tpu_custom_call.1} parent=47 // pred_check
          %p303 = pneg %p68
        $region54: #{tpu_custom_call.1} parent=47 // pred_check_branch
          %305 = sbr.rel (%p303) target = $region56
        $region55: #{tpu_custom_call.1} parent=47 // pred_region
          %306 = dma.done [#allocation6], 9216
        $region56: #{tpu_custom_call.1} parent=47 // pred_fallthru
          _
        // Predicated region
        $region57: #{tpu_custom_call.1} parent=47 // pred_check
          %p307 = pneg %p110
        $region58: #{tpu_custom_call.1} parent=47 // pred_check_branch
          %309 = sbr.rel (%p307) target = $region60
        $region59: #{tpu_custom_call.1} parent=47 // pred_region
          %310 = dma.done [#allocation6], 9216
        $region60: #{tpu_custom_call.1} parent=47 // pred_fallthru
          _
        // Predicated region
        $region61: #{tpu_custom_call.1} parent=47 // pred_check
          %p311 = pneg %p152
        $region62: #{tpu_custom_call.1} parent=47 // pred_check_branch
          %313 = sbr.rel (%p311) target = $region64
        $region63: #{tpu_custom_call.1} parent=47 // pred_region
          %314 = dma.done [#allocation9], 1024
        $region64: #{tpu_custom_call.1} parent=47 // pred_fallthru
          _
        %s315 = sand.u32 %s34, 1
        %s316 = scalar_lea.sflag [#allocation3], %s315
        %s317 = sand.u32 %s34, 1
        %s318 = smul.addr %s317, 256
        %s319 = scalar_lea.vmem [#allocation2], %s318
        %p320 = pneg %p47
        %p321 = pneg %p44
        %p322 = pneg %p68
        %p323 = pneg %p65
        %p324 = pneg %p89
        %p325 = pneg %p86
        %p326 = pneg %p110
        %p327 = pneg %p107
        %p328 = pneg %p131
        %p329 = pneg %p128
        %p330 = pneg %p152
        %p331 = pneg %p149
        %p332 = pneg %p173
        %p333 = pneg %p170
        %p334 = pneg %p199
        %p335 = pneg %p196
        %s336 = sand.u32 %s186, 1
        %s337 = scalar_lea.sflag [#allocation4], %s336
        %s338 = sand.u32 %s186, 1
        %s339 = smul.addr %s338, 256
        %s340 = scalar_lea.vmem [#allocation10], %s339
        %v342 = vld [vmem:[%s298] sm:$0xff]
        %v343 = vld [vmem:[%s298 + $0x8] sm:$0xff]
        %v344 = vld [vmem:[%s298 + $0x10] sm:$0xff]
        %v345 = vld [vmem:[%s298 + $0x18] sm:$0xff]
        %v346 = vld [vmem:[%s298 + $0x20] sm:$0xff]
        %v347 = vld [vmem:[%s298 + $0x28] sm:$0xff]
        %v348 = vld [vmem:[%s298 + $0x30] sm:$0xff]
        %v349 = vld [vmem:[%s298 + $0x38] sm:$0xff]
        %v350 = vld [vmem:[%s298 + $0x40] sm:$0xff]
        %v351 = vld [vmem:[%s298 + $0x48] sm:$0xff]
        %v352 = vld [vmem:[%s298 + $0x50] sm:$0xff]
        %v353 = vld [vmem:[%s298 + $0x58] sm:$0xff]
        %v354 = vld [vmem:[%s298 + $0x60] sm:$0xff]
        %v355 = vld [vmem:[%s298 + $0x68] sm:$0xff]
        %v356 = vld [vmem:[%s298 + $0x70] sm:$0xff]
        %v357 = vld [vmem:[%s298 + $0x78] sm:$0xff]
        %v358 = vld [vmem:[%s298 + $0x80] sm:$0xff]
        %v359 = vld [vmem:[%s298 + $0x88] sm:$0xff]
        %v360 = vld [vmem:[%s298 + $0x90] sm:$0xff]
        %v361 = vld [vmem:[%s298 + $0x98] sm:$0xff]
        %v362 = vld [vmem:[%s298 + $0xa0] sm:$0xff]
        %v363 = vld [vmem:[%s298 + $0xa8] sm:$0xff]
        %v364 = vld [vmem:[%s298 + $0xb0] sm:$0xff]
        %v365 = vld [vmem:[%s298 + $0xb8] sm:$0xff]
        %v366 = vld [vmem:[%s298 + $0xc0] sm:$0xff]
        %v367 = vld [vmem:[%s298 + $0xc8] sm:$0xff]
        %v368 = vld [vmem:[%s298 + $0xd0] sm:$0xff]
        %v369 = vld [vmem:[%s298 + $0xd8] sm:$0xff]
        %v370 = vld [vmem:[%s298 + $0xe0] sm:$0xff]
        %v371 = vld [vmem:[%s298 + $0xe8] sm:$0xff]
        %v372 = vld [vmem:[%s298 + $0xf0] sm:$0xff]
        %v373 = vld [vmem:[%s298 + $0xf8] sm:$0xff]
        %v374 = vlaneseq
        %v375 = vshrl.u32 %v374, 7
        %v376 = vadd.s32 %v375, 8
        %v377 = vadd.s32 %v375, 16
        %v378 = vadd.s32 %v375, 24
        %v379 = vadd.s32 %v375, 32
        %v380 = vadd.s32 %v375, 40
        %v381 = vadd.s32 %v375, 48
        %v382 = vadd.s32 %v375, 56
        %v383 = vadd.s32 %v375, 64
        %v384 = vadd.s32 %v375, 72
        %v385 = vadd.s32 %v375, 80
        %v386 = vadd.s32 %v375, 88
        %v387 = vadd.s32 %v375, 96
        %v388 = vadd.s32 %v375, 104
        %v389 = vadd.s32 %v375, 112
        %v390 = vadd.s32 %v375, 120
        %v391 = vadd.s32 %v375, 128
        %v392 = vadd.s32 %v375, 136
        %v393 = vadd.s32 %v375, 144
        %v394 = vadd.s32 %v375, 152
        %v395 = vadd.s32 %v375, 160
        %v396 = vadd.s32 %v375, 168
        %v397 = vadd.s32 %v375, 176
        %v398 = vadd.s32 %v375, 184
        %v399 = vadd.s32 %v375, 192
        %v400 = vadd.s32 %v375, 200
        %v401 = vadd.s32 %v375, 208
        %v402 = vadd.s32 %v375, 216
        %v403 = vadd.s32 %v375, 224
        %v404 = vadd.s32 %v375, 232
        %v405 = vadd.s32 %v375, 240
        %v406 = vadd.s32 %v375, 248
        %vm407 = vcmp.lt.s32.totalorder %v375, 0
        %v408 = vsub.s32 0, %v375
        %v409 = vsel %vm407, %v408, %v375
        %v410 = vshrl.u32 %v409, 4
        %v411 = vand.u32 %v409, 15
        %v412 = vsub.s32 0, %v411
        %v413 = vsel %vm407, %v412, %v411
        %vm414 = vcmp.lt.s32.totalorder %v376, 0
        %v415 = vsub.s32 0, %v376
        %v416 = vsel %vm414, %v415, %v376
        %v417 = vshrl.u32 %v416, 4
        %v418 = vand.u32 %v416, 15
        %v419 = vsub.s32 0, %v418
        %v420 = vsel %vm414, %v419, %v418
        %vm421 = vcmp.lt.s32.totalorder %v377, 0
        %v422 = vsub.s32 0, %v377
        %v423 = vsel %vm421, %v422, %v377
        %v424 = vshrl.u32 %v423, 4
        %v425 = vand.u32 %v423, 15
        %v426 = vsub.s32 0, %v425
        %v427 = vsel %vm421, %v426, %v425
        %vm428 = vcmp.lt.s32.totalorder %v378, 0
        %v429 = vsub.s32 0, %v378
        %v430 = vsel %vm428, %v429, %v378
        %v431 = vshrl.u32 %v430, 4
        %v432 = vand.u32 %v430, 15
        %v433 = vsub.s32 0, %v432
        %v434 = vsel %vm428, %v433, %v432
        %vm435 = vcmp.lt.s32.totalorder %v379, 0
        %v436 = vsub.s32 0, %v379
        %v437 = vsel %vm435, %v436, %v379
        %v438 = vshrl.u32 %v437, 4
        %v439 = vand.u32 %v437, 15
        %v440 = vsub.s32 0, %v439
        %v441 = vsel %vm435, %v440, %v439
        %vm442 = vcmp.lt.s32.totalorder %v380, 0
        %v443 = vsub.s32 0, %v380
        %v444 = vsel %vm442, %v443, %v380
        %v445 = vshrl.u32 %v444, 4
        %v446 = vand.u32 %v444, 15
        %v447 = vsub.s32 0, %v446
        %v448 = vsel %vm442, %v447, %v446
        %vm449 = vcmp.lt.s32.totalorder %v381, 0
        %v450 = vsub.s32 0, %v381
        %v451 = vsel %vm449, %v450, %v381
        %v452 = vshrl.u32 %v451, 4
        %v453 = vand.u32 %v451, 15
        %v454 = vsub.s32 0, %v453
        %v455 = vsel %vm449, %v454, %v453
        %vm456 = vcmp.lt.s32.totalorder %v382, 0
        %v457 = vsub.s32 0, %v382
        %v458 = vsel %vm456, %v457, %v382
        %v459 = vshrl.u32 %v458, 4
        %v460 = vand.u32 %v458, 15
        %v461 = vsub.s32 0, %v460
        %v462 = vsel %vm456, %v461, %v460
        %vm463 = vcmp.lt.s32.totalorder %v383, 0
        %v464 = vsub.s32 0, %v383
        %v465 = vsel %vm463, %v464, %v383
        %v466 = vshrl.u32 %v465, 4
        %v467 = vand.u32 %v465, 15
        %v468 = vsub.s32 0, %v467
        %v469 = vsel %vm463, %v468, %v467
        %vm470 = vcmp.lt.s32.totalorder %v384, 0
        %v471 = vsub.s32 0, %v384
        %v472 = vsel %vm470, %v471, %v384
        %v473 = vshrl.u32 %v472, 4
        %v474 = vand.u32 %v472, 15
        %v475 = vsub.s32 0, %v474
        %v476 = vsel %vm470, %v475, %v474
        %vm477 = vcmp.lt.s32.totalorder %v385, 0
        %v478 = vsub.s32 0, %v385
        %v479 = vsel %vm477, %v478, %v385
        %v480 = vshrl.u32 %v479, 4
        %v481 = vand.u32 %v479, 15
        %v482 = vsub.s32 0, %v481
        %v483 = vsel %vm477, %v482, %v481
        %vm484 = vcmp.lt.s32.totalorder %v386, 0
        %v485 = vsub.s32 0, %v386
        %v486 = vsel %vm484, %v485, %v386
        %v487 = vshrl.u32 %v486, 4
        %v488 = vand.u32 %v486, 15
        %v489 = vsub.s32 0, %v488
        %v490 = vsel %vm484, %v489, %v488
        %vm491 = vcmp.lt.s32.totalorder %v387, 0
        %v492 = vsub.s32 0, %v387
        %v493 = vsel %vm491, %v492, %v387
        %v494 = vshrl.u32 %v493, 4
        %v495 = vand.u32 %v493, 15
        %v496 = vsub.s32 0, %v495
        %v497 = vsel %vm491, %v496, %v495
        %vm498 = vcmp.lt.s32.totalorder %v388, 0
        %v499 = vsub.s32 0, %v388
        %v500 = vsel %vm498, %v499, %v388
        %v501 = vshrl.u32 %v500, 4
        %v502 = vand.u32 %v500, 15
        %v503 = vsub.s32 0, %v502
        %v504 = vsel %vm498, %v503, %v502
        %vm505 = vcmp.lt.s32.totalorder %v389, 0
        %v506 = vsub.s32 0, %v389
        %v507 = vsel %vm505, %v506, %v389
        %v508 = vshrl.u32 %v507, 4
        %v509 = vand.u32 %v507, 15
        %v510 = vsub.s32 0, %v509
        %v511 = vsel %vm505, %v510, %v509
        %vm512 = vcmp.lt.s32.totalorder %v390, 0
        %v513 = vsub.s32 0, %v390
        %v514 = vsel %vm512, %v513, %v390
        %v515 = vshrl.u32 %v514, 4
        %v516 = vand.u32 %v514, 15
        %v517 = vsub.s32 0, %v516
        %v518 = vsel %vm512, %v517, %v516
        %vm519 = vcmp.lt.s32.totalorder %v391, 0
        %v520 = vsub.s32 0, %v391
        %v521 = vsel %vm519, %v520, %v391
        %v522 = vshrl.u32 %v521, 4
        %v523 = vand.u32 %v521, 15
        %v524 = vsub.s32 0, %v523
        %v525 = vsel %vm519, %v524, %v523
        %vm526 = vcmp.lt.s32.totalorder %v392, 0
        %v527 = vsub.s32 0, %v392
        %v528 = vsel %vm526, %v527, %v392
        %v529 = vshrl.u32 %v528, 4
        %v530 = vand.u32 %v528, 15
        %v531 = vsub.s32 0, %v530
        %v532 = vsel %vm526, %v531, %v530
        %vm533 = vcmp.lt.s32.totalorder %v393, 0
        %v534 = vsub.s32 0, %v393
        %v535 = vsel %vm533, %v534, %v393
        %v536 = vshrl.u32 %v535, 4
        %v537 = vand.u32 %v535, 15
        %v538 = vsub.s32 0, %v537
        %v539 = vsel %vm533, %v538, %v537
        %vm540 = vcmp.lt.s32.totalorder %v394, 0
        %v541 = vsub.s32 0, %v394
        %v542 = vsel %vm540, %v541, %v394
        %v543 = vshrl.u32 %v542, 4
        %v544 = vand.u32 %v542, 15
        %v545 = vsub.s32 0, %v544
        %v546 = vsel %vm540, %v545, %v544
        %vm547 = vcmp.lt.s32.totalorder %v395, 0
        %v548 = vsub.s32 0, %v395
        %v549 = vsel %vm547, %v548, %v395
        %v550 = vshrl.u32 %v549, 4
        %v551 = vand.u32 %v549, 15
        %v552 = vsub.s32 0, %v551
        %v553 = vsel %vm547, %v552, %v551
        %vm554 = vcmp.lt.s32.totalorder %v396, 0
        %v555 = vsub.s32 0, %v396
        %v556 = vsel %vm554, %v555, %v396
        %v557 = vshrl.u32 %v556, 4
        %v558 = vand.u32 %v556, 15
        %v559 = vsub.s32 0, %v558
        %v560 = vsel %vm554, %v559, %v558
        %vm561 = vcmp.lt.s32.totalorder %v397, 0
        %v562 = vsub.s32 0, %v397
        %v563 = vsel %vm561, %v562, %v397
        %v564 = vshrl.u32 %v563, 4
        %v565 = vand.u32 %v563, 15
        %v566 = vsub.s32 0, %v565
        %v567 = vsel %vm561, %v566, %v565
        %vm568 = vcmp.lt.s32.totalorder %v398, 0
        %v569 = vsub.s32 0, %v398
        %v570 = vsel %vm568, %v569, %v398
        %v571 = vshrl.u32 %v570, 4
        %v572 = vand.u32 %v570, 15
        %v573 = vsub.s32 0, %v572
        %v574 = vsel %vm568, %v573, %v572
        %vm575 = vcmp.lt.s32.totalorder %v399, 0
        %v576 = vsub.s32 0, %v399
        %v577 = vsel %vm575, %v576, %v399
        %v578 = vshrl.u32 %v577, 4
        %v579 = vand.u32 %v577, 15
        %v580 = vsub.s32 0, %v579
        %v581 = vsel %vm575, %v580, %v579
        %vm582 = vcmp.lt.s32.totalorder %v400, 0
        %v583 = vsub.s32 0, %v400
        %v584 = vsel %vm582, %v583, %v400
        %v585 = vshrl.u32 %v584, 4
        %v586 = vand.u32 %v584, 15
        %v587 = vsub.s32 0, %v586
        %v588 = vsel %vm582, %v587, %v586
        %vm589 = vcmp.lt.s32.totalorder %v401, 0
        %v590 = vsub.s32 0, %v401
        %v591 = vsel %vm589, %v590, %v401
        %v592 = vshrl.u32 %v591, 4
        %v593 = vand.u32 %v591, 15
        %v594 = vsub.s32 0, %v593
        %v595 = vsel %vm589, %v594, %v593
        %vm596 = vcmp.lt.s32.totalorder %v402, 0
        %v597 = vsub.s32 0, %v402
        %v598 = vsel %vm596, %v597, %v402
        %v599 = vshrl.u32 %v598, 4
        %v600 = vand.u32 %v598, 15
        %v601 = vsub.s32 0, %v600
        %v602 = vsel %vm596, %v601, %v600
        %vm603 = vcmp.lt.s32.totalorder %v403, 0
        %v604 = vsub.s32 0, %v403
        %v605 = vsel %vm603, %v604, %v403
        %v606 = vshrl.u32 %v605, 4
        %v607 = vand.u32 %v605, 15
        %v608 = vsub.s32 0, %v607
        %v609 = vsel %vm603, %v608, %v607
        %vm610 = vcmp.lt.s32.totalorder %v404, 0
        %v611 = vsub.s32 0, %v404
        %v612 = vsel %vm610, %v611, %v404
        %v613 = vshrl.u32 %v612, 4
        %v614 = vand.u32 %v612, 15
        %v615 = vsub.s32 0, %v614
        %v616 = vsel %vm610, %v615, %v614
        %vm617 = vcmp.lt.s32.totalorder %v405, 0
        %v618 = vsub.s32 0, %v405
        %v619 = vsel %vm617, %v618, %v405
        %v620 = vshrl.u32 %v619, 4
        %v621 = vand.u32 %v619, 15
        %v622 = vsub.s32 0, %v621
        %v623 = vsel %vm617, %v622, %v621
        %vm624 = vcmp.lt.s32.totalorder %v406, 0
        %v625 = vsub.s32 0, %v406
        %v626 = vsel %vm624, %v625, %v406
        %v627 = vshrl.u32 %v626, 4
        %v628 = vand.u32 %v626, 15
        %v629 = vsub.s32 0, %v628
        %v630 = vsel %vm624, %v629, %v628
        %vm631 = vcmp.ne.s32.totalorder %v413, 0
        %vm632 = vcmp.ne.s32.totalorder %v420, 0
        %vm633 = vcmp.ne.s32.totalorder %v427, 0
        %vm634 = vcmp.ne.s32.totalorder %v434, 0
        %vm635 = vcmp.ne.s32.totalorder %v441, 0
        %vm636 = vcmp.ne.s32.totalorder %v448, 0
        %vm637 = vcmp.ne.s32.totalorder %v455, 0
        %vm638 = vcmp.ne.s32.totalorder %v462, 0
        %vm639 = vcmp.ne.s32.totalorder %v469, 0
        %vm640 = vcmp.ne.s32.totalorder %v476, 0
        %vm641 = vcmp.ne.s32.totalorder %v483, 0
        %vm642 = vcmp.ne.s32.totalorder %v490, 0
        %vm643 = vcmp.ne.s32.totalorder %v497, 0
        %vm644 = vcmp.ne.s32.totalorder %v504, 0
        %vm645 = vcmp.ne.s32.totalorder %v511, 0
        %vm646 = vcmp.ne.s32.totalorder %v518, 0
        %vm647 = vcmp.ne.s32.totalorder %v525, 0
        %vm648 = vcmp.ne.s32.totalorder %v532, 0
        %vm649 = vcmp.ne.s32.totalorder %v539, 0
        %vm650 = vcmp.ne.s32.totalorder %v546, 0
        %vm651 = vcmp.ne.s32.totalorder %v553, 0
        %vm652 = vcmp.ne.s32.totalorder %v560, 0
        %vm653 = vcmp.ne.s32.totalorder %v567, 0
        %vm654 = vcmp.ne.s32.totalorder %v574, 0
        %vm655 = vcmp.ne.s32.totalorder %v581, 0
        %vm656 = vcmp.ne.s32.totalorder %v588, 0
        %vm657 = vcmp.ne.s32.totalorder %v595, 0
        %vm658 = vcmp.ne.s32.totalorder %v602, 0
        %vm659 = vcmp.ne.s32.totalorder %v609, 0
        %vm660 = vcmp.ne.s32.totalorder %v616, 0
        %vm661 = vcmp.ne.s32.totalorder %v623, 0
        %vm662 = vcmp.ne.s32.totalorder %v630, 0
        %vm663 = vcmp.lt.s32.totalorder %v413, 0
        %vm664 = vcmp.lt.s32.totalorder %v420, 0
        %vm665 = vcmp.lt.s32.totalorder %v427, 0
        %vm666 = vcmp.lt.s32.totalorder %v434, 0
        %vm667 = vcmp.lt.s32.totalorder %v441, 0
        %vm668 = vcmp.lt.s32.totalorder %v448, 0
        %vm669 = vcmp.lt.s32.totalorder %v455, 0
        %vm670 = vcmp.lt.s32.totalorder %v462, 0
        %vm671 = vcmp.lt.s32.totalorder %v469, 0
        %vm672 = vcmp.lt.s32.totalorder %v476, 0
        %vm673 = vcmp.lt.s32.totalorder %v483, 0
        %vm674 = vcmp.lt.s32.totalorder %v490, 0
        %vm675 = vcmp.lt.s32.totalorder %v497, 0
        %vm676 = vcmp.lt.s32.totalorder %v504, 0
        %vm677 = vcmp.lt.s32.totalorder %v511, 0
        %vm678 = vcmp.lt.s32.totalorder %v518, 0
        %vm679 = vcmp.lt.s32.totalorder %v525, 0
        %vm680 = vcmp.lt.s32.totalorder %v532, 0
        %vm681 = vcmp.lt.s32.totalorder %v539, 0
        %vm682 = vcmp.lt.s32.totalorder %v546, 0
        %vm683 = vcmp.lt.s32.totalorder %v553, 0
        %vm684 = vcmp.lt.s32.totalorder %v560, 0
        %vm685 = vcmp.lt.s32.totalorder %v567, 0
        %vm686 = vcmp.lt.s32.totalorder %v574, 0
        %vm687 = vcmp.lt.s32.totalorder %v581, 0
        %vm688 = vcmp.lt.s32.totalorder %v588, 0
        %vm689 = vcmp.lt.s32.totalorder %v595, 0
        %vm690 = vcmp.lt.s32.totalorder %v602, 0
        %vm691 = vcmp.lt.s32.totalorder %v609, 0
        %vm692 = vcmp.lt.s32.totalorder %v616, 0
        %vm693 = vcmp.lt.s32.totalorder %v623, 0
        %vm694 = vcmp.lt.s32.totalorder %v630, 0
        %vm695 = vmand %vm663, %vm631
        %vm696 = vmand %vm664, %vm632
        %vm697 = vmand %vm665, %vm633
        %vm698 = vmand %vm666, %vm634
        %vm699 = vmand %vm667, %vm635
        %vm700 = vmand %vm668, %vm636
        %vm701 = vmand %vm669, %vm637
        %vm702 = vmand %vm670, %vm638
        %vm703 = vmand %vm671, %vm639
        %vm704 = vmand %vm672, %vm640
        %vm705 = vmand %vm673, %vm641
        %vm706 = vmand %vm674, %vm642
        %vm707 = vmand %vm675, %vm643
        %vm708 = vmand %vm676, %vm644
        %vm709 = vmand %vm677, %vm645
        %vm710 = vmand %vm678, %vm646
        %vm711 = vmand %vm679, %vm647
        %vm712 = vmand %vm680, %vm648
        %vm713 = vmand %vm681, %vm649
        %vm714 = vmand %vm682, %vm650
        %vm715 = vmand %vm683, %vm651
        %vm716 = vmand %vm684, %vm652
        %vm717 = vmand %vm685, %vm653
        %vm718 = vmand %vm686, %vm654
        %vm719 = vmand %vm687, %vm655
        %vm720 = vmand %vm688, %vm656
        %vm721 = vmand %vm689, %vm657
        %vm722 = vmand %vm690, %vm658
        %vm723 = vmand %vm691, %vm659
        %vm724 = vmand %vm692, %vm660
        %vm725 = vmand %vm693, %vm661
        %vm726 = vmand %vm694, %vm662
        %v727 = vadd.s32 %v413, 16
        %v728 = vadd.s32 %v420, 16
        %v729 = vadd.s32 %v427, 16
        %v730 = vadd.s32 %v434, 16
        %v731 = vadd.s32 %v441, 16
        %v732 = vadd.s32 %v448, 16
        %v733 = vadd.s32 %v455, 16
        %v734 = vadd.s32 %v462, 16
        %v735 = vadd.s32 %v469, 16
        %v736 = vadd.s32 %v476, 16
        %v737 = vadd.s32 %v483, 16
        %v738 = vadd.s32 %v490, 16
        %v739 = vadd.s32 %v497, 16
        %v740 = vadd.s32 %v504, 16
        %v741 = vadd.s32 %v511, 16
        %v742 = vadd.s32 %v518, 16
        %v743 = vadd.s32 %v525, 16
        %v744 = vadd.s32 %v532, 16
        %v745 = vadd.s32 %v539, 16
        %v746 = vadd.s32 %v546, 16
        %v747 = vadd.s32 %v553, 16
        %v748 = vadd.s32 %v560, 16
        %v749 = vadd.s32 %v567, 16
        %v750 = vadd.s32 %v574, 16
        %v751 = vadd.s32 %v581, 16
        %v752 = vadd.s32 %v588, 16
        %v753 = vadd.s32 %v595, 16
        %v754 = vadd.s32 %v602, 16
        %v755 = vadd.s32 %v609, 16
        %v756 = vadd.s32 %v616, 16
        %v757 = vadd.s32 %v623, 16
        %v758 = vadd.s32 %v630, 16
        %v759 = vsel %vm695, %v727, %v413
        %v760 = vsel %vm696, %v728, %v420
        %v761 = vsel %vm697, %v729, %v427
        %v762 = vsel %vm698, %v730, %v434
        %v763 = vsel %vm699, %v731, %v441
        %v764 = vsel %vm700, %v732, %v448
        %v765 = vsel %vm701, %v733, %v455
        %v766 = vsel %vm702, %v734, %v462
        %v767 = vsel %vm703, %v735, %v469
        %v768 = vsel %vm704, %v736, %v476
        %v769 = vsel %vm705, %v737, %v483
        %v770 = vsel %vm706, %v738, %v490
        %v771 = vsel %vm707, %v739, %v497
        %v772 = vsel %vm708, %v740, %v504
        %v773 = vsel %vm709, %v741, %v511
        %v774 = vsel %vm710, %v742, %v518
        %v775 = vsel %vm711, %v743, %v525
        %v776 = vsel %vm712, %v744, %v532
        %v777 = vsel %vm713, %v745, %v539
        %v778 = vsel %vm714, %v746, %v546
        %v779 = vsel %vm715, %v747, %v553
        %v780 = vsel %vm716, %v748, %v560
        %v781 = vsel %vm717, %v749, %v567
        %v782 = vsel %vm718, %v750, %v574
        %v783 = vsel %vm719, %v751, %v581
        %v784 = vsel %vm720, %v752, %v588
        %v785 = vsel %vm721, %v753, %v595
        %v786 = vsel %vm722, %v754, %v602
        %v787 = vsel %vm723, %v755, %v609
        %v788 = vsel %vm724, %v756, %v616
        %v789 = vsel %vm725, %v757, %v623
        %v790 = vsel %vm726, %v758, %v630
        %vm791 = vcmp.gt.s32.totalorder %v759, 0
        %vm792 = vcmp.gt.s32.totalorder %v760, 0
        %vm793 = vcmp.gt.s32.totalorder %v761, 0
        %vm794 = vcmp.gt.s32.totalorder %v762, 0
        %vm795 = vcmp.gt.s32.totalorder %v763, 0
        %vm796 = vcmp.gt.s32.totalorder %v764, 0
        %vm797 = vcmp.gt.s32.totalorder %v765, 0
        %vm798 = vcmp.gt.s32.totalorder %v766, 0
        %vm799 = vcmp.gt.s32.totalorder %v767, 0
        %vm800 = vcmp.gt.s32.totalorder %v768, 0
        %vm801 = vcmp.gt.s32.totalorder %v769, 0
        %vm802 = vcmp.gt.s32.totalorder %v770, 0
        %vm803 = vcmp.gt.s32.totalorder %v771, 0
        %vm804 = vcmp.gt.s32.totalorder %v772, 0
        %vm805 = vcmp.gt.s32.totalorder %v773, 0
        %vm806 = vcmp.gt.s32.totalorder %v774, 0
        %vm807 = vcmp.gt.s32.totalorder %v775, 0
        %vm808 = vcmp.gt.s32.totalorder %v776, 0
        %vm809 = vcmp.gt.s32.totalorder %v777, 0
        %vm810 = vcmp.gt.s32.totalorder %v778, 0
        %vm811 = vcmp.gt.s32.totalorder %v779, 0
        %vm812 = vcmp.gt.s32.totalorder %v780, 0
        %vm813 = vcmp.gt.s32.totalorder %v781, 0
        %vm814 = vcmp.gt.s32.totalorder %v782, 0
        %vm815 = vcmp.gt.s32.totalorder %v783, 0
        %vm816 = vcmp.gt.s32.totalorder %v784, 0
        %vm817 = vcmp.gt.s32.totalorder %v785, 0
        %vm818 = vcmp.gt.s32.totalorder %v786, 0
        %vm819 = vcmp.gt.s32.totalorder %v787, 0
        %vm820 = vcmp.gt.s32.totalorder %v788, 0
        %vm821 = vcmp.gt.s32.totalorder %v789, 0
        %vm822 = vcmp.gt.s32.totalorder %v790, 0
        %vm823 = vcmp.lt.s32.totalorder %v759, 15
        %vm824 = vcmp.lt.s32.totalorder %v760, 15
        %vm825 = vcmp.lt.s32.totalorder %v761, 15
        %vm826 = vcmp.lt.s32.totalorder %v762, 15
        %vm827 = vcmp.lt.s32.totalorder %v763, 15
        %vm828 = vcmp.lt.s32.totalorder %v764, 15
        %vm829 = vcmp.lt.s32.totalorder %v765, 15
        %vm830 = vcmp.lt.s32.totalorder %v766, 15
        %vm831 = vcmp.lt.s32.totalorder %v767, 15
        %vm832 = vcmp.lt.s32.totalorder %v768, 15
        %vm833 = vcmp.lt.s32.totalorder %v769, 15
        %vm834 = vcmp.lt.s32.totalorder %v770, 15
        %vm835 = vcmp.lt.s32.totalorder %v771, 15
        %vm836 = vcmp.lt.s32.totalorder %v772, 15
        %vm837 = vcmp.lt.s32.totalorder %v773, 15
        %vm838 = vcmp.lt.s32.totalorder %v774, 15
        %vm839 = vcmp.lt.s32.totalorder %v775, 15
        %vm840 = vcmp.lt.s32.totalorder %v776, 15
        %vm841 = vcmp.lt.s32.totalorder %v777, 15
        %vm842 = vcmp.lt.s32.totalorder %v778, 15
        %vm843 = vcmp.lt.s32.totalorder %v779, 15
        %vm844 = vcmp.lt.s32.totalorder %v780, 15
        %vm845 = vcmp.lt.s32.totalorder %v781, 15
        %vm846 = vcmp.lt.s32.totalorder %v782, 15
        %vm847 = vcmp.lt.s32.totalorder %v783, 15
        %vm848 = vcmp.lt.s32.totalorder %v784, 15
        %vm849 = vcmp.lt.s32.totalorder %v785, 15
        %vm850 = vcmp.lt.s32.totalorder %v786, 15
        %vm851 = vcmp.lt.s32.totalorder %v787, 15
        %vm852 = vcmp.lt.s32.totalorder %v788, 15
        %vm853 = vcmp.lt.s32.totalorder %v789, 15
        %vm854 = vcmp.lt.s32.totalorder %v790, 15
        %v855 = vmax.f32 %v342, 0.0
        %v856 = vmax.f32 %v343, 0.0
        %v857 = vmax.f32 %v344, 0.0
        %v858 = vmax.f32 %v345, 0.0
        %v859 = vmax.f32 %v346, 0.0
        %v860 = vmax.f32 %v347, 0.0
        %v861 = vmax.f32 %v348, 0.0
        %v862 = vmax.f32 %v349, 0.0
        %v863 = vmax.f32 %v350, 0.0
        %v864 = vmax.f32 %v351, 0.0
        %v865 = vmax.f32 %v352, 0.0
        %v866 = vmax.f32 %v353, 0.0
        %v867 = vmax.f32 %v354, 0.0
        %v868 = vmax.f32 %v355, 0.0
        %v869 = vmax.f32 %v356, 0.0
        %v870 = vmax.f32 %v357, 0.0
        %v871 = vmax.f32 %v358, 0.0
        %v872 = vmax.f32 %v359, 0.0
        %v873 = vmax.f32 %v360, 0.0
        %v874 = vmax.f32 %v361, 0.0
        %v875 = vmax.f32 %v362, 0.0
        %v876 = vmax.f32 %v363, 0.0
        %v877 = vmax.f32 %v364, 0.0
        %v878 = vmax.f32 %v365, 0.0
        %v879 = vmax.f32 %v366, 0.0
        %v880 = vmax.f32 %v367, 0.0
        %v881 = vmax.f32 %v368, 0.0
        %v882 = vmax.f32 %v369, 0.0
        %v883 = vmax.f32 %v370, 0.0
        %v884 = vmax.f32 %v371, 0.0
        %v885 = vmax.f32 %v372, 0.0
        %v886 = vmax.f32 %v373, 0.0
        %vm919 = vcmask 1040384
        %v920 = vrot.slane %v855, 7
        %v921 = vrot.slane %v856, 7
        %v922 = vsel %vm919, %v920, %v921
        %v923 = vrot.slane %v857, 7
        %v924 = vsel %vm919, %v921, %v923
        %v925 = vrot.slane %v858, 7
        %v926 = vsel %vm919, %v923, %v925
        %v927 = vrot.slane %v859, 7
        %v928 = vsel %vm919, %v925, %v927
        %v929 = vrot.slane %v860, 7
        %v930 = vsel %vm919, %v927, %v929
        %v931 = vrot.slane %v861, 7
        %v932 = vsel %vm919, %v929, %v931
        %v933 = vrot.slane %v862, 7
        %v934 = vsel %vm919, %v931, %v933
        %v935 = vrot.slane %v863, 7
        %v936 = vsel %vm919, %v933, %v935
        %v937 = vrot.slane %v864, 7
        %v938 = vsel %vm919, %v935, %v937
        %v939 = vrot.slane %v865, 7
        %v940 = vsel %vm919, %v937, %v939
        %v941 = vrot.slane %v866, 7
        %v942 = vsel %vm919, %v939, %v941
        %v943 = vrot.slane %v867, 7
        %v944 = vsel %vm919, %v941, %v943
        %v945 = vrot.slane %v868, 7
        %v946 = vsel %vm919, %v943, %v945
        %v947 = vrot.slane %v869, 7
        %v948 = vsel %vm919, %v945, %v947
        %v949 = vrot.slane %v870, 7
        %v950 = vsel %vm919, %v947, %v949
        %v951 = vrot.slane %v871, 7
        %v952 = vsel %vm919, %v949, %v951
        %v953 = vrot.slane %v872, 7
        %v954 = vsel %vm919, %v951, %v953
        %v955 = vrot.slane %v873, 7
        %v956 = vsel %vm919, %v953, %v955
        %v957 = vrot.slane %v874, 7
        %v958 = vsel %vm919, %v955, %v957
        %v959 = vrot.slane %v875, 7
        %v960 = vsel %vm919, %v957, %v959
        %v961 = vrot.slane %v876, 7
        %v962 = vsel %vm919, %v959, %v961
        %v963 = vrot.slane %v877, 7
        %v964 = vsel %vm919, %v961, %v963
        %v965 = vrot.slane %v878, 7
        %v966 = vsel %vm919, %v963, %v965
        %v967 = vrot.slane %v879, 7
        %v968 = vsel %vm919, %v965, %v967
        %v969 = vrot.slane %v880, 7
        %v970 = vsel %vm919, %v967, %v969
        %v971 = vrot.slane %v881, 7
        %v972 = vsel %vm919, %v969, %v971
        %v973 = vrot.slane %v882, 7
        %v974 = vsel %vm919, %v971, %v973
        %v975 = vrot.slane %v883, 7
        %v976 = vsel %vm919, %v973, %v975
        %v977 = vrot.slane %v884, 7
        %v978 = vsel %vm919, %v975, %v977
        %v979 = vrot.slane %v885, 7
        %v980 = vsel %vm919, %v977, %v979
        %v981 = vrot.slane %v886, 7
        %v982 = vsel %vm919, %v979, %v981
        %v1015 = vsel %vm919, 0.0, %v920
        %v1016 = vsel %vm791, 1, 0
        %v1017 = vsel %vm792, 1, 0
        %v1018 = vsel %vm793, 1, 0
        %v1019 = vsel %vm794, 1, 0
        %v1020 = vsel %vm795, 1, 0
        %v1021 = vsel %vm796, 1, 0
        %v1022 = vsel %vm797, 1, 0
        %v1023 = vsel %vm798, 1, 0
        %v1024 = vsel %vm799, 1, 0
        %v1025 = vsel %vm800, 1, 0
        %v1026 = vsel %vm801, 1, 0
        %v1027 = vsel %vm802, 1, 0
        %v1028 = vsel %vm803, 1, 0
        %v1029 = vsel %vm804, 1, 0
        %v1030 = vsel %vm805, 1, 0
        %v1031 = vsel %vm806, 1, 0
        %v1032 = vsel %vm807, 1, 0
        %v1033 = vsel %vm808, 1, 0
        %v1034 = vsel %vm809, 1, 0
        %v1035 = vsel %vm810, 1, 0
        %v1036 = vsel %vm811, 1, 0
        %v1037 = vsel %vm812, 1, 0
        %v1038 = vsel %vm813, 1, 0
        %v1039 = vsel %vm814, 1, 0
        %v1040 = vsel %vm815, 1, 0
        %v1041 = vsel %vm816, 1, 0
        %v1042 = vsel %vm817, 1, 0
        %v1043 = vsel %vm818, 1, 0
        %v1044 = vsel %vm819, 1, 0
        %v1045 = vsel %vm820, 1, 0
        %v1046 = vsel %vm821, 1, 0
        %v1047 = vsel %vm822, 1, 0
        %vm1048 = vcmp.eq.s32.totalorder %v1016, 1
        %vm1049 = vcmp.eq.s32.totalorder %v1017, 1
        %vm1050 = vcmp.eq.s32.totalorder %v1018, 1
        %vm1051 = vcmp.eq.s32.totalorder %v1019, 1
        %vm1052 = vcmp.eq.s32.totalorder %v1020, 1
        %vm1053 = vcmp.eq.s32.totalorder %v1021, 1
        %vm1054 = vcmp.eq.s32.totalorder %v1022, 1
        %vm1055 = vcmp.eq.s32.totalorder %v1023, 1
        %vm1056 = vcmp.eq.s32.totalorder %v1024, 1
        %vm1057 = vcmp.eq.s32.totalorder %v1025, 1
        %vm1058 = vcmp.eq.s32.totalorder %v1026, 1
        %vm1059 = vcmp.eq.s32.totalorder %v1027, 1
        %vm1060 = vcmp.eq.s32.totalorder %v1028, 1
        %vm1061 = vcmp.eq.s32.totalorder %v1029, 1
        %vm1062 = vcmp.eq.s32.totalorder %v1030, 1
        %vm1063 = vcmp.eq.s32.totalorder %v1031, 1
        %vm1064 = vcmp.eq.s32.totalorder %v1032, 1
        %vm1065 = vcmp.eq.s32.totalorder %v1033, 1
        %vm1066 = vcmp.eq.s32.totalorder %v1034, 1
        %vm1067 = vcmp.eq.s32.totalorder %v1035, 1
        %vm1068 = vcmp.eq.s32.totalorder %v1036, 1
        %vm1069 = vcmp.eq.s32.totalorder %v1037, 1
        %vm1070 = vcmp.eq.s32.totalorder %v1038, 1
        %vm1071 = vcmp.eq.s32.totalorder %v1039, 1
        %vm1072 = vcmp.eq.s32.totalorder %v1040, 1
        %vm1073 = vcmp.eq.s32.totalorder %v1041, 1
        %vm1074 = vcmp.eq.s32.totalorder %v1042, 1
        %vm1075 = vcmp.eq.s32.totalorder %v1043, 1
        %vm1076 = vcmp.eq.s32.totalorder %v1044, 1
        %vm1077 = vcmp.eq.s32.totalorder %v1045, 1
        %vm1078 = vcmp.eq.s32.totalorder %v1046, 1
        %vm1079 = vcmp.eq.s32.totalorder %v1047, 1
        %v1080 = vsel %vm1048, %v1015, 0.0
        %v1081 = vsel %vm1049, %v922, 0.0
        %v1082 = vsel %vm1050, %v924, 0.0
        %v1083 = vsel %vm1051, %v926, 0.0
        %v1084 = vsel %vm1052, %v928, 0.0
        %v1085 = vsel %vm1053, %v930, 0.0
        %v1086 = vsel %vm1054, %v932, 0.0
        %v1087 = vsel %vm1055, %v934, 0.0
        %v1088 = vsel %vm1056, %v936, 0.0
        %v1089 = vsel %vm1057, %v938, 0.0
        %v1090 = vsel %vm1058, %v940, 0.0
        %v1091 = vsel %vm1059, %v942, 0.0
        %v1092 = vsel %vm1060, %v944, 0.0
        %v1093 = vsel %vm1061, %v946, 0.0
        %v1094 = vsel %vm1062, %v948, 0.0
        %v1095 = vsel %vm1063, %v950, 0.0
        %v1096 = vsel %vm1064, %v952, 0.0
        %v1097 = vsel %vm1065, %v954, 0.0
        %v1098 = vsel %vm1066, %v956, 0.0
        %v1099 = vsel %vm1067, %v958, 0.0
        %v1100 = vsel %vm1068, %v960, 0.0
        %v1101 = vsel %vm1069, %v962, 0.0
        %v1102 = vsel %vm1070, %v964, 0.0
        %v1103 = vsel %vm1071, %v966, 0.0
        %v1104 = vsel %vm1072, %v968, 0.0
        %v1105 = vsel %vm1073, %v970, 0.0
        %v1106 = vsel %vm1074, %v972, 0.0
        %v1107 = vsel %vm1075, %v974, 0.0
        %v1108 = vsel %vm1076, %v976, 0.0
        %v1109 = vsel %vm1077, %v978, 0.0
        %v1110 = vsel %vm1078, %v980, 0.0
        %v1111 = vsel %vm1079, %v982, 0.0
        %vm1112 = vcmask 1046528
        %v1113 = vrot.slane %v855, 1
        %v1114 = vrot.slane %v856, 1
        %v1115 = vsel %vm1112, %v1113, %v1114
        %v1116 = vrot.slane %v857, 1
        %v1117 = vsel %vm1112, %v1114, %v1116
        %v1118 = vrot.slane %v858, 1
        %v1119 = vsel %vm1112, %v1116, %v1118
        %v1120 = vrot.slane %v859, 1
        %v1121 = vsel %vm1112, %v1118, %v1120
        %v1122 = vrot.slane %v860, 1
        %v1123 = vsel %vm1112, %v1120, %v1122
        %v1124 = vrot.slane %v861, 1
        %v1125 = vsel %vm1112, %v1122, %v1124
        %v1126 = vrot.slane %v862, 1
        %v1127 = vsel %vm1112, %v1124, %v1126
        %v1128 = vrot.slane %v863, 1
        %v1129 = vsel %vm1112, %v1126, %v1128
        %v1130 = vrot.slane %v864, 1
        %v1131 = vsel %vm1112, %v1128, %v1130
        %v1132 = vrot.slane %v865, 1
        %v1133 = vsel %vm1112, %v1130, %v1132
        %v1134 = vrot.slane %v866, 1
        %v1135 = vsel %vm1112, %v1132, %v1134
        %v1136 = vrot.slane %v867, 1
        %v1137 = vsel %vm1112, %v1134, %v1136
        %v1138 = vrot.slane %v868, 1
        %v1139 = vsel %vm1112, %v1136, %v1138
        %v1140 = vrot.slane %v869, 1
        %v1141 = vsel %vm1112, %v1138, %v1140
        %v1142 = vrot.slane %v870, 1
        %v1143 = vsel %vm1112, %v1140, %v1142
        %v1144 = vrot.slane %v871, 1
        %v1145 = vsel %vm1112, %v1142, %v1144
        %v1146 = vrot.slane %v872, 1
        %v1147 = vsel %vm1112, %v1144, %v1146
        %v1148 = vrot.slane %v873, 1
        %v1149 = vsel %vm1112, %v1146, %v1148
        %v1150 = vrot.slane %v874, 1
        %v1151 = vsel %vm1112, %v1148, %v1150
        %v1152 = vrot.slane %v875, 1
        %v1153 = vsel %vm1112, %v1150, %v1152
        %v1154 = vrot.slane %v876, 1
        %v1155 = vsel %vm1112, %v1152, %v1154
        %v1156 = vrot.slane %v877, 1
        %v1157 = vsel %vm1112, %v1154, %v1156
        %v1158 = vrot.slane %v878, 1
        %v1159 = vsel %vm1112, %v1156, %v1158
        %v1160 = vrot.slane %v879, 1
        %v1161 = vsel %vm1112, %v1158, %v1160
        %v1162 = vrot.slane %v880, 1
        %v1163 = vsel %vm1112, %v1160, %v1162
        %v1164 = vrot.slane %v881, 1
        %v1165 = vsel %vm1112, %v1162, %v1164
        %v1166 = vrot.slane %v882, 1
        %v1167 = vsel %vm1112, %v1164, %v1166
        %v1168 = vrot.slane %v883, 1
        %v1169 = vsel %vm1112, %v1166, %v1168
        %v1170 = vrot.slane %v884, 1
        %v1171 = vsel %vm1112, %v1168, %v1170
        %v1172 = vrot.slane %v885, 1
        %v1173 = vsel %vm1112, %v1170, %v1172
        %v1174 = vrot.slane %v886, 1
        %v1175 = vsel %vm1112, %v1172, %v1174
        %v1208 = vsel %vm1112, %v1174, 0.0
        %v1209 = vsel %vm823, 1, 0
        %v1210 = vsel %vm824, 1, 0
        %v1211 = vsel %vm825, 1, 0
        %v1212 = vsel %vm826, 1, 0
        %v1213 = vsel %vm827, 1, 0
        %v1214 = vsel %vm828, 1, 0
        %v1215 = vsel %vm829, 1, 0
        %v1216 = vsel %vm830, 1, 0
        %v1217 = vsel %vm831, 1, 0
        %v1218 = vsel %vm832, 1, 0
        %v1219 = vsel %vm833, 1, 0
        %v1220 = vsel %vm834, 1, 0
        %v1221 = vsel %vm835, 1, 0
        %v1222 = vsel %vm836, 1, 0
        %v1223 = vsel %vm837, 1, 0
        %v1224 = vsel %vm838, 1, 0
        %v1225 = vsel %vm839, 1, 0
        %v1226 = vsel %vm840, 1, 0
        %v1227 = vsel %vm841, 1, 0
        %v1228 = vsel %vm842, 1, 0
        %v1229 = vsel %vm843, 1, 0
        %v1230 = vsel %vm844, 1, 0
        %v1231 = vsel %vm845, 1, 0
        %v1232 = vsel %vm846, 1, 0
        %v1233 = vsel %vm847, 1, 0
        %v1234 = vsel %vm848, 1, 0
        %v1235 = vsel %vm849, 1, 0
        %v1236 = vsel %vm850, 1, 0
        %v1237 = vsel %vm851, 1, 0
        %v1238 = vsel %vm852, 1, 0
        %v1239 = vsel %vm853, 1, 0
        %v1240 = vsel %vm854, 1, 0
        %vm1241 = vcmp.eq.s32.totalorder %v1209, 1
        %vm1242 = vcmp.eq.s32.totalorder %v1210, 1
        %vm1243 = vcmp.eq.s32.totalorder %v1211, 1
        %vm1244 = vcmp.eq.s32.totalorder %v1212, 1
        %vm1245 = vcmp.eq.s32.totalorder %v1213, 1
        %vm1246 = vcmp.eq.s32.totalorder %v1214, 1
        %vm1247 = vcmp.eq.s32.totalorder %v1215, 1
        %vm1248 = vcmp.eq.s32.totalorder %v1216, 1
        %vm1249 = vcmp.eq.s32.totalorder %v1217, 1
        %vm1250 = vcmp.eq.s32.totalorder %v1218, 1
        %vm1251 = vcmp.eq.s32.totalorder %v1219, 1
        %vm1252 = vcmp.eq.s32.totalorder %v1220, 1
        %vm1253 = vcmp.eq.s32.totalorder %v1221, 1
        %vm1254 = vcmp.eq.s32.totalorder %v1222, 1
        %vm1255 = vcmp.eq.s32.totalorder %v1223, 1
        %vm1256 = vcmp.eq.s32.totalorder %v1224, 1
        %vm1257 = vcmp.eq.s32.totalorder %v1225, 1
        %vm1258 = vcmp.eq.s32.totalorder %v1226, 1
        %vm1259 = vcmp.eq.s32.totalorder %v1227, 1
        %vm1260 = vcmp.eq.s32.totalorder %v1228, 1
        %vm1261 = vcmp.eq.s32.totalorder %v1229, 1
        %vm1262 = vcmp.eq.s32.totalorder %v1230, 1
        %vm1263 = vcmp.eq.s32.totalorder %v1231, 1
        %vm1264 = vcmp.eq.s32.totalorder %v1232, 1
        %vm1265 = vcmp.eq.s32.totalorder %v1233, 1
        %vm1266 = vcmp.eq.s32.totalorder %v1234, 1
        %vm1267 = vcmp.eq.s32.totalorder %v1235, 1
        %vm1268 = vcmp.eq.s32.totalorder %v1236, 1
        %vm1269 = vcmp.eq.s32.totalorder %v1237, 1
        %vm1270 = vcmp.eq.s32.totalorder %v1238, 1
        %vm1271 = vcmp.eq.s32.totalorder %v1239, 1
        %vm1272 = vcmp.eq.s32.totalorder %v1240, 1
        %v1273 = vsel %vm1241, %v1115, 0.0
        %v1274 = vsel %vm1242, %v1117, 0.0
        %v1275 = vsel %vm1243, %v1119, 0.0
        %v1276 = vsel %vm1244, %v1121, 0.0
        %v1277 = vsel %vm1245, %v1123, 0.0
        %v1278 = vsel %vm1246, %v1125, 0.0
        %v1279 = vsel %vm1247, %v1127, 0.0
        %v1280 = vsel %vm1248, %v1129, 0.0
        %v1281 = vsel %vm1249, %v1131, 0.0
        %v1282 = vsel %vm1250, %v1133, 0.0
        %v1283 = vsel %vm1251, %v1135, 0.0
        %v1284 = vsel %vm1252, %v1137, 0.0
        %v1285 = vsel %vm1253, %v1139, 0.0
        %v1286 = vsel %vm1254, %v1141, 0.0
        %v1287 = vsel %vm1255, %v1143, 0.0
        %v1288 = vsel %vm1256, %v1145, 0.0
        %v1289 = vsel %vm1257, %v1147, 0.0
        %v1290 = vsel %vm1258, %v1149, 0.0
        %v1291 = vsel %vm1259, %v1151, 0.0
        %v1292 = vsel %vm1260, %v1153, 0.0
        %v1293 = vsel %vm1261, %v1155, 0.0
        %v1294 = vsel %vm1262, %v1157, 0.0
        %v1295 = vsel %vm1263, %v1159, 0.0
        %v1296 = vsel %vm1264, %v1161, 0.0
        %v1297 = vsel %vm1265, %v1163, 0.0
        %v1298 = vsel %vm1266, %v1165, 0.0
        %v1299 = vsel %vm1267, %v1167, 0.0
        %v1300 = vsel %vm1268, %v1169, 0.0
        %v1301 = vsel %vm1269, %v1171, 0.0
        %v1302 = vsel %vm1270, %v1173, 0.0
        %v1303 = vsel %vm1271, %v1175, 0.0
        %v1304 = vsel %vm1272, %v1208, 0.0
        %v1305 = vpack.c.bf16 %v1081, %v1080
        %v1306 = vpack.c.bf16 %v1083, %v1082
        %v1307 = vpack.c.bf16 %v1085, %v1084
        %v1308 = vpack.c.bf16 %v1087, %v1086
        %v1309 = vpack.c.bf16 %v1089, %v1088
        %v1310 = vpack.c.bf16 %v1091, %v1090
        %v1311 = vpack.c.bf16 %v1093, %v1092
        %v1312 = vpack.c.bf16 %v1095, %v1094
        %v1313 = vpack.c.bf16 %v1097, %v1096
        %v1314 = vpack.c.bf16 %v1099, %v1098
        %v1315 = vpack.c.bf16 %v1101, %v1100
        %v1316 = vpack.c.bf16 %v1103, %v1102
        %v1317 = vpack.c.bf16 %v1105, %v1104
        %v1318 = vpack.c.bf16 %v1107, %v1106
        %v1319 = vpack.c.bf16 %v1109, %v1108
        %v1320 = vpack.c.bf16 %v1111, %v1110
        %v1321 = vpack.c.bf16 %v856, %v855
        %v1322 = vpack.c.bf16 %v858, %v857
        %v1323 = vpack.c.bf16 %v860, %v859
        %v1324 = vpack.c.bf16 %v862, %v861
        %v1325 = vpack.c.bf16 %v864, %v863
        %v1326 = vpack.c.bf16 %v866, %v865
        %v1327 = vpack.c.bf16 %v868, %v867
        %v1328 = vpack.c.bf16 %v870, %v869
        %v1329 = vpack.c.bf16 %v872, %v871
        %v1330 = vpack.c.bf16 %v874, %v873
        %v1331 = vpack.c.bf16 %v876, %v875
        %v1332 = vpack.c.bf16 %v878, %v877
        %v1333 = vpack.c.bf16 %v880, %v879
        %v1334 = vpack.c.bf16 %v882, %v881
        %v1335 = vpack.c.bf16 %v884, %v883
        %v1336 = vpack.c.bf16 %v886, %v885
        %v1337 = vpack.c.bf16 %v1274, %v1273
        %v1338 = vpack.c.bf16 %v1276, %v1275
        %v1339 = vpack.c.bf16 %v1278, %v1277
        %v1340 = vpack.c.bf16 %v1280, %v1279
        %v1341 = vpack.c.bf16 %v1282, %v1281
        %v1342 = vpack.c.bf16 %v1284, %v1283
        %v1343 = vpack.c.bf16 %v1286, %v1285
        %v1344 = vpack.c.bf16 %v1288, %v1287
        %v1345 = vpack.c.bf16 %v1290, %v1289
        %v1346 = vpack.c.bf16 %v1292, %v1291
        %v1347 = vpack.c.bf16 %v1294, %v1293
        %v1348 = vpack.c.bf16 %v1296, %v1295
        %v1349 = vpack.c.bf16 %v1298, %v1297
        %v1350 = vpack.c.bf16 %v1300, %v1299
        %v1351 = vpack.c.bf16 %v1302, %v1301
        %v1352 = vpack.c.bf16 %v1304, %v1303
        %v1353 = vld [vmem:[#allocation5] sm:$0xf]
        %v1354 = vld [vmem:[#allocation5 + $0x4] sm:$0xf]
        %v1355 = vld [vmem:[#allocation5 + $0x8] sm:$0xf]
        %v1356 = vld [vmem:[#allocation5 + $0xc] sm:$0xf]
        %v1357 = vld [vmem:[#allocation5 + $0x10] sm:$0xf]
        %v1358 = vld [vmem:[#allocation5 + $0x14] sm:$0xf]
        %v1359 = vld [vmem:[#allocation5 + $0x18] sm:$0xf]
        %v1360 = vld [vmem:[#allocation5 + $0x1c] sm:$0xf]
        %v1361 = vld [vmem:[#allocation5 + $0x20] sm:$0xf]
        %v1362 = vld [vmem:[#allocation5 + $0x24] sm:$0xf]
        %v1363 = vld [vmem:[#allocation5 + $0x28] sm:$0xf]
        %v1364 = vld [vmem:[#allocation5 + $0x2c] sm:$0xf]
        %v1365 = vld [vmem:[#allocation5 + $0x30] sm:$0xf]
        %v1366 = vld [vmem:[#allocation5 + $0x34] sm:$0xf]
        %v1367 = vld [vmem:[#allocation5 + $0x38] sm:$0xf]
        %v1368 = vld [vmem:[#allocation5 + $0x3c] sm:$0xf]
        %v1369 = vld [vmem:[#allocation5 + $0x40] sm:$0xf]
        %v1370 = vld [vmem:[#allocation5 + $0x44] sm:$0xf]
        %v1371 = vld [vmem:[#allocation5 + $0x48] sm:$0xf]
        %v1372 = vld [vmem:[#allocation5 + $0x4c] sm:$0xf]
        %v1373 = vld [vmem:[#allocation5 + $0x50] sm:$0xf]
        %v1374 = vld [vmem:[#allocation5 + $0x54] sm:$0xf]
        %v1375 = vld [vmem:[#allocation5 + $0x58] sm:$0xf]
        %v1376 = vld [vmem:[#allocation5 + $0x5c] sm:$0xf]
        %v1377 = vld [vmem:[#allocation5 + $0x60] sm:$0xf]
        %v1378 = vld [vmem:[#allocation5 + $0x64] sm:$0xf]
        %v1379 = vld [vmem:[#allocation5 + $0x68] sm:$0xf]
        %v1380 = vld [vmem:[#allocation5 + $0x6c] sm:$0xf]
        %v1381 = vld [vmem:[#allocation5 + $0x70] sm:$0xf]
        %v1382 = vld [vmem:[#allocation5 + $0x74] sm:$0xf]
        %v1383 = vld [vmem:[#allocation5 + $0x78] sm:$0xf]
        %v1384 = vld [vmem:[#allocation5 + $0x7c] sm:$0xf]
        %v1385 = vld [vmem:[#allocation5 + $0x80] sm:$0xf]
        %v1386 = vld [vmem:[#allocation5 + $0x84] sm:$0xf]
        %v1387 = vld [vmem:[#allocation5 + $0x88] sm:$0xf]
        %v1388 = vld [vmem:[#allocation5 + $0x8c] sm:$0xf]
        %v1389 = vld [vmem:[#allocation5 + $0x90] sm:$0xf]
        %v1390 = vld [vmem:[#allocation5 + $0x94] sm:$0xf]
        %v1391 = vld [vmem:[#allocation5 + $0x98] sm:$0xf]
        %v1392 = vld [vmem:[#allocation5 + $0x9c] sm:$0xf]
        %v1393 = vld [vmem:[#allocation5 + $0xa0] sm:$0xf]
        %v1394 = vld [vmem:[#allocation5 + $0xa4] sm:$0xf]
        %v1395 = vld [vmem:[#allocation5 + $0xa8] sm:$0xf]
        %v1396 = vld [vmem:[#allocation5 + $0xac] sm:$0xf]
        %v1397 = vld [vmem:[#allocation5 + $0xb0] sm:$0xf]
        %v1398 = vld [vmem:[#allocation5 + $0xb4] sm:$0xf]
        %v1399 = vld [vmem:[#allocation5 + $0xb8] sm:$0xf]
        %v1400 = vld [vmem:[#allocation5 + $0xbc] sm:$0xf]
        %s1401 = scalar_lea.vmem [#allocation5], 192
        %v1402 = vld [vmem:[%s1401] sm:$0xf]
        %v1403 = vld [vmem:[%s1401 + $0x4] sm:$0xf]
        %v1404 = vld [vmem:[%s1401 + $0x8] sm:$0xf]
        %v1405 = vld [vmem:[%s1401 + $0xc] sm:$0xf]
        %v1406 = vld [vmem:[%s1401 + $0x10] sm:$0xf]
        %v1407 = vld [vmem:[%s1401 + $0x14] sm:$0xf]
        %v1408 = vld [vmem:[%s1401 + $0x18] sm:$0xf]
        %v1409 = vld [vmem:[%s1401 + $0x1c] sm:$0xf]
        %v1410 = vld [vmem:[%s1401 + $0x20] sm:$0xf]
        %v1411 = vld [vmem:[%s1401 + $0x24] sm:$0xf]
        %v1412 = vld [vmem:[%s1401 + $0x28] sm:$0xf]
        %v1413 = vld [vmem:[%s1401 + $0x2c] sm:$0xf]
        %v1414 = vld [vmem:[%s1401 + $0x30] sm:$0xf]
        %v1415 = vld [vmem:[%s1401 + $0x34] sm:$0xf]
        %v1416 = vld [vmem:[%s1401 + $0x38] sm:$0xf]
        %v1417 = vld [vmem:[%s1401 + $0x3c] sm:$0xf]
        %v1418 = vld [vmem:[%s1401 + $0x40] sm:$0xf]
        %v1419 = vld [vmem:[%s1401 + $0x44] sm:$0xf]
        %v1420 = vld [vmem:[%s1401 + $0x48] sm:$0xf]
        %v1421 = vld [vmem:[%s1401 + $0x4c] sm:$0xf]
        %v1422 = vld [vmem:[%s1401 + $0x50] sm:$0xf]
        %v1423 = vld [vmem:[%s1401 + $0x54] sm:$0xf]
        %v1424 = vld [vmem:[%s1401 + $0x58] sm:$0xf]
        %v1425 = vld [vmem:[%s1401 + $0x5c] sm:$0xf]
        %v1426 = vld [vmem:[%s1401 + $0x60] sm:$0xf]
        %v1427 = vld [vmem:[%s1401 + $0x64] sm:$0xf]
        %v1428 = vld [vmem:[%s1401 + $0x68] sm:$0xf]
        %v1429 = vld [vmem:[%s1401 + $0x6c] sm:$0xf]
        %v1430 = vld [vmem:[%s1401 + $0x70] sm:$0xf]
        %v1431 = vld [vmem:[%s1401 + $0x74] sm:$0xf]
        %v1432 = vld [vmem:[%s1401 + $0x78] sm:$0xf]
        %v1433 = vld [vmem:[%s1401 + $0x7c] sm:$0xf]
        %v1434 = vld [vmem:[%s1401 + $0x80] sm:$0xf]
        %v1435 = vld [vmem:[%s1401 + $0x84] sm:$0xf]
        %v1436 = vld [vmem:[%s1401 + $0x88] sm:$0xf]
        %v1437 = vld [vmem:[%s1401 + $0x8c] sm:$0xf]
        %v1438 = vld [vmem:[%s1401 + $0x90] sm:$0xf]
        %v1439 = vld [vmem:[%s1401 + $0x94] sm:$0xf]
        %v1440 = vld [vmem:[%s1401 + $0x98] sm:$0xf]
        %v1441 = vld [vmem:[%s1401 + $0x9c] sm:$0xf]
        %v1442 = vld [vmem:[%s1401 + $0xa0] sm:$0xf]
        %v1443 = vld [vmem:[%s1401 + $0xa4] sm:$0xf]
        %v1444 = vld [vmem:[%s1401 + $0xa8] sm:$0xf]
        %v1445 = vld [vmem:[%s1401 + $0xac] sm:$0xf]
        %v1446 = vld [vmem:[%s1401 + $0xb0] sm:$0xf]
        %v1447 = vld [vmem:[%s1401 + $0xb4] sm:$0xf]
        %v1448 = vld [vmem:[%s1401 + $0xb8] sm:$0xf]
        %v1449 = vld [vmem:[%s1401 + $0xbc] sm:$0xf]
        %v1498 = vunpack.c.l.b16 %v1402
        %v1499 = vunpack.c.l.b16 %v1403
        %v1500 = vunpack.c.l.b16 %v1404
        %v1501 = vunpack.c.l.b16 %v1405
        %v1502 = vunpack.c.l.b16 %v1406
        %v1503 = vunpack.c.l.b16 %v1407
        %v1504 = vunpack.c.l.b16 %v1408
        %v1505 = vunpack.c.l.b16 %v1409
        %v1506 = vunpack.c.l.b16 %v1410
        %v1507 = vunpack.c.l.b16 %v1411
        %v1508 = vunpack.c.l.b16 %v1412
        %v1509 = vunpack.c.l.b16 %v1413
        %v1510 = vunpack.c.l.b16 %v1414
        %v1511 = vunpack.c.l.b16 %v1415
        %v1512 = vunpack.c.l.b16 %v1416
        %v1513 = vunpack.c.l.b16 %v1417
        %v1514 = vunpack.c.l.b16 %v1418
        %v1515 = vunpack.c.l.b16 %v1419
        %v1516 = vunpack.c.l.b16 %v1420
        %v1517 = vunpack.c.l.b16 %v1421
        %v1518 = vunpack.c.l.b16 %v1422
        %v1519 = vunpack.c.l.b16 %v1423
        %v1520 = vunpack.c.l.b16 %v1424
        %v1521 = vunpack.c.l.b16 %v1425
        %v1522 = vunpack.c.l.b16 %v1426
        %v1523 = vunpack.c.l.b16 %v1427
        %v1524 = vunpack.c.l.b16 %v1428
        %v1525 = vunpack.c.l.b16 %v1429
        %v1526 = vunpack.c.l.b16 %v1430
        %v1527 = vunpack.c.l.b16 %v1431
        %v1528 = vunpack.c.l.b16 %v1432
        %v1529 = vunpack.c.l.b16 %v1433
        %v1530 = vunpack.c.l.b16 %v1434
        %v1531 = vunpack.c.l.b16 %v1435
        %v1532 = vunpack.c.l.b16 %v1436
        %v1533 = vunpack.c.l.b16 %v1437
        %v1534 = vunpack.c.l.b16 %v1438
        %v1535 = vunpack.c.l.b16 %v1439
        %v1536 = vunpack.c.l.b16 %v1440
        %v1537 = vunpack.c.l.b16 %v1441
        %v1538 = vunpack.c.l.b16 %v1442
        %v1539 = vunpack.c.l.b16 %v1443
        %v1540 = vunpack.c.l.b16 %v1444
        %v1541 = vunpack.c.l.b16 %v1445
        %v1542 = vunpack.c.l.b16 %v1446
        %v1543 = vunpack.c.l.b16 %v1447
        %v1544 = vunpack.c.l.b16 %v1448
        %v1545 = vunpack.c.l.b16 %v1449
        %v1546 = vpack.c.b16 %v1499, %v1498
        %v1547 = vpack.c.b16 %v1501, %v1500
        %v1548 = vpack.c.b16 %v1503, %v1502
        %v1549 = vpack.c.b16 %v1505, %v1504
        %v1550 = vpack.c.b16 %v1507, %v1506
        %v1551 = vpack.c.b16 %v1509, %v1508
        %v1552 = vpack.c.b16 %v1511, %v1510
        %v1553 = vpack.c.b16 %v1513, %v1512
        %v1554 = vpack.c.b16 %v1515, %v1514
        %v1555 = vpack.c.b16 %v1517, %v1516
        %v1556 = vpack.c.b16 %v1519, %v1518
        %v1557 = vpack.c.b16 %v1521, %v1520
        %v1558 = vpack.c.b16 %v1523, %v1522
        %v1559 = vpack.c.b16 %v1525, %v1524
        %v1560 = vpack.c.b16 %v1527, %v1526
        %v1561 = vpack.c.b16 %v1529, %v1528
        %v1562 = vpack.c.b16 %v1531, %v1530
        %v1563 = vpack.c.b16 %v1533, %v1532
        %v1564 = vpack.c.b16 %v1535, %v1534
        %v1565 = vpack.c.b16 %v1537, %v1536
        %v1566 = vpack.c.b16 %v1539, %v1538
        %v1567 = vpack.c.b16 %v1541, %v1540
        %v1568 = vpack.c.b16 %v1543, %v1542
        %v1569 = vpack.c.b16 %v1545, %v1544
        %1594 = vmatprep.subr.bf16.mxu0 0
        %1595 = vmatpush1.bf16.msra.mxu0 %v1546
        %1596 = vmatprep.subr.bf16.mxu0 0
        %1597 = vmatpush1.bf16.msra.mxu0 %v1547
        %1598 = vmatprep.subr.bf16.mxu0 0
        %1599 = vmatpush1.bf16.msra.mxu0 %v1548
        %1600 = vmatprep.subr.bf16.mxu0 0
        %1601 = vmatpush1.bf16.msra.mxu0 %v1549
        %1602 = vmatprep.subr.bf16.mxu0 0
        %1603 = vmatpush1.bf16.msra.mxu0 %v1550
        %1604 = vmatprep.subr.bf16.mxu0 0
        %1605 = vmatpush1.bf16.msra.mxu0 %v1551
        %1606 = vmatprep.subr.bf16.mxu0 0
        %1607 = vmatpush1.bf16.msra.mxu0 %v1552
        %1608 = vmatprep.subr.bf16.mxu0 0
        %1609 = vmatpush1.bf16.msra.mxu0 %v1553
        %1610 = vmatprep.subr.bf16.mxu0 0
        %1611 = vmatpush1.bf16.msra.mxu0 %v1554
        %1612 = vmatprep.subr.bf16.mxu0 0
        %1613 = vmatpush1.bf16.msra.mxu0 %v1555
        %1614 = vmatprep.subr.bf16.mxu0 0
        %1615 = vmatpush1.bf16.msra.mxu0 %v1556
        %1616 = vmatprep.subr.bf16.mxu0 0
        %1617 = vmatpush1.bf16.msra.mxu0 %v1557
        %1618 = vmatprep.subr.bf16.mxu0 0
        %1619 = vmatpush1.bf16.msra.mxu0 %v1558
        %1620 = vmatprep.subr.bf16.mxu0 0
        %1621 = vmatpush1.bf16.msra.mxu0 %v1559
        %1622 = vmatprep.subr.bf16.mxu0 0
        %1623 = vmatpush1.bf16.msra.mxu0 %v1560
        %1624 = vmatprep.subr.bf16.mxu0 0
        %1625 = vmatpush1.bf16.msra.mxu0 %v1561
        %1626 = vmatprep.mubr.bf16.mxu0 %v1321
        %1627 = vmatmul.mubr.bf16.gmra.mrb[0].mxu0 %v1305
        %v1628 = vpop.f32.mrb[0].mxu0
        %v1629 = vadd.f32 0.0, %v1628
        %v1630 = vpop.f32.mrb[0].mxu0
        %v1631 = vpop.f32.mrb[0].mxu0
        %v1632 = vadd.f32 0.0, %v1631
        %v1633 = vpop.f32.mrb[0].mxu0
        %1634 = vmatprep.mubr.bf16.mxu0 %v1322
        %1635 = vmatmul.mubr.bf16.gmra.mrb[0].mxu0 %v1306
        %v1636 = vpop.f32.mrb[0].mxu0
        %v1637 = vadd.f32 0.0, %v1636
        %v1638 = vpop.f32.mrb[0].mxu0
        %v1639 = vpop.f32.mrb[0].mxu0
        %v1640 = vadd.f32 0.0, %v1639
        %v1641 = vpop.f32.mrb[0].mxu0
        %1642 = vmatprep.mubr.bf16.mxu0 %v1323
        %1643 = vmatmul.mubr.bf16.gmra.mrb[0].mxu0 %v1307
        %v1644 = vpop.f32.mrb[0].mxu0
        %v1645 = vadd.f32 0.0, %v1644
        %v1646 = vpop.f32.mrb[0].mxu0
        %v1647 = vpop.f32.mrb[0].mxu0
        %v1648 = vadd.f32 0.0, %v1647
        %v1649 = vpop.f32.mrb[0].mxu0
        %1650 = vmatprep.mubr.bf16.mxu0 %v1324
        %1651 = vmatmul.mubr.bf16.gmra.mrb[0].mxu0 %v1308
        %v1652 = vpop.f32.mrb[0].mxu0
        %v1653 = vadd.f32 0.0, %v1652
        %v1654 = vpop.f32.mrb[0].mxu0
        %v1655 = vpop.f32.mrb[0].mxu0
        %v1656 = vadd.f32 0.0, %v1655
        %v1657 = vpop.f32.mrb[0].mxu0
        %1658 = vmatprep.mubr.bf16.mxu0 %v1325
        %1659 = vmatmul.mubr.bf16.gmra.mrb[0].mxu0 %v1309
        %v1660 = vpop.f32.mrb[0].mxu0
        %v1661 = vadd.f32 0.0, %v1660
        %v1662 = vpop.f32.mrb[0].mxu0
        %v1663 = vpop.f32.mrb[0].mxu0
        %v1664 = vadd.f32 0.0, %v1663
        %v1665 = vpop.f32.mrb[0].mxu0
        %1666 = vmatprep.mubr.bf16.mxu0 %v1326
        %1667 = vmatmul.mubr.bf16.gmra.mrb[0].mxu0 %v1310
        %v1668 = vpop.f32.mrb[0].mxu0
        %v1669 = vadd.f32 0.0, %v1668
        %v1670 = vpop.f32.mrb[0].mxu0
        %v1671 = vpop.f32.mrb[0].mxu0
        %v1672 = vadd.f32 0.0, %v1671
        %v1673 = vpop.f32.mrb[0].mxu0
        %1674 = vmatprep.mubr.bf16.mxu0 %v1327
        %1675 = vmatmul.mubr.bf16.gmra.mrb[0].mxu0 %v1311
        %v1676 = vpop.f32.mrb[0].mxu0
        %v1677 = vadd.f32 0.0, %v1676
        %v1678 = vpop.f32.mrb[0].mxu0
        %v1679 = vpop.f32.mrb[0].mxu0
        %v1680 = vadd.f32 0.0, %v1679
        %v1681 = vpop.f32.mrb[0].mxu0
        %1682 = vmatprep.mubr.bf16.mxu0 %v1328
        %1683 = vmatmul.mubr.bf16.gmra.mrb[0].mxu0 %v1312
        %v1684 = vpop.f32.mrb[0].mxu0
        %v1685 = vadd.f32 0.0, %v1684
        %v1686 = vpop.f32.mrb[0].mxu0
        %v1687 = vpop.f32.mrb[0].mxu0
        %v1688 = vadd.f32 0.0, %v1687
        %v1689 = vpop.f32.mrb[0].mxu0
        %1690 = vmatprep.mubr.bf16.mxu0 %v1329
        %1691 = vmatmul.mubr.bf16.gmra.mrb[0].mxu0 %v1313
        %v1692 = vpop.f32.mrb[0].mxu0
        %v1693 = vadd.f32 0.0, %v1692
        %v1694 = vpop.f32.mrb[0].mxu0
        %v1695 = vpop.f32.mrb[0].mxu0
        %v1696 = vadd.f32 0.0, %v1695
        %v1697 = vpop.f32.mrb[0].mxu0
        %1698 = vmatprep.mubr.bf16.mxu0 %v1330
        %1699 = vmatmul.mubr.bf16.gmra.mrb[0].mxu0 %v1314
        %v1700 = vpop.f32.mrb[0].mxu0
        %v1701 = vadd.f32 0.0, %v1700
        %v1702 = vpop.f32.mrb[0].mxu0
        %v1703 = vpop.f32.mrb[0].mxu0
        %v1704 = vadd.f32 0.0, %v1703
        %v1705 = vpop.f32.mrb[0].mxu0
        %1706 = vmatprep.mubr.bf16.mxu0 %v1331
        %1707 = vmatmul.mubr.bf16.gmra.mrb[0].mxu0 %v1315
        %v1708 = vpop.f32.mrb[0].mxu0
        %v1709 = vadd.f32 0.0, %v1708
        %v1710 = vpop.f32.mrb[0].mxu0
        %v1711 = vpop.f32.mrb[0].mxu0
        %v1712 = vadd.f32 0.0, %v1711
        %v1713 = vpop.f32.mrb[0].mxu0
        %1714 = vmatprep.mubr.bf16.mxu0 %v1332
        %1715 = vmatmul.mubr.bf16.gmra.mrb[0].mxu0 %v1316
        %v1716 = vpop.f32.mrb[0].mxu0
        %v1717 = vadd.f32 0.0, %v1716
        %v1718 = vpop.f32.mrb[0].mxu0
        %v1719 = vpop.f32.mrb[0].mxu0
        %v1720 = vadd.f32 0.0, %v1719
        %v1721 = vpop.f32.mrb[0].mxu0
        %1722 = vmatprep.mubr.bf16.mxu0 %v1333
        %1723 = vmatmul.mubr.bf16.gmra.mrb[0].mxu0 %v1317
        %v1724 = vpop.f32.mrb[0].mxu0
        %v1725 = vadd.f32 0.0, %v1724
        %v1726 = vpop.f32.mrb[0].mxu0
        %v1727 = vpop.f32.mrb[0].mxu0
        %v1728 = vadd.f32 0.0, %v1727
        %v1729 = vpop.f32.mrb[0].mxu0
        %1730 = vmatprep.mubr.bf16.mxu0 %v1334
        %1731 = vmatmul.mubr.bf16.gmra.mrb[0].mxu0 %v1318
        %v1732 = vpop.f32.mrb[0].mxu0
        %v1733 = vadd.f32 0.0, %v1732
        %v1734 = vpop.f32.mrb[0].mxu0
        %v1735 = vpop.f32.mrb[0].mxu0
        %v1736 = vadd.f32 0.0, %v1735
        %v1737 = vpop.f32.mrb[0].mxu0
        %1738 = vmatprep.mubr.bf16.mxu0 %v1335
        %1739 = vmatmul.mubr.bf16.gmra.mrb[0].mxu0 %v1319
        %v1740 = vpop.f32.mrb[0].mxu0
        %v1741 = vadd.f32 0.0, %v1740
        %v1742 = vpop.f32.mrb[0].mxu0
        %v1743 = vpop.f32.mrb[0].mxu0
        %v1744 = vadd.f32 0.0, %v1743
        %v1745 = vpop.f32.mrb[0].mxu0
        %1746 = vmatprep.mubr.bf16.mxu0 %v1336
        %1747 = vmatmul.mubr.bf16.gmra.mrb[0].mxu0 %v1320
        %v1748 = vpop.f32.mrb[0].mxu0
        %v1749 = vadd.f32 0.0, %v1748
        %v1750 = vpop.f32.mrb[0].mxu0
        %v1751 = vpop.f32.mrb[0].mxu0
        %v1752 = vadd.f32 0.0, %v1751
        %v1753 = vpop.f32.mrb[0].mxu0
        %1754 = vdwg.mxu0
        %1755 = vmatprep.subr.bf16.mxu0 0
        %1756 = vmatpush1.bf16.msra.mxu0 %v1562
        %1757 = vmatprep.subr.bf16.mxu0 0
        %1758 = vmatpush1.bf16.msra.mxu0 %v1563
        %1759 = vmatprep.subr.bf16.mxu0 0
        %1760 = vmatpush1.bf16.msra.mxu0 %v1564
        %1761 = vmatprep.subr.bf16.mxu0 0
        %1762 = vmatpush1.bf16.msra.mxu0 %v1565
        %1763 = vmatprep.subr.bf16.mxu0 0
        %1764 = vmatpush1.bf16.msra.mxu0 %v1566
        %1765 = vmatprep.subr.bf16.mxu0 0
        %1766 = vmatpush1.bf16.msra.mxu0 %v1567
        %1767 = vmatprep.subr.bf16.mxu0 0
        %1768 = vmatpush1.bf16.msra.mxu0 %v1568
        %1769 = vmatprep.subr.bf16.mxu0 0
        %1770 = vmatpush1.bf16.msra.mxu0 %v1569
        %1771 = vmatprep.subr.bf16.mxu0 0
        %1772 = vmatpush1.bf16.msra.mxu0 0
        %1773 = vmatprep.subr.bf16.mxu0 0
        %1774 = vmatpush1.bf16.msra.mxu0 0
        %1775 = vmatprep.subr.bf16.mxu0 0
        %1776 = vmatpush1.bf16.msra.mxu0 0
        %1777 = vmatprep.subr.bf16.mxu0 0
        %1778 = vmatpush1.bf16.msra.mxu0 0
        %1779 = vmatprep.subr.bf16.mxu0 0
        %1780 = vmatpush1.bf16.msra.mxu0 0
        %1781 = vmatprep.subr.bf16.mxu0 0
        %1782 = vmatpush1.bf16.msra.mxu0 0
        %1783 = vmatprep.subr.bf16.mxu0 0
        %1784 = vmatpush1.bf16.msra.mxu0 0
        %1785 = vmatprep.subr.bf16.mxu0 0
        %1786 = vmatpush1.bf16.msra.mxu0 0
        %1787 = vmatprep.mubr.bf16.mxu0 0
        %1788 = vmatmul.mubr.bf16.gmra.mrb[0].mxu0 %v1337
        %v1789 = vpop.f32.mrb[0].mxu0
        %v1790 = vadd.f32 %v1629, %v1789
        %v1791 = vpop.f32.mrb[0].mxu0
        %v1792 = vpop.f32.mrb[0].mxu0
        %v1793 = vadd.f32 %v1632, %v1792
        %v1794 = vpop.f32.mrb[0].mxu0
        %1795 = vmatprep.mubr.bf16.mxu0 0
        %1796 = vmatmul.mubr.bf16.gmra.mrb[0].mxu0 %v1338
        %v1797 = vpop.f32.mrb[0].mxu0
        %v1798 = vadd.f32 %v1637, %v1797
        %v1799 = vpop.f32.mrb[0].mxu0
        %v1800 = vpop.f32.mrb[0].mxu0
        %v1801 = vadd.f32 %v1640, %v1800
        %v1802 = vpop.f32.mrb[0].mxu0
        %1803 = vmatprep.mubr.bf16.mxu0 0
        %1804 = vmatmul.mubr.bf16.gmra.mrb[0].mxu0 %v1339
        %v1805 = vpop.f32.mrb[0].mxu0
        %v1806 = vadd.f32 %v1645, %v1805
        %v1807 = vpop.f32.mrb[0].mxu0
        %v1808 = vpop.f32.mrb[0].mxu0
        %v1809 = vadd.f32 %v1648, %v1808
        %v1810 = vpop.f32.mrb[0].mxu0
        %1811 = vmatprep.mubr.bf16.mxu0 0
        %1812 = vmatmul.mubr.bf16.gmra.mrb[0].mxu0 %v1340
        %v1813 = vpop.f32.mrb[0].mxu0
        %v1814 = vadd.f32 %v1653, %v1813
        %v1815 = vpop.f32.mrb[0].mxu0
        %v1816 = vpop.f32.mrb[0].mxu0
        %v1817 = vadd.f32 %v1656, %v1816
        %v1818 = vpop.f32.mrb[0].mxu0
        %1819 = vmatprep.mubr.bf16.mxu0 0
        %1820 = vmatmul.mubr.bf16.gmra.mrb[0].mxu0 %v1341
        %v1821 = vpop.f32.mrb[0].mxu0
        %v1822 = vadd.f32 %v1661, %v1821
        %v1823 = vpop.f32.mrb[0].mxu0
        %v1824 = vpop.f32.mrb[0].mxu0
        %v1825 = vadd.f32 %v1664, %v1824
        %v1826 = vpop.f32.mrb[0].mxu0
        %1827 = vmatprep.mubr.bf16.mxu0 0
        %1828 = vmatmul.mubr.bf16.gmra.mrb[0].mxu0 %v1342
        %v1829 = vpop.f32.mrb[0].mxu0
        %v1830 = vadd.f32 %v1669, %v1829
        %v1831 = vpop.f32.mrb[0].mxu0
        %v1832 = vpop.f32.mrb[0].mxu0
        %v1833 = vadd.f32 %v1672, %v1832
        %v1834 = vpop.f32.mrb[0].mxu0
        %1835 = vmatprep.mubr.bf16.mxu0 0
        %1836 = vmatmul.mubr.bf16.gmra.mrb[0].mxu0 %v1343
        %v1837 = vpop.f32.mrb[0].mxu0
        %v1838 = vadd.f32 %v1677, %v1837
        %v1839 = vpop.f32.mrb[0].mxu0
        %v1840 = vpop.f32.mrb[0].mxu0
        %v1841 = vadd.f32 %v1680, %v1840
        %v1842 = vpop.f32.mrb[0].mxu0
        %1843 = vmatprep.mubr.bf16.mxu0 0
        %1844 = vmatmul.mubr.bf16.gmra.mrb[0].mxu0 %v1344
        %v1845 = vpop.f32.mrb[0].mxu0
        %v1846 = vadd.f32 %v1685, %v1845
        %v1847 = vpop.f32.mrb[0].mxu0
        %v1848 = vpop.f32.mrb[0].mxu0
        %v1849 = vadd.f32 %v1688, %v1848
        %v1850 = vpop.f32.mrb[0].mxu0
        %1851 = vmatprep.mubr.bf16.mxu0 0
        %1852 = vmatmul.mubr.bf16.gmra.mrb[0].mxu0 %v1345
        %v1853 = vpop.f32.mrb[0].mxu0
        %v1854 = vadd.f32 %v1693, %v1853
        %v1855 = vpop.f32.mrb[0].mxu0
        %v1856 = vpop.f32.mrb[0].mxu0
        %v1857 = vadd.f32 %v1696, %v1856
        %v1858 = vpop.f32.mrb[0].mxu0
        %1859 = vmatprep.mubr.bf16.mxu0 0
        %1860 = vmatmul.mubr.bf16.gmra.mrb[0].mxu0 %v1346
        %v1861 = vpop.f32.mrb[0].mxu0
        %v1862 = vadd.f32 %v1701, %v1861
        %v1863 = vpop.f32.mrb[0].mxu0
        %v1864 = vpop.f32.mrb[0].mxu0
        %v1865 = vadd.f32 %v1704, %v1864
        %v1866 = vpop.f32.mrb[0].mxu0
        %1867 = vmatprep.mubr.bf16.mxu0 0
        %1868 = vmatmul.mubr.bf16.gmra.mrb[0].mxu0 %v1347
        %v1869 = vpop.f32.mrb[0].mxu0
        %v1870 = vadd.f32 %v1709, %v1869
        %v1871 = vpop.f32.mrb[0].mxu0
        %v1872 = vpop.f32.mrb[0].mxu0
        %v1873 = vadd.f32 %v1712, %v1872
        %v1874 = vpop.f32.mrb[0].mxu0
        %1875 = vmatprep.mubr.bf16.mxu0 0
        %1876 = vmatmul.mubr.bf16.gmra.mrb[0].mxu0 %v1348
        %v1877 = vpop.f32.mrb[0].mxu0
        %v1878 = vadd.f32 %v1717, %v1877
        %v1879 = vpop.f32.mrb[0].mxu0
        %v1880 = vpop.f32.mrb[0].mxu0
        %v1881 = vadd.f32 %v1720, %v1880
        %v1882 = vpop.f32.mrb[0].mxu0
        %1883 = vmatprep.mubr.bf16.mxu0 0
        %1884 = vmatmul.mubr.bf16.gmra.mrb[0].mxu0 %v1349
        %v1885 = vpop.f32.mrb[0].mxu0
        %v1886 = vadd.f32 %v1725, %v1885
        %v1887 = vpop.f32.mrb[0].mxu0
        %v1888 = vpop.f32.mrb[0].mxu0
        %v1889 = vadd.f32 %v1728, %v1888
        %v1890 = vpop.f32.mrb[0].mxu0
        %1891 = vmatprep.mubr.bf16.mxu0 0
        %1892 = vmatmul.mubr.bf16.gmra.mrb[0].mxu0 %v1350
        %v1893 = vpop.f32.mrb[0].mxu0
        %v1894 = vadd.f32 %v1733, %v1893
        %v1895 = vpop.f32.mrb[0].mxu0
        %v1896 = vpop.f32.mrb[0].mxu0
        %v1897 = vadd.f32 %v1736, %v1896
        %v1898 = vpop.f32.mrb[0].mxu0
        %1899 = vmatprep.mubr.bf16.mxu0 0
        %1900 = vmatmul.mubr.bf16.gmra.mrb[0].mxu0 %v1351
        %v1901 = vpop.f32.mrb[0].mxu0
        %v1902 = vadd.f32 %v1741, %v1901
        %v1903 = vpop.f32.mrb[0].mxu0
        %v1904 = vpop.f32.mrb[0].mxu0
        %v1905 = vadd.f32 %v1744, %v1904
        %v1906 = vpop.f32.mrb[0].mxu0
        %1907 = vmatprep.mubr.bf16.mxu0 0
        %1908 = vmatmul.mubr.bf16.gmra.mrb[0].mxu0 %v1352
        %v1909 = vpop.f32.mrb[0].mxu0
        %v1910 = vadd.f32 %v1749, %v1909
        %v1911 = vpop.f32.mrb[0].mxu0
        %v1912 = vpop.f32.mrb[0].mxu0
        %v1913 = vadd.f32 %v1752, %v1912
        %v1914 = vpop.f32.mrb[0].mxu0
        %1915 = vdwg.mxu0
        %v1964 = vunpack.c.l.b16 %v1353
        %v1965 = vunpack.c.l.b16 %v1354
        %v1966 = vunpack.c.l.b16 %v1355
        %v1967 = vunpack.c.l.b16 %v1356
        %v1968 = vunpack.c.l.b16 %v1357
        %v1969 = vunpack.c.l.b16 %v1358
        %v1970 = vunpack.c.l.b16 %v1359
        %v1971 = vunpack.c.l.b16 %v1360
        %v1972 = vunpack.c.l.b16 %v1361
        %v1973 = vunpack.c.l.b16 %v1362
        %v1974 = vunpack.c.l.b16 %v1363
        %v1975 = vunpack.c.l.b16 %v1364
        %v1976 = vunpack.c.l.b16 %v1365
        %v1977 = vunpack.c.l.b16 %v1366
        %v1978 = vunpack.c.l.b16 %v1367
        %v1979 = vunpack.c.l.b16 %v1368
        %v1980 = vunpack.c.l.b16 %v1369
        %v1981 = vunpack.c.l.b16 %v1370
        %v1982 = vunpack.c.l.b16 %v1371
        %v1983 = vunpack.c.l.b16 %v1372
        %v1984 = vunpack.c.l.b16 %v1373
        %v1985 = vunpack.c.l.b16 %v1374
        %v1986 = vunpack.c.l.b16 %v1375
        %v1987 = vunpack.c.l.b16 %v1376
        %v1988 = vunpack.c.l.b16 %v1377
        %v1989 = vunpack.c.l.b16 %v1378
        %v1990 = vunpack.c.l.b16 %v1379
        %v1991 = vunpack.c.l.b16 %v1380
        %v1992 = vunpack.c.l.b16 %v1381
        %v1993 = vunpack.c.l.b16 %v1382
        %v1994 = vunpack.c.l.b16 %v1383
        %v1995 = vunpack.c.l.b16 %v1384
        %v1996 = vunpack.c.l.b16 %v1385
        %v1997 = vunpack.c.l.b16 %v1386
        %v1998 = vunpack.c.l.b16 %v1387
        %v1999 = vunpack.c.l.b16 %v1388
        %v2000 = vunpack.c.l.b16 %v1389
        %v2001 = vunpack.c.l.b16 %v1390
        %v2002 = vunpack.c.l.b16 %v1391
        %v2003 = vunpack.c.l.b16 %v1392
        %v2004 = vunpack.c.l.b16 %v1393
        %v2005 = vunpack.c.l.b16 %v1394
        %v2006 = vunpack.c.l.b16 %v1395
        %v2007 = vunpack.c.l.b16 %v1396
        %v2008 = vunpack.c.l.b16 %v1397
        %v2009 = vunpack.c.l.b16 %v1398
        %v2010 = vunpack.c.l.b16 %v1399
        %v2011 = vunpack.c.l.b16 %v1400
        %v2012 = vpack.c.b16 %v1965, %v1964
        %v2013 = vpack.c.b16 %v1967, %v1966
        %v2014 = vpack.c.b16 %v1969, %v1968
        %v2015 = vpack.c.b16 %v1971, %v1970
        %v2016 = vpack.c.b16 %v1973, %v1972
        %v2017 = vpack.c.b16 %v1975, %v1974
        %v2018 = vpack.c.b16 %v1977, %v1976
        %v2019 = vpack.c.b16 %v1979, %v1978
        %v2020 = vpack.c.b16 %v1981, %v1980
        %v2021 = vpack.c.b16 %v1983, %v1982
        %v2022 = vpack.c.b16 %v1985, %v1984
        %v2023 = vpack.c.b16 %v1987, %v1986
        %v2024 = vpack.c.b16 %v1989, %v1988
        %v2025 = vpack.c.b16 %v1991, %v1990
        %v2026 = vpack.c.b16 %v1993, %v1992
        %v2027 = vpack.c.b16 %v1995, %v1994
        %v2028 = vpack.c.b16 %v1997, %v1996
        %v2029 = vpack.c.b16 %v1999, %v1998
        %v2030 = vpack.c.b16 %v2001, %v2000
        %v2031 = vpack.c.b16 %v2003, %v2002
        %v2032 = vpack.c.b16 %v2005, %v2004
        %v2033 = vpack.c.b16 %v2007, %v2006
        %v2034 = vpack.c.b16 %v2009, %v2008
        %v2035 = vpack.c.b16 %v2011, %v2010
        %2060 = vmatprep.subr.bf16.mxu0 0
        %2061 = vmatpush1.bf16.msra.mxu0 %v2012
        %2062 = vmatprep.subr.bf16.mxu0 0
        %2063 = vmatpush1.bf16.msra.mxu0 %v2013
        %2064 = vmatprep.subr.bf16.mxu0 0
        %2065 = vmatpush1.bf16.msra.mxu0 %v2014
        %2066 = vmatprep.subr.bf16.mxu0 0
        %2067 = vmatpush1.bf16.msra.mxu0 %v2015
        %2068 = vmatprep.subr.bf16.mxu0 0
        %2069 = vmatpush1.bf16.msra.mxu0 %v2016
        %2070 = vmatprep.subr.bf16.mxu0 0
        %2071 = vmatpush1.bf16.msra.mxu0 %v2017
        %2072 = vmatprep.subr.bf16.mxu0 0
        %2073 = vmatpush1.bf16.msra.mxu0 %v2018
        %2074 = vmatprep.subr.bf16.mxu0 0
        %2075 = vmatpush1.bf16.msra.mxu0 %v2019
        %2076 = vmatprep.subr.bf16.mxu0 0
        %2077 = vmatpush1.bf16.msra.mxu0 %v2020
        %2078 = vmatprep.subr.bf16.mxu0 0
        %2079 = vmatpush1.bf16.msra.mxu0 %v2021
        %2080 = vmatprep.subr.bf16.mxu0 0
        %2081 = vmatpush1.bf16.msra.mxu0 %v2022
        %2082 = vmatprep.subr.bf16.mxu0 0
        %2083 = vmatpush1.bf16.msra.mxu0 %v2023
        %2084 = vmatprep.subr.bf16.mxu0 0
        %2085 = vmatpush1.bf16.msra.mxu0 %v2024
        %2086 = vmatprep.subr.bf16.mxu0 0
        %2087 = vmatpush1.bf16.msra.mxu0 %v2025
        %2088 = vmatprep.subr.bf16.mxu0 0
        %2089 = vmatpush1.bf16.msra.mxu0 %v2026
        %2090 = vmatprep.subr.bf16.mxu0 0
        %2091 = vmatpush1.bf16.msra.mxu0 %v2027
        %2092 = vmatprep.mubr.bf16.mxu0 0
        %2093 = vmatmul.mubr.bf16.gmra.mrb[0].mxu0 0
        %v2094 = vpop.f32.mrb[0].mxu0
        %v2095 = vadd.f32 %v1790, %v2094
        %v2096 = vpop.f32.mrb[0].mxu0
        %v2097 = vpop.f32.mrb[0].mxu0
        %v2098 = vadd.f32 %v1793, %v2097
        %v2099 = vpop.f32.mrb[0].mxu0
        %2100 = vmatprep.mubr.bf16.mxu0 %v1321
        %2101 = vmatmul.mubr.bf16.gmra.mrb[0].mxu0 %v1305
        %v2102 = vpop.f32.mrb[0].mxu0
        %v2103 = vadd.f32 %v1798, %v2102
        %v2104 = vpop.f32.mrb[0].mxu0
        %v2105 = vpop.f32.mrb[0].mxu0
        %v2106 = vadd.f32 %v1801, %v2105
        %v2107 = vpop.f32.mrb[0].mxu0
        %2108 = vmatprep.mubr.bf16.mxu0 %v1322
        %2109 = vmatmul.mubr.bf16.gmra.mrb[0].mxu0 %v1306
        %v2110 = vpop.f32.mrb[0].mxu0
        %v2111 = vadd.f32 %v1806, %v2110
        %v2112 = vpop.f32.mrb[0].mxu0
        %v2113 = vpop.f32.mrb[0].mxu0
        %v2114 = vadd.f32 %v1809, %v2113
        %v2115 = vpop.f32.mrb[0].mxu0
        %2116 = vmatprep.mubr.bf16.mxu0 %v1323
        %2117 = vmatmul.mubr.bf16.gmra.mrb[0].mxu0 %v1307
        %v2118 = vpop.f32.mrb[0].mxu0
        %v2119 = vadd.f32 %v1814, %v2118
        %v2120 = vpop.f32.mrb[0].mxu0
        %v2121 = vpop.f32.mrb[0].mxu0
        %v2122 = vadd.f32 %v1817, %v2121
        %v2123 = vpop.f32.mrb[0].mxu0
        %2124 = vmatprep.mubr.bf16.mxu0 %v1324
        %2125 = vmatmul.mubr.bf16.gmra.mrb[0].mxu0 %v1308
        %v2126 = vpop.f32.mrb[0].mxu0
        %v2127 = vadd.f32 %v1822, %v2126
        %v2128 = vpop.f32.mrb[0].mxu0
        %v2129 = vpop.f32.mrb[0].mxu0
        %v2130 = vadd.f32 %v1825, %v2129
        %v2131 = vpop.f32.mrb[0].mxu0
        %2132 = vmatprep.mubr.bf16.mxu0 %v1325
        %2133 = vmatmul.mubr.bf16.gmra.mrb[0].mxu0 %v1309
        %v2134 = vpop.f32.mrb[0].mxu0
        %v2135 = vadd.f32 %v1830, %v2134
        %v2136 = vpop.f32.mrb[0].mxu0
        %v2137 = vpop.f32.mrb[0].mxu0
        %v2138 = vadd.f32 %v1833, %v2137
        %v2139 = vpop.f32.mrb[0].mxu0
        %2140 = vmatprep.mubr.bf16.mxu0 %v1326
        %2141 = vmatmul.mubr.bf16.gmra.mrb[0].mxu0 %v1310
        %v2142 = vpop.f32.mrb[0].mxu0
        %v2143 = vadd.f32 %v1838, %v2142
        %v2144 = vpop.f32.mrb[0].mxu0
        %v2145 = vpop.f32.mrb[0].mxu0
        %v2146 = vadd.f32 %v1841, %v2145
        %v2147 = vpop.f32.mrb[0].mxu0
        %2148 = vmatprep.mubr.bf16.mxu0 %v1327
        %2149 = vmatmul.mubr.bf16.gmra.mrb[0].mxu0 %v1311
        %v2150 = vpop.f32.mrb[0].mxu0
        %v2151 = vadd.f32 %v1846, %v2150
        %v2152 = vpop.f32.mrb[0].mxu0
        %v2153 = vpop.f32.mrb[0].mxu0
        %v2154 = vadd.f32 %v1849, %v2153
        %v2155 = vpop.f32.mrb[0].mxu0
        %2156 = vmatprep.mubr.bf16.mxu0 %v1328
        %2157 = vmatmul.mubr.bf16.gmra.mrb[0].mxu0 %v1312
        %v2158 = vpop.f32.mrb[0].mxu0
        %v2159 = vadd.f32 %v1854, %v2158
        %v2160 = vpop.f32.mrb[0].mxu0
        %v2161 = vpop.f32.mrb[0].mxu0
        %v2162 = vadd.f32 %v1857, %v2161
        %v2163 = vpop.f32.mrb[0].mxu0
        %2164 = vmatprep.mubr.bf16.mxu0 %v1329
        %2165 = vmatmul.mubr.bf16.gmra.mrb[0].mxu0 %v1313
        %v2166 = vpop.f32.mrb[0].mxu0
        %v2167 = vadd.f32 %v1862, %v2166
        %v2168 = vpop.f32.mrb[0].mxu0
        %v2169 = vpop.f32.mrb[0].mxu0
        %v2170 = vadd.f32 %v1865, %v2169
        %v2171 = vpop.f32.mrb[0].mxu0
        %2172 = vmatprep.mubr.bf16.mxu0 %v1330
        %2173 = vmatmul.mubr.bf16.gmra.mrb[0].mxu0 %v1314
        %v2174 = vpop.f32.mrb[0].mxu0
        %v2175 = vadd.f32 %v1870, %v2174
        %v2176 = vpop.f32.mrb[0].mxu0
        %v2177 = vpop.f32.mrb[0].mxu0
        %v2178 = vadd.f32 %v1873, %v2177
        %v2179 = vpop.f32.mrb[0].mxu0
        %2180 = vmatprep.mubr.bf16.mxu0 %v1331
        %2181 = vmatmul.mubr.bf16.gmra.mrb[0].mxu0 %v1315
        %v2182 = vpop.f32.mrb[0].mxu0
        %v2183 = vadd.f32 %v1878, %v2182
        %v2184 = vpop.f32.mrb[0].mxu0
        %v2185 = vpop.f32.mrb[0].mxu0
        %v2186 = vadd.f32 %v1881, %v2185
        %v2187 = vpop.f32.mrb[0].mxu0
        %2188 = vmatprep.mubr.bf16.mxu0 %v1332
        %2189 = vmatmul.mubr.bf16.gmra.mrb[0].mxu0 %v1316
        %v2190 = vpop.f32.mrb[0].mxu0
        %v2191 = vadd.f32 %v1886, %v2190
        %v2192 = vpop.f32.mrb[0].mxu0
        %v2193 = vpop.f32.mrb[0].mxu0
        %v2194 = vadd.f32 %v1889, %v2193
        %v2195 = vpop.f32.mrb[0].mxu0
        %2196 = vmatprep.mubr.bf16.mxu0 %v1333
        %2197 = vmatmul.mubr.bf16.gmra.mrb[0].mxu0 %v1317
        %v2198 = vpop.f32.mrb[0].mxu0
        %v2199 = vadd.f32 %v1894, %v2198
        %v2200 = vpop.f32.mrb[0].mxu0
        %v2201 = vpop.f32.mrb[0].mxu0
        %v2202 = vadd.f32 %v1897, %v2201
        %v2203 = vpop.f32.mrb[0].mxu0
        %2204 = vmatprep.mubr.bf16.mxu0 %v1334
        %2205 = vmatmul.mubr.bf16.gmra.mrb[0].mxu0 %v1318
        %v2206 = vpop.f32.mrb[0].mxu0
        %v2207 = vadd.f32 %v1902, %v2206
        %v2208 = vpop.f32.mrb[0].mxu0
        %v2209 = vpop.f32.mrb[0].mxu0
        %v2210 = vadd.f32 %v1905, %v2209
        %v2211 = vpop.f32.mrb[0].mxu0
        %2212 = vmatprep.mubr.bf16.mxu0 %v1335
        %2213 = vmatmul.mubr.bf16.gmra.mrb[0].mxu0 %v1319
        %v2214 = vpop.f32.mrb[0].mxu0
        %v2215 = vadd.f32 %v1910, %v2214
        %v2216 = vpop.f32.mrb[0].mxu0
        %v2217 = vpop.f32.mrb[0].mxu0
        %v2218 = vadd.f32 %v1913, %v2217
        %v2219 = vpop.f32.mrb[0].mxu0
        %2220 = vdwg.mxu0
        %2221 = vmatprep.subr.bf16.mxu0 0
        %2222 = vmatpush1.bf16.msra.mxu0 %v2028
        %2223 = vmatprep.subr.bf16.mxu0 0
        %2224 = vmatpush1.bf16.msra.mxu0 %v2029
        %2225 = vmatprep.subr.bf16.mxu0 0
        %2226 = vmatpush1.bf16.msra.mxu0 %v2030
        %2227 = vmatprep.subr.bf16.mxu0 0
        %2228 = vmatpush1.bf16.msra.mxu0 %v2031
        %2229 = vmatprep.subr.bf16.mxu0 0
        %2230 = vmatpush1.bf16.msra.mxu0 %v2032
        %2231 = vmatprep.subr.bf16.mxu0 0
        %2232 = vmatpush1.bf16.msra.mxu0 %v2033
        %2233 = vmatprep.subr.bf16.mxu0 0
        %2234 = vmatpush1.bf16.msra.mxu0 %v2034
        %2235 = vmatprep.subr.bf16.mxu0 0
        %2236 = vmatpush1.bf16.msra.mxu0 %v2035
        %2237 = vmatprep.subr.bf16.mxu0 0
        %2238 = vmatpush1.bf16.msra.mxu0 0
        %2239 = vmatprep.subr.bf16.mxu0 0
        %2240 = vmatpush1.bf16.msra.mxu0 0
        %2241 = vmatprep.subr.bf16.mxu0 0
        %2242 = vmatpush1.bf16.msra.mxu0 0
        %2243 = vmatprep.subr.bf16.mxu0 0
        %2244 = vmatpush1.bf16.msra.mxu0 0
        %2245 = vmatprep.subr.bf16.mxu0 0
        %2246 = vmatpush1.bf16.msra.mxu0 0
        %2247 = vmatprep.subr.bf16.mxu0 0
        %2248 = vmatpush1.bf16.msra.mxu0 0
        %2249 = vmatprep.subr.bf16.mxu0 0
        %2250 = vmatpush1.bf16.msra.mxu0 0
        %2251 = vmatprep.subr.bf16.mxu0 0
        %2252 = vmatpush1.bf16.msra.mxu0 0
        %2253 = vmatprep.mubr.bf16.mxu0 0
        %2254 = vmatmul.mubr.bf16.gmra.mrb[0].mxu0 0
        %v2255 = vpop.f32.mrb[0].mxu0
        %v2256 = vadd.f32 %v2095, %v2255
        %v2257 = vpop.f32.mrb[0].mxu0
        %v2258 = vpop.f32.mrb[0].mxu0
        %v2259 = vadd.f32 %v2098, %v2258
        %v2260 = vpop.f32.mrb[0].mxu0
        %2261 = vmatprep.mubr.bf16.mxu0 0
        %2262 = vmatmul.mubr.bf16.gmra.mrb[0].mxu0 %v1337
        %v2263 = vpop.f32.mrb[0].mxu0
        %v2264 = vadd.f32 %v2103, %v2263
        %v2265 = vpop.f32.mrb[0].mxu0
        %v2266 = vpop.f32.mrb[0].mxu0
        %v2267 = vadd.f32 %v2106, %v2266
        %v2268 = vpop.f32.mrb[0].mxu0
        %2269 = vmatprep.mubr.bf16.mxu0 0
        %2270 = vmatmul.mubr.bf16.gmra.mrb[0].mxu0 %v1338
        %v2271 = vpop.f32.mrb[0].mxu0
        %v2272 = vadd.f32 %v2111, %v2271
        %v2273 = vpop.f32.mrb[0].mxu0
        %v2274 = vpop.f32.mrb[0].mxu0
        %v2275 = vadd.f32 %v2114, %v2274
        %v2276 = vpop.f32.mrb[0].mxu0
        %2277 = vmatprep.mubr.bf16.mxu0 0
        %2278 = vmatmul.mubr.bf16.gmra.mrb[0].mxu0 %v1339
        %v2279 = vpop.f32.mrb[0].mxu0
        %v2280 = vadd.f32 %v2119, %v2279
        %v2281 = vpop.f32.mrb[0].mxu0
        %v2282 = vpop.f32.mrb[0].mxu0
        %v2283 = vadd.f32 %v2122, %v2282
        %v2284 = vpop.f32.mrb[0].mxu0
        %2285 = vmatprep.mubr.bf16.mxu0 0
        %2286 = vmatmul.mubr.bf16.gmra.mrb[0].mxu0 %v1340
        %v2287 = vpop.f32.mrb[0].mxu0
        %v2288 = vadd.f32 %v2127, %v2287
        %v2289 = vpop.f32.mrb[0].mxu0
        %v2290 = vpop.f32.mrb[0].mxu0
        %v2291 = vadd.f32 %v2130, %v2290
        %v2292 = vpop.f32.mrb[0].mxu0
        %2293 = vmatprep.mubr.bf16.mxu0 0
        %2294 = vmatmul.mubr.bf16.gmra.mrb[0].mxu0 %v1341
        %v2295 = vpop.f32.mrb[0].mxu0
        %v2296 = vadd.f32 %v2135, %v2295
        %v2297 = vpop.f32.mrb[0].mxu0
        %v2298 = vpop.f32.mrb[0].mxu0
        %v2299 = vadd.f32 %v2138, %v2298
        %v2300 = vpop.f32.mrb[0].mxu0
        %2301 = vmatprep.mubr.bf16.mxu0 0
        %2302 = vmatmul.mubr.bf16.gmra.mrb[0].mxu0 %v1342
        %v2303 = vpop.f32.mrb[0].mxu0
        %v2304 = vadd.f32 %v2143, %v2303
        %v2305 = vpop.f32.mrb[0].mxu0
        %v2306 = vpop.f32.mrb[0].mxu0
        %v2307 = vadd.f32 %v2146, %v2306
        %v2308 = vpop.f32.mrb[0].mxu0
        %2309 = vmatprep.mubr.bf16.mxu0 0
        %2310 = vmatmul.mubr.bf16.gmra.mrb[0].mxu0 %v1343
        %v2311 = vpop.f32.mrb[0].mxu0
        %v2312 = vadd.f32 %v2151, %v2311
        %v2313 = vpop.f32.mrb[0].mxu0
        %v2314 = vpop.f32.mrb[0].mxu0
        %v2315 = vadd.f32 %v2154, %v2314
        %v2316 = vpop.f32.mrb[0].mxu0
        %2317 = vmatprep.mubr.bf16.mxu0 0
        %2318 = vmatmul.mubr.bf16.gmra.mrb[0].mxu0 %v1344
        %v2319 = vpop.f32.mrb[0].mxu0
        %v2320 = vadd.f32 %v2159, %v2319
        %v2321 = vpop.f32.mrb[0].mxu0
        %v2322 = vpop.f32.mrb[0].mxu0
        %v2323 = vadd.f32 %v2162, %v2322
        %v2324 = vpop.f32.mrb[0].mxu0
        %2325 = vmatprep.mubr.bf16.mxu0 0
        %2326 = vmatmul.mubr.bf16.gmra.mrb[0].mxu0 %v1345
        %v2327 = vpop.f32.mrb[0].mxu0
        %v2328 = vadd.f32 %v2167, %v2327
        %v2329 = vpop.f32.mrb[0].mxu0
        %v2330 = vpop.f32.mrb[0].mxu0
        %v2331 = vadd.f32 %v2170, %v2330
        %v2332 = vpop.f32.mrb[0].mxu0
        %2333 = vmatprep.mubr.bf16.mxu0 0
        %2334 = vmatmul.mubr.bf16.gmra.mrb[0].mxu0 %v1346
        %v2335 = vpop.f32.mrb[0].mxu0
        %v2336 = vadd.f32 %v2175, %v2335
        %v2337 = vpop.f32.mrb[0].mxu0
        %v2338 = vpop.f32.mrb[0].mxu0
        %v2339 = vadd.f32 %v2178, %v2338
        %v2340 = vpop.f32.mrb[0].mxu0
        %2341 = vmatprep.mubr.bf16.mxu0 0
        %2342 = vmatmul.mubr.bf16.gmra.mrb[0].mxu0 %v1347
        %v2343 = vpop.f32.mrb[0].mxu0
        %v2344 = vadd.f32 %v2183, %v2343
        %v2345 = vpop.f32.mrb[0].mxu0
        %v2346 = vpop.f32.mrb[0].mxu0
        %v2347 = vadd.f32 %v2186, %v2346
        %v2348 = vpop.f32.mrb[0].mxu0
        %2349 = vmatprep.mubr.bf16.mxu0 0
        %2350 = vmatmul.mubr.bf16.gmra.mrb[0].mxu0 %v1348
        %v2351 = vpop.f32.mrb[0].mxu0
        %v2352 = vadd.f32 %v2191, %v2351
        %v2353 = vpop.f32.mrb[0].mxu0
        %v2354 = vpop.f32.mrb[0].mxu0
        %v2355 = vadd.f32 %v2194, %v2354
        %v2356 = vpop.f32.mrb[0].mxu0
        %2357 = vmatprep.mubr.bf16.mxu0 0
        %2358 = vmatmul.mubr.bf16.gmra.mrb[0].mxu0 %v1349
        %v2359 = vpop.f32.mrb[0].mxu0
        %v2360 = vadd.f32 %v2199, %v2359
        %v2361 = vpop.f32.mrb[0].mxu0
        %v2362 = vpop.f32.mrb[0].mxu0
        %v2363 = vadd.f32 %v2202, %v2362
        %v2364 = vpop.f32.mrb[0].mxu0
        %2365 = vmatprep.mubr.bf16.mxu0 0
        %2366 = vmatmul.mubr.bf16.gmra.mrb[0].mxu0 %v1350
        %v2367 = vpop.f32.mrb[0].mxu0
        %v2368 = vadd.f32 %v2207, %v2367
        %v2369 = vpop.f32.mrb[0].mxu0
        %v2370 = vpop.f32.mrb[0].mxu0
        %v2371 = vadd.f32 %v2210, %v2370
        %v2372 = vpop.f32.mrb[0].mxu0
        %2373 = vmatprep.mubr.bf16.mxu0 0
        %2374 = vmatmul.mubr.bf16.gmra.mrb[0].mxu0 %v1351
        %v2375 = vpop.f32.mrb[0].mxu0
        %v2376 = vadd.f32 %v2215, %v2375
        %v2377 = vpop.f32.mrb[0].mxu0
        %v2378 = vpop.f32.mrb[0].mxu0
        %v2379 = vadd.f32 %v2218, %v2378
        %v2380 = vpop.f32.mrb[0].mxu0
        %2381 = vdwg.mxu0
        %s2382 = scalar_lea.vmem [#allocation5], 384
        %v2383 = vld [vmem:[%s2382] sm:$0xf]
        %v2384 = vld [vmem:[%s2382 + $0x4] sm:$0xf]
        %v2385 = vld [vmem:[%s2382 + $0x8] sm:$0xf]
        %v2386 = vld [vmem:[%s2382 + $0xc] sm:$0xf]
        %v2387 = vld [vmem:[%s2382 + $0x10] sm:$0xf]
        %v2388 = vld [vmem:[%s2382 + $0x14] sm:$0xf]
        %v2389 = vld [vmem:[%s2382 + $0x18] sm:$0xf]
        %v2390 = vld [vmem:[%s2382 + $0x1c] sm:$0xf]
        %v2391 = vld [vmem:[%s2382 + $0x20] sm:$0xf]
        %v2392 = vld [vmem:[%s2382 + $0x24] sm:$0xf]
        %v2393 = vld [vmem:[%s2382 + $0x28] sm:$0xf]
        %v2394 = vld [vmem:[%s2382 + $0x2c] sm:$0xf]
        %v2395 = vld [vmem:[%s2382 + $0x30] sm:$0xf]
        %v2396 = vld [vmem:[%s2382 + $0x34] sm:$0xf]
        %v2397 = vld [vmem:[%s2382 + $0x38] sm:$0xf]
        %v2398 = vld [vmem:[%s2382 + $0x3c] sm:$0xf]
        %v2399 = vld [vmem:[%s2382 + $0x40] sm:$0xf]
        %v2400 = vld [vmem:[%s2382 + $0x44] sm:$0xf]
        %v2401 = vld [vmem:[%s2382 + $0x48] sm:$0xf]
        %v2402 = vld [vmem:[%s2382 + $0x4c] sm:$0xf]
        %v2403 = vld [vmem:[%s2382 + $0x50] sm:$0xf]
        %v2404 = vld [vmem:[%s2382 + $0x54] sm:$0xf]
        %v2405 = vld [vmem:[%s2382 + $0x58] sm:$0xf]
        %v2406 = vld [vmem:[%s2382 + $0x5c] sm:$0xf]
        %v2407 = vld [vmem:[%s2382 + $0x60] sm:$0xf]
        %v2408 = vld [vmem:[%s2382 + $0x64] sm:$0xf]
        %v2409 = vld [vmem:[%s2382 + $0x68] sm:$0xf]
        %v2410 = vld [vmem:[%s2382 + $0x6c] sm:$0xf]
        %v2411 = vld [vmem:[%s2382 + $0x70] sm:$0xf]
        %v2412 = vld [vmem:[%s2382 + $0x74] sm:$0xf]
        %v2413 = vld [vmem:[%s2382 + $0x78] sm:$0xf]
        %v2414 = vld [vmem:[%s2382 + $0x7c] sm:$0xf]
        %v2415 = vld [vmem:[%s2382 + $0x80] sm:$0xf]
        %v2416 = vld [vmem:[%s2382 + $0x84] sm:$0xf]
        %v2417 = vld [vmem:[%s2382 + $0x88] sm:$0xf]
        %v2418 = vld [vmem:[%s2382 + $0x8c] sm:$0xf]
        %v2419 = vld [vmem:[%s2382 + $0x90] sm:$0xf]
        %v2420 = vld [vmem:[%s2382 + $0x94] sm:$0xf]
        %v2421 = vld [vmem:[%s2382 + $0x98] sm:$0xf]
        %v2422 = vld [vmem:[%s2382 + $0x9c] sm:$0xf]
        %v2423 = vld [vmem:[%s2382 + $0xa0] sm:$0xf]
        %v2424 = vld [vmem:[%s2382 + $0xa4] sm:$0xf]
        %v2425 = vld [vmem:[%s2382 + $0xa8] sm:$0xf]
        %v2426 = vld [vmem:[%s2382 + $0xac] sm:$0xf]
        %v2427 = vld [vmem:[%s2382 + $0xb0] sm:$0xf]
        %v2428 = vld [vmem:[%s2382 + $0xb4] sm:$0xf]
        %v2429 = vld [vmem:[%s2382 + $0xb8] sm:$0xf]
        %v2430 = vld [vmem:[%s2382 + $0xbc] sm:$0xf]
        %v2479 = vunpack.c.l.b16 %v2383
        %v2480 = vunpack.c.l.b16 %v2384
        %v2481 = vunpack.c.l.b16 %v2385
        %v2482 = vunpack.c.l.b16 %v2386
        %v2483 = vunpack.c.l.b16 %v2387
        %v2484 = vunpack.c.l.b16 %v2388
        %v2485 = vunpack.c.l.b16 %v2389
        %v2486 = vunpack.c.l.b16 %v2390
        %v2487 = vunpack.c.l.b16 %v2391
        %v2488 = vunpack.c.l.b16 %v2392
        %v2489 = vunpack.c.l.b16 %v2393
        %v2490 = vunpack.c.l.b16 %v2394
        %v2491 = vunpack.c.l.b16 %v2395
        %v2492 = vunpack.c.l.b16 %v2396
        %v2493 = vunpack.c.l.b16 %v2397
        %v2494 = vunpack.c.l.b16 %v2398
        %v2495 = vunpack.c.l.b16 %v2399
        %v2496 = vunpack.c.l.b16 %v2400
        %v2497 = vunpack.c.l.b16 %v2401
        %v2498 = vunpack.c.l.b16 %v2402
        %v2499 = vunpack.c.l.b16 %v2403
        %v2500 = vunpack.c.l.b16 %v2404
        %v2501 = vunpack.c.l.b16 %v2405
        %v2502 = vunpack.c.l.b16 %v2406
        %v2503 = vunpack.c.l.b16 %v2407
        %v2504 = vunpack.c.l.b16 %v2408
        %v2505 = vunpack.c.l.b16 %v2409
        %v2506 = vunpack.c.l.b16 %v2410
        %v2507 = vunpack.c.l.b16 %v2411
        %v2508 = vunpack.c.l.b16 %v2412
        %v2509 = vunpack.c.l.b16 %v2413
        %v2510 = vunpack.c.l.b16 %v2414
        %v2511 = vunpack.c.l.b16 %v2415
        %v2512 = vunpack.c.l.b16 %v2416
        %v2513 = vunpack.c.l.b16 %v2417
        %v2514 = vunpack.c.l.b16 %v2418
        %v2515 = vunpack.c.l.b16 %v2419
        %v2516 = vunpack.c.l.b16 %v2420
        %v2517 = vunpack.c.l.b16 %v2421
        %v2518 = vunpack.c.l.b16 %v2422
        %v2519 = vunpack.c.l.b16 %v2423
        %v2520 = vunpack.c.l.b16 %v2424
        %v2521 = vunpack.c.l.b16 %v2425
        %v2522 = vunpack.c.l.b16 %v2426
        %v2523 = vunpack.c.l.b16 %v2427
        %v2524 = vunpack.c.l.b16 %v2428
        %v2525 = vunpack.c.l.b16 %v2429
        %v2526 = vunpack.c.l.b16 %v2430
        %v2527 = vpack.c.b16 %v2480, %v2479
        %v2528 = vpack.c.b16 %v2482, %v2481
        %v2529 = vpack.c.b16 %v2484, %v2483
        %v2530 = vpack.c.b16 %v2486, %v2485
        %v2531 = vpack.c.b16 %v2488, %v2487
        %v2532 = vpack.c.b16 %v2490, %v2489
        %v2533 = vpack.c.b16 %v2492, %v2491
        %v2534 = vpack.c.b16 %v2494, %v2493
        %v2535 = vpack.c.b16 %v2496, %v2495
        %v2536 = vpack.c.b16 %v2498, %v2497
        %v2537 = vpack.c.b16 %v2500, %v2499
        %v2538 = vpack.c.b16 %v2502, %v2501
        %v2539 = vpack.c.b16 %v2504, %v2503
        %v2540 = vpack.c.b16 %v2506, %v2505
        %v2541 = vpack.c.b16 %v2508, %v2507
        %v2542 = vpack.c.b16 %v2510, %v2509
        %v2543 = vpack.c.b16 %v2512, %v2511
        %v2544 = vpack.c.b16 %v2514, %v2513
        %v2545 = vpack.c.b16 %v2516, %v2515
        %v2546 = vpack.c.b16 %v2518, %v2517
        %v2547 = vpack.c.b16 %v2520, %v2519
        %v2548 = vpack.c.b16 %v2522, %v2521
        %v2549 = vpack.c.b16 %v2524, %v2523
        %v2550 = vpack.c.b16 %v2526, %v2525
        %2575 = vmatprep.subr.bf16.mxu0 0
        %2576 = vmatpush1.bf16.msra.mxu0 %v2527
        %2577 = vmatprep.subr.bf16.mxu0 0
        %2578 = vmatpush1.bf16.msra.mxu0 %v2528
        %2579 = vmatprep.subr.bf16.mxu0 0
        %2580 = vmatpush1.bf16.msra.mxu0 %v2529
        %2581 = vmatprep.subr.bf16.mxu0 0
        %2582 = vmatpush1.bf16.msra.mxu0 %v2530
        %2583 = vmatprep.subr.bf16.mxu0 0
        %2584 = vmatpush1.bf16.msra.mxu0 %v2531
        %2585 = vmatprep.subr.bf16.mxu0 0
        %2586 = vmatpush1.bf16.msra.mxu0 %v2532
        %2587 = vmatprep.subr.bf16.mxu0 0
        %2588 = vmatpush1.bf16.msra.mxu0 %v2533
        %2589 = vmatprep.subr.bf16.mxu0 0
        %2590 = vmatpush1.bf16.msra.mxu0 %v2534
        %2591 = vmatprep.subr.bf16.mxu0 0
        %2592 = vmatpush1.bf16.msra.mxu0 %v2535
        %2593 = vmatprep.subr.bf16.mxu0 0
        %2594 = vmatpush1.bf16.msra.mxu0 %v2536
        %2595 = vmatprep.subr.bf16.mxu0 0
        %2596 = vmatpush1.bf16.msra.mxu0 %v2537
        %2597 = vmatprep.subr.bf16.mxu0 0
        %2598 = vmatpush1.bf16.msra.mxu0 %v2538
        %2599 = vmatprep.subr.bf16.mxu0 0
        %2600 = vmatpush1.bf16.msra.mxu0 %v2539
        %2601 = vmatprep.subr.bf16.mxu0 0
        %2602 = vmatpush1.bf16.msra.mxu0 %v2540
        %2603 = vmatprep.subr.bf16.mxu0 0
        %2604 = vmatpush1.bf16.msra.mxu0 %v2541
        %2605 = vmatprep.subr.bf16.mxu0 0
        %2606 = vmatpush1.bf16.msra.mxu0 %v2542
        %2607 = vmatprep.mubr.bf16.mxu0 %v1322
        %2608 = vmatmul.mubr.bf16.gmra.mrb[0].mxu0 %v1306
        %v2609 = vpop.f32.mrb[0].mxu0
        %v2610 = vadd.f32 0.0, %v2609
        %v2611 = vpop.f32.mrb[0].mxu0
        %v2612 = vpop.f32.mrb[0].mxu0
        %v2613 = vadd.f32 0.0, %v2612
        %v2614 = vpop.f32.mrb[0].mxu0
        %2615 = vmatprep.mubr.bf16.mxu0 %v1323
        %2616 = vmatmul.mubr.bf16.gmra.mrb[0].mxu0 %v1307
        %v2617 = vpop.f32.mrb[0].mxu0
        %v2618 = vadd.f32 0.0, %v2617
        %v2619 = vpop.f32.mrb[0].mxu0
        %v2620 = vpop.f32.mrb[0].mxu0
        %v2621 = vadd.f32 0.0, %v2620
        %v2622 = vpop.f32.mrb[0].mxu0
        %2623 = vmatprep.mubr.bf16.mxu0 %v1324
        %2624 = vmatmul.mubr.bf16.gmra.mrb[0].mxu0 %v1308
        %v2625 = vpop.f32.mrb[0].mxu0
        %v2626 = vadd.f32 0.0, %v2625
        %v2627 = vpop.f32.mrb[0].mxu0
        %v2628 = vpop.f32.mrb[0].mxu0
        %v2629 = vadd.f32 0.0, %v2628
        %v2630 = vpop.f32.mrb[0].mxu0
        %2631 = vmatprep.mubr.bf16.mxu0 %v1325
        %2632 = vmatmul.mubr.bf16.gmra.mrb[0].mxu0 %v1309
        %v2633 = vpop.f32.mrb[0].mxu0
        %v2634 = vadd.f32 0.0, %v2633
        %v2635 = vpop.f32.mrb[0].mxu0
        %v2636 = vpop.f32.mrb[0].mxu0
        %v2637 = vadd.f32 0.0, %v2636
        %v2638 = vpop.f32.mrb[0].mxu0
        %2639 = vmatprep.mubr.bf16.mxu0 %v1326
        %2640 = vmatmul.mubr.bf16.gmra.mrb[0].mxu0 %v1310
        %v2641 = vpop.f32.mrb[0].mxu0
        %v2642 = vadd.f32 0.0, %v2641
        %v2643 = vpop.f32.mrb[0].mxu0
        %v2644 = vpop.f32.mrb[0].mxu0
        %v2645 = vadd.f32 0.0, %v2644
        %v2646 = vpop.f32.mrb[0].mxu0
        %2647 = vmatprep.mubr.bf16.mxu0 %v1327
        %2648 = vmatmul.mubr.bf16.gmra.mrb[0].mxu0 %v1311
        %v2649 = vpop.f32.mrb[0].mxu0
        %v2650 = vadd.f32 0.0, %v2649
        %v2651 = vpop.f32.mrb[0].mxu0
        %v2652 = vpop.f32.mrb[0].mxu0
        %v2653 = vadd.f32 0.0, %v2652
        %v2654 = vpop.f32.mrb[0].mxu0
        %2655 = vmatprep.mubr.bf16.mxu0 %v1328
        %2656 = vmatmul.mubr.bf16.gmra.mrb[0].mxu0 %v1312
        %v2657 = vpop.f32.mrb[0].mxu0
        %v2658 = vadd.f32 0.0, %v2657
        %v2659 = vpop.f32.mrb[0].mxu0
        %v2660 = vpop.f32.mrb[0].mxu0
        %v2661 = vadd.f32 0.0, %v2660
        %v2662 = vpop.f32.mrb[0].mxu0
        %2663 = vmatprep.mubr.bf16.mxu0 %v1329
        %2664 = vmatmul.mubr.bf16.gmra.mrb[0].mxu0 %v1313
        %v2665 = vpop.f32.mrb[0].mxu0
        %v2666 = vadd.f32 0.0, %v2665
        %v2667 = vpop.f32.mrb[0].mxu0
        %v2668 = vpop.f32.mrb[0].mxu0
        %v2669 = vadd.f32 0.0, %v2668
        %v2670 = vpop.f32.mrb[0].mxu0
        %2671 = vmatprep.mubr.bf16.mxu0 %v1330
        %2672 = vmatmul.mubr.bf16.gmra.mrb[0].mxu0 %v1314
        %v2673 = vpop.f32.mrb[0].mxu0
        %v2674 = vadd.f32 0.0, %v2673
        %v2675 = vpop.f32.mrb[0].mxu0
        %v2676 = vpop.f32.mrb[0].mxu0
        %v2677 = vadd.f32 0.0, %v2676
        %v2678 = vpop.f32.mrb[0].mxu0
        %2679 = vmatprep.mubr.bf16.mxu0 %v1331
        %2680 = vmatmul.mubr.bf16.gmra.mrb[0].mxu0 %v1315
        %v2681 = vpop.f32.mrb[0].mxu0
        %v2682 = vadd.f32 0.0, %v2681
        %v2683 = vpop.f32.mrb[0].mxu0
        %v2684 = vpop.f32.mrb[0].mxu0
        %v2685 = vadd.f32 0.0, %v2684
        %v2686 = vpop.f32.mrb[0].mxu0
        %2687 = vmatprep.mubr.bf16.mxu0 %v1332
        %2688 = vmatmul.mubr.bf16.gmra.mrb[0].mxu0 %v1316
        %v2689 = vpop.f32.mrb[0].mxu0
        %v2690 = vadd.f32 0.0, %v2689
        %v2691 = vpop.f32.mrb[0].mxu0
        %v2692 = vpop.f32.mrb[0].mxu0
        %v2693 = vadd.f32 0.0, %v2692
        %v2694 = vpop.f32.mrb[0].mxu0
        %2695 = vmatprep.mubr.bf16.mxu0 %v1333
        %2696 = vmatmul.mubr.bf16.gmra.mrb[0].mxu0 %v1317
        %v2697 = vpop.f32.mrb[0].mxu0
        %v2698 = vadd.f32 0.0, %v2697
        %v2699 = vpop.f32.mrb[0].mxu0
        %v2700 = vpop.f32.mrb[0].mxu0
        %v2701 = vadd.f32 0.0, %v2700
        %v2702 = vpop.f32.mrb[0].mxu0
        %2703 = vmatprep.mubr.bf16.mxu0 %v1334
        %2704 = vmatmul.mubr.bf16.gmra.mrb[0].mxu0 %v1318
        %v2705 = vpop.f32.mrb[0].mxu0
        %v2706 = vadd.f32 0.0, %v2705
        %v2707 = vpop.f32.mrb[0].mxu0
        %v2708 = vpop.f32.mrb[0].mxu0
        %v2709 = vadd.f32 0.0, %v2708
        %v2710 = vpop.f32.mrb[0].mxu0
        %2711 = vmatprep.mubr.bf16.mxu0 %v1335
        %2712 = vmatmul.mubr.bf16.gmra.mrb[0].mxu0 %v1319
        %v2713 = vpop.f32.mrb[0].mxu0
        %v2714 = vadd.f32 0.0, %v2713
        %v2715 = vpop.f32.mrb[0].mxu0
        %v2716 = vpop.f32.mrb[0].mxu0
        %v2717 = vadd.f32 0.0, %v2716
        %v2718 = vpop.f32.mrb[0].mxu0
        %2719 = vmatprep.mubr.bf16.mxu0 %v1336
        %2720 = vmatmul.mubr.bf16.gmra.mrb[0].mxu0 %v1320
        %v2721 = vpop.f32.mrb[0].mxu0
        %v2722 = vadd.f32 0.0, %v2721
        %v2723 = vpop.f32.mrb[0].mxu0
        %v2724 = vpop.f32.mrb[0].mxu0
        %v2725 = vadd.f32 0.0, %v2724
        %v2726 = vpop.f32.mrb[0].mxu0
        %2727 = vmatprep.mubr.bf16.mxu0 0
        %2728 = vmatmul.mubr.bf16.gmra.mrb[0].mxu0 0
        %v2729 = vpop.f32.mrb[0].mxu0
        %v2730 = vadd.f32 0.0, %v2729
        %v2731 = vpop.f32.mrb[0].mxu0
        %v2732 = vpop.f32.mrb[0].mxu0
        %v2733 = vadd.f32 0.0, %v2732
        %v2734 = vpop.f32.mrb[0].mxu0
        %2735 = vdwg.mxu0
        %2736 = vmatprep.subr.bf16.mxu0 0
        %2737 = vmatpush1.bf16.msra.mxu0 %v2543
        %2738 = vmatprep.subr.bf16.mxu0 0
        %2739 = vmatpush1.bf16.msra.mxu0 %v2544
        %2740 = vmatprep.subr.bf16.mxu0 0
        %2741 = vmatpush1.bf16.msra.mxu0 %v2545
        %2742 = vmatprep.subr.bf16.mxu0 0
        %2743 = vmatpush1.bf16.msra.mxu0 %v2546
        %2744 = vmatprep.subr.bf16.mxu0 0
        %2745 = vmatpush1.bf16.msra.mxu0 %v2547
        %2746 = vmatprep.subr.bf16.mxu0 0
        %2747 = vmatpush1.bf16.msra.mxu0 %v2548
        %2748 = vmatprep.subr.bf16.mxu0 0
        %2749 = vmatpush1.bf16.msra.mxu0 %v2549
        %2750 = vmatprep.subr.bf16.mxu0 0
        %2751 = vmatpush1.bf16.msra.mxu0 %v2550
        %2752 = vmatprep.subr.bf16.mxu0 0
        %2753 = vmatpush1.bf16.msra.mxu0 0
        %2754 = vmatprep.subr.bf16.mxu0 0
        %2755 = vmatpush1.bf16.msra.mxu0 0
        %2756 = vmatprep.subr.bf16.mxu0 0
        %2757 = vmatpush1.bf16.msra.mxu0 0
        %2758 = vmatprep.subr.bf16.mxu0 0
        %2759 = vmatpush1.bf16.msra.mxu0 0
        %2760 = vmatprep.subr.bf16.mxu0 0
        %2761 = vmatpush1.bf16.msra.mxu0 0
        %2762 = vmatprep.subr.bf16.mxu0 0
        %2763 = vmatpush1.bf16.msra.mxu0 0
        %2764 = vmatprep.subr.bf16.mxu0 0
        %2765 = vmatpush1.bf16.msra.mxu0 0
        %2766 = vmatprep.subr.bf16.mxu0 0
        %2767 = vmatpush1.bf16.msra.mxu0 0
        %2768 = vmatprep.mubr.bf16.mxu0 0
        %2769 = vmatmul.mubr.bf16.gmra.mrb[0].mxu0 %v1338
        %v2770 = vpop.f32.mrb[0].mxu0
        %v2771 = vadd.f32 %v2610, %v2770
        %v2772 = vpop.f32.mrb[0].mxu0
        %v2773 = vpop.f32.mrb[0].mxu0
        %v2774 = vadd.f32 %v2613, %v2773
        %v2775 = vpop.f32.mrb[0].mxu0
        %2776 = vmatprep.mubr.bf16.mxu0 0
        %2777 = vmatmul.mubr.bf16.gmra.mrb[0].mxu0 %v1339
        %v2778 = vpop.f32.mrb[0].mxu0
        %v2779 = vadd.f32 %v2618, %v2778
        %v2780 = vpop.f32.mrb[0].mxu0
        %v2781 = vpop.f32.mrb[0].mxu0
        %v2782 = vadd.f32 %v2621, %v2781
        %v2783 = vpop.f32.mrb[0].mxu0
        %2784 = vmatprep.mubr.bf16.mxu0 0
        %2785 = vmatmul.mubr.bf16.gmra.mrb[0].mxu0 %v1340
        %v2786 = vpop.f32.mrb[0].mxu0
        %v2787 = vadd.f32 %v2626, %v2786
        %v2788 = vpop.f32.mrb[0].mxu0
        %v2789 = vpop.f32.mrb[0].mxu0
        %v2790 = vadd.f32 %v2629, %v2789
        %v2791 = vpop.f32.mrb[0].mxu0
        %2792 = vmatprep.mubr.bf16.mxu0 0
        %2793 = vmatmul.mubr.bf16.gmra.mrb[0].mxu0 %v1341
        %v2794 = vpop.f32.mrb[0].mxu0
        %v2795 = vadd.f32 %v2634, %v2794
        %v2796 = vpop.f32.mrb[0].mxu0
        %v2797 = vpop.f32.mrb[0].mxu0
        %v2798 = vadd.f32 %v2637, %v2797
        %v2799 = vpop.f32.mrb[0].mxu0
        %2800 = vmatprep.mubr.bf16.mxu0 0
        %2801 = vmatmul.mubr.bf16.gmra.mrb[0].mxu0 %v1342
        %v2802 = vpop.f32.mrb[0].mxu0
        %v2803 = vadd.f32 %v2642, %v2802
        %v2804 = vpop.f32.mrb[0].mxu0
        %v2805 = vpop.f32.mrb[0].mxu0
        %v2806 = vadd.f32 %v2645, %v2805
        %v2807 = vpop.f32.mrb[0].mxu0
        %2808 = vmatprep.mubr.bf16.mxu0 0
        %2809 = vmatmul.mubr.bf16.gmra.mrb[0].mxu0 %v1343
        %v2810 = vpop.f32.mrb[0].mxu0
        %v2811 = vadd.f32 %v2650, %v2810
        %v2812 = vpop.f32.mrb[0].mxu0
        %v2813 = vpop.f32.mrb[0].mxu0
        %v2814 = vadd.f32 %v2653, %v2813
        %v2815 = vpop.f32.mrb[0].mxu0
        %2816 = vmatprep.mubr.bf16.mxu0 0
        %2817 = vmatmul.mubr.bf16.gmra.mrb[0].mxu0 %v1344
        %v2818 = vpop.f32.mrb[0].mxu0
        %v2819 = vadd.f32 %v2658, %v2818
        %v2820 = vpop.f32.mrb[0].mxu0
        %v2821 = vpop.f32.mrb[0].mxu0
        %v2822 = vadd.f32 %v2661, %v2821
        %v2823 = vpop.f32.mrb[0].mxu0
        %2824 = vmatprep.mubr.bf16.mxu0 0
        %2825 = vmatmul.mubr.bf16.gmra.mrb[0].mxu0 %v1345
        %v2826 = vpop.f32.mrb[0].mxu0
        %v2827 = vadd.f32 %v2666, %v2826
        %v2828 = vpop.f32.mrb[0].mxu0
        %v2829 = vpop.f32.mrb[0].mxu0
        %v2830 = vadd.f32 %v2669, %v2829
        %v2831 = vpop.f32.mrb[0].mxu0
        %2832 = vmatprep.mubr.bf16.mxu0 0
        %2833 = vmatmul.mubr.bf16.gmra.mrb[0].mxu0 %v1346
        %v2834 = vpop.f32.mrb[0].mxu0
        %v2835 = vadd.f32 %v2674, %v2834
        %v2836 = vpop.f32.mrb[0].mxu0
        %v2837 = vpop.f32.mrb[0].mxu0
        %v2838 = vadd.f32 %v2677, %v2837
        %v2839 = vpop.f32.mrb[0].mxu0
        %2840 = vmatprep.mubr.bf16.mxu0 0
        %2841 = vmatmul.mubr.bf16.gmra.mrb[0].mxu0 %v1347
        %v2842 = vpop.f32.mrb[0].mxu0
        %v2843 = vadd.f32 %v2682, %v2842
        %v2844 = vpop.f32.mrb[0].mxu0
        %v2845 = vpop.f32.mrb[0].mxu0
        %v2846 = vadd.f32 %v2685, %v2845
        %v2847 = vpop.f32.mrb[0].mxu0
        %2848 = vmatprep.mubr.bf16.mxu0 0
        %2849 = vmatmul.mubr.bf16.gmra.mrb[0].mxu0 %v1348
        %v2850 = vpop.f32.mrb[0].mxu0
        %v2851 = vadd.f32 %v2690, %v2850
        %v2852 = vpop.f32.mrb[0].mxu0
        %v2853 = vpop.f32.mrb[0].mxu0
        %v2854 = vadd.f32 %v2693, %v2853
        %v2855 = vpop.f32.mrb[0].mxu0
        %2856 = vmatprep.mubr.bf16.mxu0 0
        %2857 = vmatmul.mubr.bf16.gmra.mrb[0].mxu0 %v1349
        %v2858 = vpop.f32.mrb[0].mxu0
        %v2859 = vadd.f32 %v2698, %v2858
        %v2860 = vpop.f32.mrb[0].mxu0
        %v2861 = vpop.f32.mrb[0].mxu0
        %v2862 = vadd.f32 %v2701, %v2861
        %v2863 = vpop.f32.mrb[0].mxu0
        %2864 = vmatprep.mubr.bf16.mxu0 0
        %2865 = vmatmul.mubr.bf16.gmra.mrb[0].mxu0 %v1350
        %v2866 = vpop.f32.mrb[0].mxu0
        %v2867 = vadd.f32 %v2706, %v2866
        %v2868 = vpop.f32.mrb[0].mxu0
        %v2869 = vpop.f32.mrb[0].mxu0
        %v2870 = vadd.f32 %v2709, %v2869
        %v2871 = vpop.f32.mrb[0].mxu0
        %2872 = vmatprep.mubr.bf16.mxu0 0
        %2873 = vmatmul.mubr.bf16.gmra.mrb[0].mxu0 %v1351
        %v2874 = vpop.f32.mrb[0].mxu0
        %v2875 = vadd.f32 %v2714, %v2874
        %v2876 = vpop.f32.mrb[0].mxu0
        %v2877 = vpop.f32.mrb[0].mxu0
        %v2878 = vadd.f32 %v2717, %v2877
        %v2879 = vpop.f32.mrb[0].mxu0
        %2880 = vmatprep.mubr.bf16.mxu0 0
        %2881 = vmatmul.mubr.bf16.gmra.mrb[0].mxu0 %v1352
        %v2882 = vpop.f32.mrb[0].mxu0
        %v2883 = vadd.f32 %v2722, %v2882
        %v2884 = vpop.f32.mrb[0].mxu0
        %v2885 = vpop.f32.mrb[0].mxu0
        %v2886 = vadd.f32 %v2725, %v2885
        %v2887 = vpop.f32.mrb[0].mxu0
        %2888 = vmatprep.mubr.bf16.mxu0 0
        %2889 = vmatmul.mubr.bf16.gmra.mrb[0].mxu0 0
        %v2890 = vpop.f32.mrb[0].mxu0
        %v2891 = vadd.f32 %v2730, %v2890
        %v2892 = vpop.f32.mrb[0].mxu0
        %v2893 = vpop.f32.mrb[0].mxu0
        %v2894 = vadd.f32 %v2733, %v2893
        %v2895 = vpop.f32.mrb[0].mxu0
        %2896 = vdwg.mxu0
        %v2897 = vadd.f32 %v2256, %v2771
        %v2898 = vadd.f32 %v2259, %v2774
        %v2899 = vadd.f32 %v2264, %v2779
        %v2900 = vadd.f32 %v2267, %v2782
        %v2901 = vadd.f32 %v2272, %v2787
        %v2902 = vadd.f32 %v2275, %v2790
        %v2903 = vadd.f32 %v2280, %v2795
        %v2904 = vadd.f32 %v2283, %v2798
        %v2905 = vadd.f32 %v2288, %v2803
        %v2906 = vadd.f32 %v2291, %v2806
        %v2907 = vadd.f32 %v2296, %v2811
        %v2908 = vadd.f32 %v2299, %v2814
        %v2909 = vadd.f32 %v2304, %v2819
        %v2910 = vadd.f32 %v2307, %v2822
        %v2911 = vadd.f32 %v2312, %v2827
        %v2912 = vadd.f32 %v2315, %v2830
        %v2913 = vadd.f32 %v2320, %v2835
        %v2914 = vadd.f32 %v2323, %v2838
        %v2915 = vadd.f32 %v2328, %v2843
        %v2916 = vadd.f32 %v2331, %v2846
        %v2917 = vadd.f32 %v2336, %v2851
        %v2918 = vadd.f32 %v2339, %v2854
        %v2919 = vadd.f32 %v2344, %v2859
        %v2920 = vadd.f32 %v2347, %v2862
        %v2921 = vadd.f32 %v2352, %v2867
        %v2922 = vadd.f32 %v2355, %v2870
        %v2923 = vadd.f32 %v2360, %v2875
        %v2924 = vadd.f32 %v2363, %v2878
        %v2925 = vadd.f32 %v2368, %v2883
        %v2926 = vadd.f32 %v2371, %v2886
        %v2927 = vadd.f32 %v2376, %v2891
        %v2928 = vadd.f32 %v2379, %v2894
        %v2929 = vld [vmem:[%s2] sm:$0x1]
        %v2931 = vlaneseq
        %v2932 = vshrl.u32 %v2931, 7
        %v2933 = vsub.s32 0, %v2932
        %v2934 = vrot.slane %v2929, %v2933
        %v2936 = vadd.f32 %v2897, %v2934
        %v2937 = vadd.f32 %v2898, %v2934
        %v2938 = vadd.f32 %v2899, %v2934
        %v2939 = vadd.f32 %v2900, %v2934
        %v2940 = vadd.f32 %v2901, %v2934
        %v2941 = vadd.f32 %v2902, %v2934
        %v2942 = vadd.f32 %v2903, %v2934
        %v2943 = vadd.f32 %v2904, %v2934
        %v2944 = vadd.f32 %v2905, %v2934
        %v2945 = vadd.f32 %v2906, %v2934
        %v2946 = vadd.f32 %v2907, %v2934
        %v2947 = vadd.f32 %v2908, %v2934
        %v2948 = vadd.f32 %v2909, %v2934
        %v2949 = vadd.f32 %v2910, %v2934
        %v2950 = vadd.f32 %v2911, %v2934
        %v2951 = vadd.f32 %v2912, %v2934
        %v2952 = vadd.f32 %v2913, %v2934
        %v2953 = vadd.f32 %v2914, %v2934
        %v2954 = vadd.f32 %v2915, %v2934
        %v2955 = vadd.f32 %v2916, %v2934
        %v2956 = vadd.f32 %v2917, %v2934
        %v2957 = vadd.f32 %v2918, %v2934
        %v2958 = vadd.f32 %v2919, %v2934
        %v2959 = vadd.f32 %v2920, %v2934
        %v2960 = vadd.f32 %v2921, %v2934
        %v2961 = vadd.f32 %v2922, %v2934
        %v2962 = vadd.f32 %v2923, %v2934
        %v2963 = vadd.f32 %v2924, %v2934
        %v2964 = vadd.f32 %v2925, %v2934
        %v2965 = vadd.f32 %v2926, %v2934
        %v2966 = vadd.f32 %v2927, %v2934
        %v2967 = vadd.f32 %v2928, %v2934
        %v2968 = vmax.f32 %v2936, 0.0
        %v2969 = vmax.f32 %v2937, 0.0
        %v2970 = vmax.f32 %v2938, 0.0
        %v2971 = vmax.f32 %v2939, 0.0
        %v2972 = vmax.f32 %v2940, 0.0
        %v2973 = vmax.f32 %v2941, 0.0
        %v2974 = vmax.f32 %v2942, 0.0
        %v2975 = vmax.f32 %v2943, 0.0
        %v2976 = vmax.f32 %v2944, 0.0
        %v2977 = vmax.f32 %v2945, 0.0
        %v2978 = vmax.f32 %v2946, 0.0
        %v2979 = vmax.f32 %v2947, 0.0
        %v2980 = vmax.f32 %v2948, 0.0
        %v2981 = vmax.f32 %v2949, 0.0
        %v2982 = vmax.f32 %v2950, 0.0
        %v2983 = vmax.f32 %v2951, 0.0
        %v2984 = vmax.f32 %v2952, 0.0
        %v2985 = vmax.f32 %v2953, 0.0
        %v2986 = vmax.f32 %v2954, 0.0
        %v2987 = vmax.f32 %v2955, 0.0
        %v2988 = vmax.f32 %v2956, 0.0
        %v2989 = vmax.f32 %v2957, 0.0
        %v2990 = vmax.f32 %v2958, 0.0
        %v2991 = vmax.f32 %v2959, 0.0
        %v2992 = vmax.f32 %v2960, 0.0
        %v2993 = vmax.f32 %v2961, 0.0
        %v2994 = vmax.f32 %v2962, 0.0
        %v2995 = vmax.f32 %v2963, 0.0
        %v2996 = vmax.f32 %v2964, 0.0
        %v2997 = vmax.f32 %v2965, 0.0
        %v2998 = vmax.f32 %v2966, 0.0
        %v2999 = vmax.f32 %v2967, 0.0
        %v3032 = vrot.slane %v2968, 7
        %v3033 = vrot.slane %v2969, 7
        %v3034 = vsel %vm919, %v3032, %v3033
        %v3035 = vrot.slane %v2970, 7
        %v3036 = vsel %vm919, %v3033, %v3035
        %v3037 = vrot.slane %v2971, 7
        %v3038 = vsel %vm919, %v3035, %v3037
        %v3039 = vrot.slane %v2972, 7
        %v3040 = vsel %vm919, %v3037, %v3039
        %v3041 = vrot.slane %v2973, 7
        %v3042 = vsel %vm919, %v3039, %v3041
        %v3043 = vrot.slane %v2974, 7
        %v3044 = vsel %vm919, %v3041, %v3043
        %v3045 = vrot.slane %v2975, 7
        %v3046 = vsel %vm919, %v3043, %v3045
        %v3047 = vrot.slane %v2976, 7
        %v3048 = vsel %vm919, %v3045, %v3047
        %v3049 = vrot.slane %v2977, 7
        %v3050 = vsel %vm919, %v3047, %v3049
        %v3051 = vrot.slane %v2978, 7
        %v3052 = vsel %vm919, %v3049, %v3051
        %v3053 = vrot.slane %v2979, 7
        %v3054 = vsel %vm919, %v3051, %v3053
        %v3055 = vrot.slane %v2980, 7
        %v3056 = vsel %vm919, %v3053, %v3055
        %v3057 = vrot.slane %v2981, 7
        %v3058 = vsel %vm919, %v3055, %v3057
        %v3059 = vrot.slane %v2982, 7
        %v3060 = vsel %vm919, %v3057, %v3059
        %v3061 = vrot.slane %v2983, 7
        %v3062 = vsel %vm919, %v3059, %v3061
        %v3063 = vrot.slane %v2984, 7
        %v3064 = vsel %vm919, %v3061, %v3063
        %v3065 = vrot.slane %v2985, 7
        %v3066 = vsel %vm919, %v3063, %v3065
        %v3067 = vrot.slane %v2986, 7
        %v3068 = vsel %vm919, %v3065, %v3067
        %v3069 = vrot.slane %v2987, 7
        %v3070 = vsel %vm919, %v3067, %v3069
        %v3071 = vrot.slane %v2988, 7
        %v3072 = vsel %vm919, %v3069, %v3071
        %v3073 = vrot.slane %v2989, 7
        %v3074 = vsel %vm919, %v3071, %v3073
        %v3075 = vrot.slane %v2990, 7
        %v3076 = vsel %vm919, %v3073, %v3075
        %v3077 = vrot.slane %v2991, 7
        %v3078 = vsel %vm919, %v3075, %v3077
        %v3079 = vrot.slane %v2992, 7
        %v3080 = vsel %vm919, %v3077, %v3079
        %v3081 = vrot.slane %v2993, 7
        %v3082 = vsel %vm919, %v3079, %v3081
        %v3083 = vrot.slane %v2994, 7
        %v3084 = vsel %vm919, %v3081, %v3083
        %v3085 = vrot.slane %v2995, 7
        %v3086 = vsel %vm919, %v3083, %v3085
        %v3087 = vrot.slane %v2996, 7
        %v3088 = vsel %vm919, %v3085, %v3087
        %v3089 = vrot.slane %v2997, 7
        %v3090 = vsel %vm919, %v3087, %v3089
        %v3091 = vrot.slane %v2998, 7
        %v3092 = vsel %vm919, %v3089, %v3091
        %v3093 = vrot.slane %v2999, 7
        %v3094 = vsel %vm919, %v3091, %v3093
        %v3127 = vsel %vm919, 0.0, %v3032
        %v3128 = vsel %vm1048, %v3127, 0.0
        %v3129 = vsel %vm1049, %v3034, 0.0
        %v3130 = vsel %vm1050, %v3036, 0.0
        %v3131 = vsel %vm1051, %v3038, 0.0
        %v3132 = vsel %vm1052, %v3040, 0.0
        %v3133 = vsel %vm1053, %v3042, 0.0
        %v3134 = vsel %vm1054, %v3044, 0.0
        %v3135 = vsel %vm1055, %v3046, 0.0
        %v3136 = vsel %vm1056, %v3048, 0.0
        %v3137 = vsel %vm1057, %v3050, 0.0
        %v3138 = vsel %vm1058, %v3052, 0.0
        %v3139 = vsel %vm1059, %v3054, 0.0
        %v3140 = vsel %vm1060, %v3056, 0.0
        %v3141 = vsel %vm1061, %v3058, 0.0
        %v3142 = vsel %vm1062, %v3060, 0.0
        %v3143 = vsel %vm1063, %v3062, 0.0
        %v3144 = vsel %vm1064, %v3064, 0.0
        %v3145 = vsel %vm1065, %v3066, 0.0
        %v3146 = vsel %vm1066, %v3068, 0.0
        %v3147 = vsel %vm1067, %v3070, 0.0
        %v3148 = vsel %vm1068, %v3072, 0.0
        %v3149 = vsel %vm1069, %v3074, 0.0
        %v3150 = vsel %vm1070, %v3076, 0.0
        %v3151 = vsel %vm1071, %v3078, 0.0
        %v3152 = vsel %vm1072, %v3080, 0.0
        %v3153 = vsel %vm1073, %v3082, 0.0
        %v3154 = vsel %vm1074, %v3084, 0.0
        %v3155 = vsel %vm1075, %v3086, 0.0
        %v3156 = vsel %vm1076, %v3088, 0.0
        %v3157 = vsel %vm1077, %v3090, 0.0
        %v3158 = vsel %vm1078, %v3092, 0.0
        %v3159 = vsel %vm1079, %v3094, 0.0
        %v3160 = vrot.slane %v2968, 1
        %v3161 = vrot.slane %v2969, 1
        %v3162 = vsel %vm1112, %v3160, %v3161
        %v3163 = vrot.slane %v2970, 1
        %v3164 = vsel %vm1112, %v3161, %v3163
        %v3165 = vrot.slane %v2971, 1
        %v3166 = vsel %vm1112, %v3163, %v3165
        %v3167 = vrot.slane %v2972, 1
        %v3168 = vsel %vm1112, %v3165, %v3167
        %v3169 = vrot.slane %v2973, 1
        %v3170 = vsel %vm1112, %v3167, %v3169
        %v3171 = vrot.slane %v2974, 1
        %v3172 = vsel %vm1112, %v3169, %v3171
        %v3173 = vrot.slane %v2975, 1
        %v3174 = vsel %vm1112, %v3171, %v3173
        %v3175 = vrot.slane %v2976, 1
        %v3176 = vsel %vm1112, %v3173, %v3175
        %v3177 = vrot.slane %v2977, 1
        %v3178 = vsel %vm1112, %v3175, %v3177
        %v3179 = vrot.slane %v2978, 1
        %v3180 = vsel %vm1112, %v3177, %v3179
        %v3181 = vrot.slane %v2979, 1
        %v3182 = vsel %vm1112, %v3179, %v3181
        %v3183 = vrot.slane %v2980, 1
        %v3184 = vsel %vm1112, %v3181, %v3183
        %v3185 = vrot.slane %v2981, 1
        %v3186 = vsel %vm1112, %v3183, %v3185
        %v3187 = vrot.slane %v2982, 1
        %v3188 = vsel %vm1112, %v3185, %v3187
        %v3189 = vrot.slane %v2983, 1
        %v3190 = vsel %vm1112, %v3187, %v3189
        %v3191 = vrot.slane %v2984, 1
        %v3192 = vsel %vm1112, %v3189, %v3191
        %v3193 = vrot.slane %v2985, 1
        %v3194 = vsel %vm1112, %v3191, %v3193
        %v3195 = vrot.slane %v2986, 1
        %v3196 = vsel %vm1112, %v3193, %v3195
        %v3197 = vrot.slane %v2987, 1
        %v3198 = vsel %vm1112, %v3195, %v3197
        %v3199 = vrot.slane %v2988, 1
        %v3200 = vsel %vm1112, %v3197, %v3199
        %v3201 = vrot.slane %v2989, 1
        %v3202 = vsel %vm1112, %v3199, %v3201
        %v3203 = vrot.slane %v2990, 1
        %v3204 = vsel %vm1112, %v3201, %v3203
        %v3205 = vrot.slane %v2991, 1
        %v3206 = vsel %vm1112, %v3203, %v3205
        %v3207 = vrot.slane %v2992, 1
        %v3208 = vsel %vm1112, %v3205, %v3207
        %v3209 = vrot.slane %v2993, 1
        %v3210 = vsel %vm1112, %v3207, %v3209
        %v3211 = vrot.slane %v2994, 1
        %v3212 = vsel %vm1112, %v3209, %v3211
        %v3213 = vrot.slane %v2995, 1
        %v3214 = vsel %vm1112, %v3211, %v3213
        %v3215 = vrot.slane %v2996, 1
        %v3216 = vsel %vm1112, %v3213, %v3215
        %v3217 = vrot.slane %v2997, 1
        %v3218 = vsel %vm1112, %v3215, %v3217
        %v3219 = vrot.slane %v2998, 1
        %v3220 = vsel %vm1112, %v3217, %v3219
        %v3221 = vrot.slane %v2999, 1
        %v3222 = vsel %vm1112, %v3219, %v3221
        %v3255 = vsel %vm1112, %v3221, 0.0
        %v3256 = vsel %vm1241, %v3162, 0.0
        %v3257 = vsel %vm1242, %v3164, 0.0
        %v3258 = vsel %vm1243, %v3166, 0.0
        %v3259 = vsel %vm1244, %v3168, 0.0
        %v3260 = vsel %vm1245, %v3170, 0.0
        %v3261 = vsel %vm1246, %v3172, 0.0
        %v3262 = vsel %vm1247, %v3174, 0.0
        %v3263 = vsel %vm1248, %v3176, 0.0
        %v3264 = vsel %vm1249, %v3178, 0.0
        %v3265 = vsel %vm1250, %v3180, 0.0
        %v3266 = vsel %vm1251, %v3182, 0.0
        %v3267 = vsel %vm1252, %v3184, 0.0
        %v3268 = vsel %vm1253, %v3186, 0.0
        %v3269 = vsel %vm1254, %v3188, 0.0
        %v3270 = vsel %vm1255, %v3190, 0.0
        %v3271 = vsel %vm1256, %v3192, 0.0
        %v3272 = vsel %vm1257, %v3194, 0.0
        %v3273 = vsel %vm1258, %v3196, 0.0
        %v3274 = vsel %vm1259, %v3198, 0.0
        %v3275 = vsel %vm1260, %v3200, 0.0
        %v3276 = vsel %vm1261, %v3202, 0.0
        %v3277 = vsel %vm1262, %v3204, 0.0
        %v3278 = vsel %vm1263, %v3206, 0.0
        %v3279 = vsel %vm1264, %v3208, 0.0
        %v3280 = vsel %vm1265, %v3210, 0.0
        %v3281 = vsel %vm1266, %v3212, 0.0
        %v3282 = vsel %vm1267, %v3214, 0.0
        %v3283 = vsel %vm1268, %v3216, 0.0
        %v3284 = vsel %vm1269, %v3218, 0.0
        %v3285 = vsel %vm1270, %v3220, 0.0
        %v3286 = vsel %vm1271, %v3222, 0.0
        %v3287 = vsel %vm1272, %v3255, 0.0
        %v3288 = vpack.c.bf16 %v3129, %v3128
        %v3289 = vpack.c.bf16 %v3131, %v3130
        %v3290 = vpack.c.bf16 %v3133, %v3132
        %v3291 = vpack.c.bf16 %v3135, %v3134
        %v3292 = vpack.c.bf16 %v3137, %v3136
        %v3293 = vpack.c.bf16 %v3139, %v3138
        %v3294 = vpack.c.bf16 %v3141, %v3140
        %v3295 = vpack.c.bf16 %v3143, %v3142
        %v3296 = vpack.c.bf16 %v3145, %v3144
        %v3297 = vpack.c.bf16 %v3147, %v3146
        %v3298 = vpack.c.bf16 %v3149, %v3148
        %v3299 = vpack.c.bf16 %v3151, %v3150
        %v3300 = vpack.c.bf16 %v3153, %v3152
        %v3301 = vpack.c.bf16 %v3155, %v3154
        %v3302 = vpack.c.bf16 %v3157, %v3156
        %v3303 = vpack.c.bf16 %v3159, %v3158
        %v3304 = vpack.c.bf16 %v2969, %v2968
        %v3305 = vpack.c.bf16 %v2971, %v2970
        %v3306 = vpack.c.bf16 %v2973, %v2972
        %v3307 = vpack.c.bf16 %v2975, %v2974
        %v3308 = vpack.c.bf16 %v2977, %v2976
        %v3309 = vpack.c.bf16 %v2979, %v2978
        %v3310 = vpack.c.bf16 %v2981, %v2980
        %v3311 = vpack.c.bf16 %v2983, %v2982
        %v3312 = vpack.c.bf16 %v2985, %v2984
        %v3313 = vpack.c.bf16 %v2987, %v2986
        %v3314 = vpack.c.bf16 %v2989, %v2988
        %v3315 = vpack.c.bf16 %v2991, %v2990
        %v3316 = vpack.c.bf16 %v2993, %v2992
        %v3317 = vpack.c.bf16 %v2995, %v2994
        %v3318 = vpack.c.bf16 %v2997, %v2996
        %v3319 = vpack.c.bf16 %v2999, %v2998
        %v3320 = vpack.c.bf16 %v3257, %v3256
        %v3321 = vpack.c.bf16 %v3259, %v3258
        %v3322 = vpack.c.bf16 %v3261, %v3260
        %v3323 = vpack.c.bf16 %v3263, %v3262
        %v3324 = vpack.c.bf16 %v3265, %v3264
        %v3325 = vpack.c.bf16 %v3267, %v3266
        %v3326 = vpack.c.bf16 %v3269, %v3268
        %v3327 = vpack.c.bf16 %v3271, %v3270
        %v3328 = vpack.c.bf16 %v3273, %v3272
        %v3329 = vpack.c.bf16 %v3275, %v3274
        %v3330 = vpack.c.bf16 %v3277, %v3276
        %v3331 = vpack.c.bf16 %v3279, %v3278
        %v3332 = vpack.c.bf16 %v3281, %v3280
        %v3333 = vpack.c.bf16 %v3283, %v3282
        %v3334 = vpack.c.bf16 %v3285, %v3284
        %v3335 = vpack.c.bf16 %v3287, %v3286
        %v3336 = vld [vmem:[#allocation7] sm:$0xf]
        %v3337 = vld [vmem:[#allocation7 + $0x4] sm:$0xf]
        %v3338 = vld [vmem:[#allocation7 + $0x8] sm:$0xf]
        %v3339 = vld [vmem:[#allocation7 + $0xc] sm:$0xf]
        %v3340 = vld [vmem:[#allocation7 + $0x10] sm:$0xf]
        %v3341 = vld [vmem:[#allocation7 + $0x14] sm:$0xf]
        %v3342 = vld [vmem:[#allocation7 + $0x18] sm:$0xf]
        %v3343 = vld [vmem:[#allocation7 + $0x1c] sm:$0xf]
        %v3344 = vld [vmem:[#allocation7 + $0x20] sm:$0xf]
        %v3345 = vld [vmem:[#allocation7 + $0x24] sm:$0xf]
        %v3346 = vld [vmem:[#allocation7 + $0x28] sm:$0xf]
        %v3347 = vld [vmem:[#allocation7 + $0x2c] sm:$0xf]
        %v3348 = vld [vmem:[#allocation7 + $0x30] sm:$0xf]
        %v3349 = vld [vmem:[#allocation7 + $0x34] sm:$0xf]
        %v3350 = vld [vmem:[#allocation7 + $0x38] sm:$0xf]
        %v3351 = vld [vmem:[#allocation7 + $0x3c] sm:$0xf]
        %v3352 = vld [vmem:[#allocation7 + $0x40] sm:$0xf]
        %v3353 = vld [vmem:[#allocation7 + $0x44] sm:$0xf]
        %v3354 = vld [vmem:[#allocation7 + $0x48] sm:$0xf]
        %v3355 = vld [vmem:[#allocation7 + $0x4c] sm:$0xf]
        %v3356 = vld [vmem:[#allocation7 + $0x50] sm:$0xf]
        %v3357 = vld [vmem:[#allocation7 + $0x54] sm:$0xf]
        %v3358 = vld [vmem:[#allocation7 + $0x58] sm:$0xf]
        %v3359 = vld [vmem:[#allocation7 + $0x5c] sm:$0xf]
        %v3360 = vld [vmem:[#allocation7 + $0x60] sm:$0xf]
        %v3361 = vld [vmem:[#allocation7 + $0x64] sm:$0xf]
        %v3362 = vld [vmem:[#allocation7 + $0x68] sm:$0xf]
        %v3363 = vld [vmem:[#allocation7 + $0x6c] sm:$0xf]
        %v3364 = vld [vmem:[#allocation7 + $0x70] sm:$0xf]
        %v3365 = vld [vmem:[#allocation7 + $0x74] sm:$0xf]
        %v3366 = vld [vmem:[#allocation7 + $0x78] sm:$0xf]
        %v3367 = vld [vmem:[#allocation7 + $0x7c] sm:$0xf]
        %v3368 = vld [vmem:[#allocation7 + $0x80] sm:$0xf]
        %v3369 = vld [vmem:[#allocation7 + $0x84] sm:$0xf]
        %v3370 = vld [vmem:[#allocation7 + $0x88] sm:$0xf]
        %v3371 = vld [vmem:[#allocation7 + $0x8c] sm:$0xf]
        %v3372 = vld [vmem:[#allocation7 + $0x90] sm:$0xf]
        %v3373 = vld [vmem:[#allocation7 + $0x94] sm:$0xf]
        %v3374 = vld [vmem:[#allocation7 + $0x98] sm:$0xf]
        %v3375 = vld [vmem:[#allocation7 + $0x9c] sm:$0xf]
        %v3376 = vld [vmem:[#allocation7 + $0xa0] sm:$0xf]
        %v3377 = vld [vmem:[#allocation7 + $0xa4] sm:$0xf]
        %v3378 = vld [vmem:[#allocation7 + $0xa8] sm:$0xf]
        %v3379 = vld [vmem:[#allocation7 + $0xac] sm:$0xf]
        %v3380 = vld [vmem:[#allocation7 + $0xb0] sm:$0xf]
        %v3381 = vld [vmem:[#allocation7 + $0xb4] sm:$0xf]
        %v3382 = vld [vmem:[#allocation7 + $0xb8] sm:$0xf]
        %v3383 = vld [vmem:[#allocation7 + $0xbc] sm:$0xf]
        %s3384 = scalar_lea.vmem [#allocation7], 192
        %v3385 = vld [vmem:[%s3384] sm:$0xf]
        %v3386 = vld [vmem:[%s3384 + $0x4] sm:$0xf]
        %v3387 = vld [vmem:[%s3384 + $0x8] sm:$0xf]
        %v3388 = vld [vmem:[%s3384 + $0xc] sm:$0xf]
        %v3389 = vld [vmem:[%s3384 + $0x10] sm:$0xf]
        %v3390 = vld [vmem:[%s3384 + $0x14] sm:$0xf]
        %v3391 = vld [vmem:[%s3384 + $0x18] sm:$0xf]
        %v3392 = vld [vmem:[%s3384 + $0x1c] sm:$0xf]
        %v3393 = vld [vmem:[%s3384 + $0x20] sm:$0xf]
        %v3394 = vld [vmem:[%s3384 + $0x24] sm:$0xf]
        %v3395 = vld [vmem:[%s3384 + $0x28] sm:$0xf]
        %v3396 = vld [vmem:[%s3384 + $0x2c] sm:$0xf]
        %v3397 = vld [vmem:[%s3384 + $0x30] sm:$0xf]
        %v3398 = vld [vmem:[%s3384 + $0x34] sm:$0xf]
        %v3399 = vld [vmem:[%s3384 + $0x38] sm:$0xf]
        %v3400 = vld [vmem:[%s3384 + $0x3c] sm:$0xf]
        %v3401 = vld [vmem:[%s3384 + $0x40] sm:$0xf]
        %v3402 = vld [vmem:[%s3384 + $0x44] sm:$0xf]
        %v3403 = vld [vmem:[%s3384 + $0x48] sm:$0xf]
        %v3404 = vld [vmem:[%s3384 + $0x4c] sm:$0xf]
        %v3405 = vld [vmem:[%s3384 + $0x50] sm:$0xf]
        %v3406 = vld [vmem:[%s3384 + $0x54] sm:$0xf]
        %v3407 = vld [vmem:[%s3384 + $0x58] sm:$0xf]
        %v3408 = vld [vmem:[%s3384 + $0x5c] sm:$0xf]
        %v3409 = vld [vmem:[%s3384 + $0x60] sm:$0xf]
        %v3410 = vld [vmem:[%s3384 + $0x64] sm:$0xf]
        %v3411 = vld [vmem:[%s3384 + $0x68] sm:$0xf]
        %v3412 = vld [vmem:[%s3384 + $0x6c] sm:$0xf]
        %v3413 = vld [vmem:[%s3384 + $0x70] sm:$0xf]
        %v3414 = vld [vmem:[%s3384 + $0x74] sm:$0xf]
        %v3415 = vld [vmem:[%s3384 + $0x78] sm:$0xf]
        %v3416 = vld [vmem:[%s3384 + $0x7c] sm:$0xf]
        %v3417 = vld [vmem:[%s3384 + $0x80] sm:$0xf]
        %v3418 = vld [vmem:[%s3384 + $0x84] sm:$0xf]
        %v3419 = vld [vmem:[%s3384 + $0x88] sm:$0xf]
        %v3420 = vld [vmem:[%s3384 + $0x8c] sm:$0xf]
        %v3421 = vld [vmem:[%s3384 + $0x90] sm:$0xf]
        %v3422 = vld [vmem:[%s3384 + $0x94] sm:$0xf]
        %v3423 = vld [vmem:[%s3384 + $0x98] sm:$0xf]
        %v3424 = vld [vmem:[%s3384 + $0x9c] sm:$0xf]
        %v3425 = vld [vmem:[%s3384 + $0xa0] sm:$0xf]
        %v3426 = vld [vmem:[%s3384 + $0xa4] sm:$0xf]
        %v3427 = vld [vmem:[%s3384 + $0xa8] sm:$0xf]
        %v3428 = vld [vmem:[%s3384 + $0xac] sm:$0xf]
        %v3429 = vld [vmem:[%s3384 + $0xb0] sm:$0xf]
        %v3430 = vld [vmem:[%s3384 + $0xb4] sm:$0xf]
        %v3431 = vld [vmem:[%s3384 + $0xb8] sm:$0xf]
        %v3432 = vld [vmem:[%s3384 + $0xbc] sm:$0xf]
        %v3481 = vunpack.c.l.b16 %v3385
        %v3482 = vunpack.c.l.b16 %v3386
        %v3483 = vunpack.c.l.b16 %v3387
        %v3484 = vunpack.c.l.b16 %v3388
        %v3485 = vunpack.c.l.b16 %v3389
        %v3486 = vunpack.c.l.b16 %v3390
        %v3487 = vunpack.c.l.b16 %v3391
        %v3488 = vunpack.c.l.b16 %v3392
        %v3489 = vunpack.c.l.b16 %v3393
        %v3490 = vunpack.c.l.b16 %v3394
        %v3491 = vunpack.c.l.b16 %v3395
        %v3492 = vunpack.c.l.b16 %v3396
        %v3493 = vunpack.c.l.b16 %v3397
        %v3494 = vunpack.c.l.b16 %v3398
        %v3495 = vunpack.c.l.b16 %v3399
        %v3496 = vunpack.c.l.b16 %v3400
        %v3497 = vunpack.c.l.b16 %v3401
        %v3498 = vunpack.c.l.b16 %v3402
        %v3499 = vunpack.c.l.b16 %v3403
        %v3500 = vunpack.c.l.b16 %v3404
        %v3501 = vunpack.c.l.b16 %v3405
        %v3502 = vunpack.c.l.b16 %v3406
        %v3503 = vunpack.c.l.b16 %v3407
        %v3504 = vunpack.c.l.b16 %v3408
        %v3505 = vunpack.c.l.b16 %v3409
        %v3506 = vunpack.c.l.b16 %v3410
        %v3507 = vunpack.c.l.b16 %v3411
        %v3508 = vunpack.c.l.b16 %v3412
        %v3509 = vunpack.c.l.b16 %v3413
        %v3510 = vunpack.c.l.b16 %v3414
        %v3511 = vunpack.c.l.b16 %v3415
        %v3512 = vunpack.c.l.b16 %v3416
        %v3513 = vunpack.c.l.b16 %v3417
        %v3514 = vunpack.c.l.b16 %v3418
        %v3515 = vunpack.c.l.b16 %v3419
        %v3516 = vunpack.c.l.b16 %v3420
        %v3517 = vunpack.c.l.b16 %v3421
        %v3518 = vunpack.c.l.b16 %v3422
        %v3519 = vunpack.c.l.b16 %v3423
        %v3520 = vunpack.c.l.b16 %v3424
        %v3521 = vunpack.c.l.b16 %v3425
        %v3522 = vunpack.c.l.b16 %v3426
        %v3523 = vunpack.c.l.b16 %v3427
        %v3524 = vunpack.c.l.b16 %v3428
        %v3525 = vunpack.c.l.b16 %v3429
        %v3526 = vunpack.c.l.b16 %v3430
        %v3527 = vunpack.c.l.b16 %v3431
        %v3528 = vunpack.c.l.b16 %v3432
        %v3529 = vpack.c.b16 %v3482, %v3481
        %v3530 = vpack.c.b16 %v3484, %v3483
        %v3531 = vpack.c.b16 %v3486, %v3485
        %v3532 = vpack.c.b16 %v3488, %v3487
        %v3533 = vpack.c.b16 %v3490, %v3489
        %v3534 = vpack.c.b16 %v3492, %v3491
        %v3535 = vpack.c.b16 %v3494, %v3493
        %v3536 = vpack.c.b16 %v3496, %v3495
        %v3537 = vpack.c.b16 %v3498, %v3497
        %v3538 = vpack.c.b16 %v3500, %v3499
        %v3539 = vpack.c.b16 %v3502, %v3501
        %v3540 = vpack.c.b16 %v3504, %v3503
        %v3541 = vpack.c.b16 %v3506, %v3505
        %v3542 = vpack.c.b16 %v3508, %v3507
        %v3543 = vpack.c.b16 %v3510, %v3509
        %v3544 = vpack.c.b16 %v3512, %v3511
        %v3545 = vpack.c.b16 %v3514, %v3513
        %v3546 = vpack.c.b16 %v3516, %v3515
        %v3547 = vpack.c.b16 %v3518, %v3517
        %v3548 = vpack.c.b16 %v3520, %v3519
        %v3549 = vpack.c.b16 %v3522, %v3521
        %v3550 = vpack.c.b16 %v3524, %v3523
        %v3551 = vpack.c.b16 %v3526, %v3525
        %v3552 = vpack.c.b16 %v3528, %v3527
        %3577 = vmatprep.subr.bf16.mxu0 0
        %3578 = vmatpush1.bf16.msra.mxu0 %v3529
        %3579 = vmatprep.subr.bf16.mxu0 0
        %3580 = vmatpush1.bf16.msra.mxu0 %v3530
        %3581 = vmatprep.subr.bf16.mxu0 0
        %3582 = vmatpush1.bf16.msra.mxu0 %v3531
        %3583 = vmatprep.subr.bf16.mxu0 0
        %3584 = vmatpush1.bf16.msra.mxu0 %v3532
        %3585 = vmatprep.subr.bf16.mxu0 0
        %3586 = vmatpush1.bf16.msra.mxu0 %v3533
        %3587 = vmatprep.subr.bf16.mxu0 0
        %3588 = vmatpush1.bf16.msra.mxu0 %v3534
        %3589 = vmatprep.subr.bf16.mxu0 0
        %3590 = vmatpush1.bf16.msra.mxu0 %v3535
        %3591 = vmatprep.subr.bf16.mxu0 0
        %3592 = vmatpush1.bf16.msra.mxu0 %v3536
        %3593 = vmatprep.subr.bf16.mxu0 0
        %3594 = vmatpush1.bf16.msra.mxu0 %v3537
        %3595 = vmatprep.subr.bf16.mxu0 0
        %3596 = vmatpush1.bf16.msra.mxu0 %v3538
        %3597 = vmatprep.subr.bf16.mxu0 0
        %3598 = vmatpush1.bf16.msra.mxu0 %v3539
        %3599 = vmatprep.subr.bf16.mxu0 0
        %3600 = vmatpush1.bf16.msra.mxu0 %v3540
        %3601 = vmatprep.subr.bf16.mxu0 0
        %3602 = vmatpush1.bf16.msra.mxu0 %v3541
        %3603 = vmatprep.subr.bf16.mxu0 0
        %3604 = vmatpush1.bf16.msra.mxu0 %v3542
        %3605 = vmatprep.subr.bf16.mxu0 0
        %3606 = vmatpush1.bf16.msra.mxu0 %v3543
        %3607 = vmatprep.subr.bf16.mxu0 0
        %3608 = vmatpush1.bf16.msra.mxu0 %v3544
        %3609 = vmatprep.mubr.bf16.mxu0 %v3304
        %3610 = vmatmul.mubr.bf16.gmra.mrb[0].mxu0 %v3288
        %v3611 = vpop.f32.mrb[0].mxu0
        %v3612 = vadd.f32 0.0, %v3611
        %v3613 = vpop.f32.mrb[0].mxu0
        %v3614 = vpop.f32.mrb[0].mxu0
        %v3615 = vadd.f32 0.0, %v3614
        %v3616 = vpop.f32.mrb[0].mxu0
        %3617 = vmatprep.mubr.bf16.mxu0 %v3305
        %3618 = vmatmul.mubr.bf16.gmra.mrb[0].mxu0 %v3289
        %v3619 = vpop.f32.mrb[0].mxu0
        %v3620 = vadd.f32 0.0, %v3619
        %v3621 = vpop.f32.mrb[0].mxu0
        %v3622 = vpop.f32.mrb[0].mxu0
        %v3623 = vadd.f32 0.0, %v3622
        %v3624 = vpop.f32.mrb[0].mxu0
        %3625 = vmatprep.mubr.bf16.mxu0 %v3306
        %3626 = vmatmul.mubr.bf16.gmra.mrb[0].mxu0 %v3290
        %v3627 = vpop.f32.mrb[0].mxu0
        %v3628 = vadd.f32 0.0, %v3627
        %v3629 = vpop.f32.mrb[0].mxu0
        %v3630 = vpop.f32.mrb[0].mxu0
        %v3631 = vadd.f32 0.0, %v3630
        %v3632 = vpop.f32.mrb[0].mxu0
        %3633 = vmatprep.mubr.bf16.mxu0 %v3307
        %3634 = vmatmul.mubr.bf16.gmra.mrb[0].mxu0 %v3291
        %v3635 = vpop.f32.mrb[0].mxu0
        %v3636 = vadd.f32 0.0, %v3635
        %v3637 = vpop.f32.mrb[0].mxu0
        %v3638 = vpop.f32.mrb[0].mxu0
        %v3639 = vadd.f32 0.0, %v3638
        %v3640 = vpop.f32.mrb[0].mxu0
        %3641 = vmatprep.mubr.bf16.mxu0 %v3308
        %3642 = vmatmul.mubr.bf16.gmra.mrb[0].mxu0 %v3292
        %v3643 = vpop.f32.mrb[0].mxu0
        %v3644 = vadd.f32 0.0, %v3643
        %v3645 = vpop.f32.mrb[0].mxu0
        %v3646 = vpop.f32.mrb[0].mxu0
        %v3647 = vadd.f32 0.0, %v3646
        %v3648 = vpop.f32.mrb[0].mxu0
        %3649 = vmatprep.mubr.bf16.mxu0 %v3309
        %3650 = vmatmul.mubr.bf16.gmra.mrb[0].mxu0 %v3293
        %v3651 = vpop.f32.mrb[0].mxu0
        %v3652 = vadd.f32 0.0, %v3651
        %v3653 = vpop.f32.mrb[0].mxu0
        %v3654 = vpop.f32.mrb[0].mxu0
        %v3655 = vadd.f32 0.0, %v3654
        %v3656 = vpop.f32.mrb[0].mxu0
        %3657 = vmatprep.mubr.bf16.mxu0 %v3310
        %3658 = vmatmul.mubr.bf16.gmra.mrb[0].mxu0 %v3294
        %v3659 = vpop.f32.mrb[0].mxu0
        %v3660 = vadd.f32 0.0, %v3659
        %v3661 = vpop.f32.mrb[0].mxu0
        %v3662 = vpop.f32.mrb[0].mxu0
        %v3663 = vadd.f32 0.0, %v3662
        %v3664 = vpop.f32.mrb[0].mxu0
        %3665 = vmatprep.mubr.bf16.mxu0 %v3311
        %3666 = vmatmul.mubr.bf16.gmra.mrb[0].mxu0 %v3295
        %v3667 = vpop.f32.mrb[0].mxu0
        %v3668 = vadd.f32 0.0, %v3667
        %v3669 = vpop.f32.mrb[0].mxu0
        %v3670 = vpop.f32.mrb[0].mxu0
        %v3671 = vadd.f32 0.0, %v3670
        %v3672 = vpop.f32.mrb[0].mxu0
        %3673 = vmatprep.mubr.bf16.mxu0 %v3312
        %3674 = vmatmul.mubr.bf16.gmra.mrb[0].mxu0 %v3296
        %v3675 = vpop.f32.mrb[0].mxu0
        %v3676 = vadd.f32 0.0, %v3675
        %v3677 = vpop.f32.mrb[0].mxu0
        %v3678 = vpop.f32.mrb[0].mxu0
        %v3679 = vadd.f32 0.0, %v3678
        %v3680 = vpop.f32.mrb[0].mxu0
        %3681 = vmatprep.mubr.bf16.mxu0 %v3313
        %3682 = vmatmul.mubr.bf16.gmra.mrb[0].mxu0 %v3297
        %v3683 = vpop.f32.mrb[0].mxu0
        %v3684 = vadd.f32 0.0, %v3683
        %v3685 = vpop.f32.mrb[0].mxu0
        %v3686 = vpop.f32.mrb[0].mxu0
        %v3687 = vadd.f32 0.0, %v3686
        %v3688 = vpop.f32.mrb[0].mxu0
        %3689 = vmatprep.mubr.bf16.mxu0 %v3314
        %3690 = vmatmul.mubr.bf16.gmra.mrb[0].mxu0 %v3298
        %v3691 = vpop.f32.mrb[0].mxu0
        %v3692 = vadd.f32 0.0, %v3691
        %v3693 = vpop.f32.mrb[0].mxu0
        %v3694 = vpop.f32.mrb[0].mxu0
        %v3695 = vadd.f32 0.0, %v3694
        %v3696 = vpop.f32.mrb[0].mxu0
        %3697 = vmatprep.mubr.bf16.mxu0 %v3315
        %3698 = vmatmul.mubr.bf16.gmra.mrb[0].mxu0 %v3299
        %v3699 = vpop.f32.mrb[0].mxu0
        %v3700 = vadd.f32 0.0, %v3699
        %v3701 = vpop.f32.mrb[0].mxu0
        %v3702 = vpop.f32.mrb[0].mxu0
        %v3703 = vadd.f32 0.0, %v3702
        %v3704 = vpop.f32.mrb[0].mxu0
        %3705 = vmatprep.mubr.bf16.mxu0 %v3316
        %3706 = vmatmul.mubr.bf16.gmra.mrb[0].mxu0 %v3300
        %v3707 = vpop.f32.mrb[0].mxu0
        %v3708 = vadd.f32 0.0, %v3707
        %v3709 = vpop.f32.mrb[0].mxu0
        %v3710 = vpop.f32.mrb[0].mxu0
        %v3711 = vadd.f32 0.0, %v3710
        %v3712 = vpop.f32.mrb[0].mxu0
        %3713 = vmatprep.mubr.bf16.mxu0 %v3317
        %3714 = vmatmul.mubr.bf16.gmra.mrb[0].mxu0 %v3301
        %v3715 = vpop.f32.mrb[0].mxu0
        %v3716 = vadd.f32 0.0, %v3715
        %v3717 = vpop.f32.mrb[0].mxu0
        %v3718 = vpop.f32.mrb[0].mxu0
        %v3719 = vadd.f32 0.0, %v3718
        %v3720 = vpop.f32.mrb[0].mxu0
        %3721 = vmatprep.mubr.bf16.mxu0 %v3318
        %3722 = vmatmul.mubr.bf16.gmra.mrb[0].mxu0 %v3302
        %v3723 = vpop.f32.mrb[0].mxu0
        %v3724 = vadd.f32 0.0, %v3723
        %v3725 = vpop.f32.mrb[0].mxu0
        %v3726 = vpop.f32.mrb[0].mxu0
        %v3727 = vadd.f32 0.0, %v3726
        %v3728 = vpop.f32.mrb[0].mxu0
        %3729 = vmatprep.mubr.bf16.mxu0 %v3319
        %3730 = vmatmul.mubr.bf16.gmra.mrb[0].mxu0 %v3303
        %v3731 = vpop.f32.mrb[0].mxu0
        %v3732 = vadd.f32 0.0, %v3731
        %v3733 = vpop.f32.mrb[0].mxu0
        %v3734 = vpop.f32.mrb[0].mxu0
        %v3735 = vadd.f32 0.0, %v3734
        %v3736 = vpop.f32.mrb[0].mxu0
        %3737 = vdwg.mxu0
        %3738 = vmatprep.subr.bf16.mxu0 0
        %3739 = vmatpush1.bf16.msra.mxu0 %v3545
        %3740 = vmatprep.subr.bf16.mxu0 0
        %3741 = vmatpush1.bf16.msra.mxu0 %v3546
        %3742 = vmatprep.subr.bf16.mxu0 0
        %3743 = vmatpush1.bf16.msra.mxu0 %v3547
        %3744 = vmatprep.subr.bf16.mxu0 0
        %3745 = vmatpush1.bf16.msra.mxu0 %v3548
        %3746 = vmatprep.subr.bf16.mxu0 0
        %3747 = vmatpush1.bf16.msra.mxu0 %v3549
        %3748 = vmatprep.subr.bf16.mxu0 0
        %3749 = vmatpush1.bf16.msra.mxu0 %v3550
        %3750 = vmatprep.subr.bf16.mxu0 0
        %3751 = vmatpush1.bf16.msra.mxu0 %v3551
        %3752 = vmatprep.subr.bf16.mxu0 0
        %3753 = vmatpush1.bf16.msra.mxu0 %v3552
        %3754 = vmatprep.subr.bf16.mxu0 0
        %3755 = vmatpush1.bf16.msra.mxu0 0
        %3756 = vmatprep.subr.bf16.mxu0 0
        %3757 = vmatpush1.bf16.msra.mxu0 0
        %3758 = vmatprep.subr.bf16.mxu0 0
        %3759 = vmatpush1.bf16.msra.mxu0 0
        %3760 = vmatprep.subr.bf16.mxu0 0
        %3761 = vmatpush1.bf16.msra.mxu0 0
        %3762 = vmatprep.subr.bf16.mxu0 0
        %3763 = vmatpush1.bf16.msra.mxu0 0
        %3764 = vmatprep.subr.bf16.mxu0 0
        %3765 = vmatpush1.bf16.msra.mxu0 0
        %3766 = vmatprep.subr.bf16.mxu0 0
        %3767 = vmatpush1.bf16.msra.mxu0 0
        %3768 = vmatprep.subr.bf16.mxu0 0
        %3769 = vmatpush1.bf16.msra.mxu0 0
        %3770 = vmatprep.mubr.bf16.mxu0 0
        %3771 = vmatmul.mubr.bf16.gmra.mrb[0].mxu0 %v3320
        %v3772 = vpop.f32.mrb[0].mxu0
        %v3773 = vadd.f32 %v3612, %v3772
        %v3774 = vpop.f32.mrb[0].mxu0
        %v3775 = vpop.f32.mrb[0].mxu0
        %v3776 = vadd.f32 %v3615, %v3775
        %v3777 = vpop.f32.mrb[0].mxu0
        %3778 = vmatprep.mubr.bf16.mxu0 0
        %3779 = vmatmul.mubr.bf16.gmra.mrb[0].mxu0 %v3321
        %v3780 = vpop.f32.mrb[0].mxu0
        %v3781 = vadd.f32 %v3620, %v3780
        %v3782 = vpop.f32.mrb[0].mxu0
        %v3783 = vpop.f32.mrb[0].mxu0
        %v3784 = vadd.f32 %v3623, %v3783
        %v3785 = vpop.f32.mrb[0].mxu0
        %3786 = vmatprep.mubr.bf16.mxu0 0
        %3787 = vmatmul.mubr.bf16.gmra.mrb[0].mxu0 %v3322
        %v3788 = vpop.f32.mrb[0].mxu0
        %v3789 = vadd.f32 %v3628, %v3788
        %v3790 = vpop.f32.mrb[0].mxu0
        %v3791 = vpop.f32.mrb[0].mxu0
        %v3792 = vadd.f32 %v3631, %v3791
        %v3793 = vpop.f32.mrb[0].mxu0
        %3794 = vmatprep.mubr.bf16.mxu0 0
        %3795 = vmatmul.mubr.bf16.gmra.mrb[0].mxu0 %v3323
        %v3796 = vpop.f32.mrb[0].mxu0
        %v3797 = vadd.f32 %v3636, %v3796
        %v3798 = vpop.f32.mrb[0].mxu0
        %v3799 = vpop.f32.mrb[0].mxu0
        %v3800 = vadd.f32 %v3639, %v3799
        %v3801 = vpop.f32.mrb[0].mxu0
        %3802 = vmatprep.mubr.bf16.mxu0 0
        %3803 = vmatmul.mubr.bf16.gmra.mrb[0].mxu0 %v3324
        %v3804 = vpop.f32.mrb[0].mxu0
        %v3805 = vadd.f32 %v3644, %v3804
        %v3806 = vpop.f32.mrb[0].mxu0
        %v3807 = vpop.f32.mrb[0].mxu0
        %v3808 = vadd.f32 %v3647, %v3807
        %v3809 = vpop.f32.mrb[0].mxu0
        %3810 = vmatprep.mubr.bf16.mxu0 0
        %3811 = vmatmul.mubr.bf16.gmra.mrb[0].mxu0 %v3325
        %v3812 = vpop.f32.mrb[0].mxu0
        %v3813 = vadd.f32 %v3652, %v3812
        %v3814 = vpop.f32.mrb[0].mxu0
        %v3815 = vpop.f32.mrb[0].mxu0
        %v3816 = vadd.f32 %v3655, %v3815
        %v3817 = vpop.f32.mrb[0].mxu0
        %3818 = vmatprep.mubr.bf16.mxu0 0
        %3819 = vmatmul.mubr.bf16.gmra.mrb[0].mxu0 %v3326
        %v3820 = vpop.f32.mrb[0].mxu0
        %v3821 = vadd.f32 %v3660, %v3820
        %v3822 = vpop.f32.mrb[0].mxu0
        %v3823 = vpop.f32.mrb[0].mxu0
        %v3824 = vadd.f32 %v3663, %v3823
        %v3825 = vpop.f32.mrb[0].mxu0
        %3826 = vmatprep.mubr.bf16.mxu0 0
        %3827 = vmatmul.mubr.bf16.gmra.mrb[0].mxu0 %v3327
        %v3828 = vpop.f32.mrb[0].mxu0
        %v3829 = vadd.f32 %v3668, %v3828
        %v3830 = vpop.f32.mrb[0].mxu0
        %v3831 = vpop.f32.mrb[0].mxu0
        %v3832 = vadd.f32 %v3671, %v3831
        %v3833 = vpop.f32.mrb[0].mxu0
        %3834 = vmatprep.mubr.bf16.mxu0 0
        %3835 = vmatmul.mubr.bf16.gmra.mrb[0].mxu0 %v3328
        %v3836 = vpop.f32.mrb[0].mxu0
        %v3837 = vadd.f32 %v3676, %v3836
        %v3838 = vpop.f32.mrb[0].mxu0
        %v3839 = vpop.f32.mrb[0].mxu0
        %v3840 = vadd.f32 %v3679, %v3839
        %v3841 = vpop.f32.mrb[0].mxu0
        %3842 = vmatprep.mubr.bf16.mxu0 0
        %3843 = vmatmul.mubr.bf16.gmra.mrb[0].mxu0 %v3329
        %v3844 = vpop.f32.mrb[0].mxu0
        %v3845 = vadd.f32 %v3684, %v3844
        %v3846 = vpop.f32.mrb[0].mxu0
        %v3847 = vpop.f32.mrb[0].mxu0
        %v3848 = vadd.f32 %v3687, %v3847
        %v3849 = vpop.f32.mrb[0].mxu0
        %3850 = vmatprep.mubr.bf16.mxu0 0
        %3851 = vmatmul.mubr.bf16.gmra.mrb[0].mxu0 %v3330
        %v3852 = vpop.f32.mrb[0].mxu0
        %v3853 = vadd.f32 %v3692, %v3852
        %v3854 = vpop.f32.mrb[0].mxu0
        %v3855 = vpop.f32.mrb[0].mxu0
        %v3856 = vadd.f32 %v3695, %v3855
        %v3857 = vpop.f32.mrb[0].mxu0
        %3858 = vmatprep.mubr.bf16.mxu0 0
        %3859 = vmatmul.mubr.bf16.gmra.mrb[0].mxu0 %v3331
        %v3860 = vpop.f32.mrb[0].mxu0
        %v3861 = vadd.f32 %v3700, %v3860
        %v3862 = vpop.f32.mrb[0].mxu0
        %v3863 = vpop.f32.mrb[0].mxu0
        %v3864 = vadd.f32 %v3703, %v3863
        %v3865 = vpop.f32.mrb[0].mxu0
        %3866 = vmatprep.mubr.bf16.mxu0 0
        %3867 = vmatmul.mubr.bf16.gmra.mrb[0].mxu0 %v3332
        %v3868 = vpop.f32.mrb[0].mxu0
        %v3869 = vadd.f32 %v3708, %v3868
        %v3870 = vpop.f32.mrb[0].mxu0
        %v3871 = vpop.f32.mrb[0].mxu0
        %v3872 = vadd.f32 %v3711, %v3871
        %v3873 = vpop.f32.mrb[0].mxu0
        %3874 = vmatprep.mubr.bf16.mxu0 0
        %3875 = vmatmul.mubr.bf16.gmra.mrb[0].mxu0 %v3333
        %v3876 = vpop.f32.mrb[0].mxu0
        %v3877 = vadd.f32 %v3716, %v3876
        %v3878 = vpop.f32.mrb[0].mxu0
        %v3879 = vpop.f32.mrb[0].mxu0
        %v3880 = vadd.f32 %v3719, %v3879
        %v3881 = vpop.f32.mrb[0].mxu0
        %3882 = vmatprep.mubr.bf16.mxu0 0
        %3883 = vmatmul.mubr.bf16.gmra.mrb[0].mxu0 %v3334
        %v3884 = vpop.f32.mrb[0].mxu0
        %v3885 = vadd.f32 %v3724, %v3884
        %v3886 = vpop.f32.mrb[0].mxu0
        %v3887 = vpop.f32.mrb[0].mxu0
        %v3888 = vadd.f32 %v3727, %v3887
        %v3889 = vpop.f32.mrb[0].mxu0
        %3890 = vmatprep.mubr.bf16.mxu0 0
        %3891 = vmatmul.mubr.bf16.gmra.mrb[0].mxu0 %v3335
        %v3892 = vpop.f32.mrb[0].mxu0
        %v3893 = vadd.f32 %v3732, %v3892
        %v3894 = vpop.f32.mrb[0].mxu0
        %v3895 = vpop.f32.mrb[0].mxu0
        %v3896 = vadd.f32 %v3735, %v3895
        %v3897 = vpop.f32.mrb[0].mxu0
        %3898 = vdwg.mxu0
        %v3947 = vunpack.c.l.b16 %v3336
        %v3948 = vunpack.c.l.b16 %v3337
        %v3949 = vunpack.c.l.b16 %v3338
        %v3950 = vunpack.c.l.b16 %v3339
        %v3951 = vunpack.c.l.b16 %v3340
        %v3952 = vunpack.c.l.b16 %v3341
        %v3953 = vunpack.c.l.b16 %v3342
        %v3954 = vunpack.c.l.b16 %v3343
        %v3955 = vunpack.c.l.b16 %v3344
        %v3956 = vunpack.c.l.b16 %v3345
        %v3957 = vunpack.c.l.b16 %v3346
        %v3958 = vunpack.c.l.b16 %v3347
        %v3959 = vunpack.c.l.b16 %v3348
        %v3960 = vunpack.c.l.b16 %v3349
        %v3961 = vunpack.c.l.b16 %v3350
        %v3962 = vunpack.c.l.b16 %v3351
        %v3963 = vunpack.c.l.b16 %v3352
        %v3964 = vunpack.c.l.b16 %v3353
        %v3965 = vunpack.c.l.b16 %v3354
        %v3966 = vunpack.c.l.b16 %v3355
        %v3967 = vunpack.c.l.b16 %v3356
        %v3968 = vunpack.c.l.b16 %v3357
        %v3969 = vunpack.c.l.b16 %v3358
        %v3970 = vunpack.c.l.b16 %v3359
        %v3971 = vunpack.c.l.b16 %v3360
        %v3972 = vunpack.c.l.b16 %v3361
        %v3973 = vunpack.c.l.b16 %v3362
        %v3974 = vunpack.c.l.b16 %v3363
        %v3975 = vunpack.c.l.b16 %v3364
        %v3976 = vunpack.c.l.b16 %v3365
        %v3977 = vunpack.c.l.b16 %v3366
        %v3978 = vunpack.c.l.b16 %v3367
        %v3979 = vunpack.c.l.b16 %v3368
        %v3980 = vunpack.c.l.b16 %v3369
        %v3981 = vunpack.c.l.b16 %v3370
        %v3982 = vunpack.c.l.b16 %v3371
        %v3983 = vunpack.c.l.b16 %v3372
        %v3984 = vunpack.c.l.b16 %v3373
        %v3985 = vunpack.c.l.b16 %v3374
        %v3986 = vunpack.c.l.b16 %v3375
        %v3987 = vunpack.c.l.b16 %v3376
        %v3988 = vunpack.c.l.b16 %v3377
        %v3989 = vunpack.c.l.b16 %v3378
        %v3990 = vunpack.c.l.b16 %v3379
        %v3991 = vunpack.c.l.b16 %v3380
        %v3992 = vunpack.c.l.b16 %v3381
        %v3993 = vunpack.c.l.b16 %v3382
        %v3994 = vunpack.c.l.b16 %v3383
        %v3995 = vpack.c.b16 %v3948, %v3947
        %v3996 = vpack.c.b16 %v3950, %v3949
        %v3997 = vpack.c.b16 %v3952, %v3951
        %v3998 = vpack.c.b16 %v3954, %v3953
        %v3999 = vpack.c.b16 %v3956, %v3955
        %v4000 = vpack.c.b16 %v3958, %v3957
        %v4001 = vpack.c.b16 %v3960, %v3959
        %v4002 = vpack.c.b16 %v3962, %v3961
        %v4003 = vpack.c.b16 %v3964, %v3963
        %v4004 = vpack.c.b16 %v3966, %v3965
        %v4005 = vpack.c.b16 %v3968, %v3967
        %v4006 = vpack.c.b16 %v3970, %v3969
        %v4007 = vpack.c.b16 %v3972, %v3971
        %v4008 = vpack.c.b16 %v3974, %v3973
        %v4009 = vpack.c.b16 %v3976, %v3975
        %v4010 = vpack.c.b16 %v3978, %v3977
        %v4011 = vpack.c.b16 %v3980, %v3979
        %v4012 = vpack.c.b16 %v3982, %v3981
        %v4013 = vpack.c.b16 %v3984, %v3983
        %v4014 = vpack.c.b16 %v3986, %v3985
        %v4015 = vpack.c.b16 %v3988, %v3987
        %v4016 = vpack.c.b16 %v3990, %v3989
        %v4017 = vpack.c.b16 %v3992, %v3991
        %v4018 = vpack.c.b16 %v3994, %v3993
        %4043 = vmatprep.subr.bf16.mxu0 0
        %4044 = vmatpush1.bf16.msra.mxu0 %v3995
        %4045 = vmatprep.subr.bf16.mxu0 0
        %4046 = vmatpush1.bf16.msra.mxu0 %v3996
        %4047 = vmatprep.subr.bf16.mxu0 0
        %4048 = vmatpush1.bf16.msra.mxu0 %v3997
        %4049 = vmatprep.subr.bf16.mxu0 0
        %4050 = vmatpush1.bf16.msra.mxu0 %v3998
        %4051 = vmatprep.subr.bf16.mxu0 0
        %4052 = vmatpush1.bf16.msra.mxu0 %v3999
        %4053 = vmatprep.subr.bf16.mxu0 0
        %4054 = vmatpush1.bf16.msra.mxu0 %v4000
        %4055 = vmatprep.subr.bf16.mxu0 0
        %4056 = vmatpush1.bf16.msra.mxu0 %v4001
        %4057 = vmatprep.subr.bf16.mxu0 0
        %4058 = vmatpush1.bf16.msra.mxu0 %v4002
        %4059 = vmatprep.subr.bf16.mxu0 0
        %4060 = vmatpush1.bf16.msra.mxu0 %v4003
        %4061 = vmatprep.subr.bf16.mxu0 0
        %4062 = vmatpush1.bf16.msra.mxu0 %v4004
        %4063 = vmatprep.subr.bf16.mxu0 0
        %4064 = vmatpush1.bf16.msra.mxu0 %v4005
        %4065 = vmatprep.subr.bf16.mxu0 0
        %4066 = vmatpush1.bf16.msra.mxu0 %v4006
        %4067 = vmatprep.subr.bf16.mxu0 0
        %4068 = vmatpush1.bf16.msra.mxu0 %v4007
        %4069 = vmatprep.subr.bf16.mxu0 0
        %4070 = vmatpush1.bf16.msra.mxu0 %v4008
        %4071 = vmatprep.subr.bf16.mxu0 0
        %4072 = vmatpush1.bf16.msra.mxu0 %v4009
        %4073 = vmatprep.subr.bf16.mxu0 0
        %4074 = vmatpush1.bf16.msra.mxu0 %v4010
        %4075 = vmatprep.mubr.bf16.mxu0 0
        %4076 = vmatmul.mubr.bf16.gmra.mrb[0].mxu0 0
        %v4077 = vpop.f32.mrb[0].mxu0
        %v4078 = vadd.f32 %v3773, %v4077
        %v4079 = vpop.f32.mrb[0].mxu0
        %v4080 = vpop.f32.mrb[0].mxu0
        %v4081 = vadd.f32 %v3776, %v4080
        %v4082 = vpop.f32.mrb[0].mxu0
        %4083 = vmatprep.mubr.bf16.mxu0 %v3304
        %4084 = vmatmul.mubr.bf16.gmra.mrb[0].mxu0 %v3288
        %v4085 = vpop.f32.mrb[0].mxu0
        %v4086 = vadd.f32 %v3781, %v4085
        %v4087 = vpop.f32.mrb[0].mxu0
        %v4088 = vpop.f32.mrb[0].mxu0
        %v4089 = vadd.f32 %v3784, %v4088
        %v4090 = vpop.f32.mrb[0].mxu0
        %4091 = vmatprep.mubr.bf16.mxu0 %v3305
        %4092 = vmatmul.mubr.bf16.gmra.mrb[0].mxu0 %v3289
        %v4093 = vpop.f32.mrb[0].mxu0
        %v4094 = vadd.f32 %v3789, %v4093
        %v4095 = vpop.f32.mrb[0].mxu0
        %v4096 = vpop.f32.mrb[0].mxu0
        %v4097 = vadd.f32 %v3792, %v4096
        %v4098 = vpop.f32.mrb[0].mxu0
        %4099 = vmatprep.mubr.bf16.mxu0 %v3306
        %4100 = vmatmul.mubr.bf16.gmra.mrb[0].mxu0 %v3290
        %v4101 = vpop.f32.mrb[0].mxu0
        %v4102 = vadd.f32 %v3797, %v4101
        %v4103 = vpop.f32.mrb[0].mxu0
        %v4104 = vpop.f32.mrb[0].mxu0
        %v4105 = vadd.f32 %v3800, %v4104
        %v4106 = vpop.f32.mrb[0].mxu0
        %4107 = vmatprep.mubr.bf16.mxu0 %v3307
        %4108 = vmatmul.mubr.bf16.gmra.mrb[0].mxu0 %v3291
        %v4109 = vpop.f32.mrb[0].mxu0
        %v4110 = vadd.f32 %v3805, %v4109
        %v4111 = vpop.f32.mrb[0].mxu0
        %v4112 = vpop.f32.mrb[0].mxu0
        %v4113 = vadd.f32 %v3808, %v4112
        %v4114 = vpop.f32.mrb[0].mxu0
        %4115 = vmatprep.mubr.bf16.mxu0 %v3308
        %4116 = vmatmul.mubr.bf16.gmra.mrb[0].mxu0 %v3292
        %v4117 = vpop.f32.mrb[0].mxu0
        %v4118 = vadd.f32 %v3813, %v4117
        %v4119 = vpop.f32.mrb[0].mxu0
        %v4120 = vpop.f32.mrb[0].mxu0
        %v4121 = vadd.f32 %v3816, %v4120
        %v4122 = vpop.f32.mrb[0].mxu0
        %4123 = vmatprep.mubr.bf16.mxu0 %v3309
        %4124 = vmatmul.mubr.bf16.gmra.mrb[0].mxu0 %v3293
        %v4125 = vpop.f32.mrb[0].mxu0
        %v4126 = vadd.f32 %v3821, %v4125
        %v4127 = vpop.f32.mrb[0].mxu0
        %v4128 = vpop.f32.mrb[0].mxu0
        %v4129 = vadd.f32 %v3824, %v4128
        %v4130 = vpop.f32.mrb[0].mxu0
        %4131 = vmatprep.mubr.bf16.mxu0 %v3310
        %4132 = vmatmul.mubr.bf16.gmra.mrb[0].mxu0 %v3294
        %v4133 = vpop.f32.mrb[0].mxu0
        %v4134 = vadd.f32 %v3829, %v4133
        %v4135 = vpop.f32.mrb[0].mxu0
        %v4136 = vpop.f32.mrb[0].mxu0
        %v4137 = vadd.f32 %v3832, %v4136
        %v4138 = vpop.f32.mrb[0].mxu0
        %4139 = vmatprep.mubr.bf16.mxu0 %v3311
        %4140 = vmatmul.mubr.bf16.gmra.mrb[0].mxu0 %v3295
        %v4141 = vpop.f32.mrb[0].mxu0
        %v4142 = vadd.f32 %v3837, %v4141
        %v4143 = vpop.f32.mrb[0].mxu0
        %v4144 = vpop.f32.mrb[0].mxu0
        %v4145 = vadd.f32 %v3840, %v4144
        %v4146 = vpop.f32.mrb[0].mxu0
        %4147 = vmatprep.mubr.bf16.mxu0 %v3312
        %4148 = vmatmul.mubr.bf16.gmra.mrb[0].mxu0 %v3296
        %v4149 = vpop.f32.mrb[0].mxu0
        %v4150 = vadd.f32 %v3845, %v4149
        %v4151 = vpop.f32.mrb[0].mxu0
        %v4152 = vpop.f32.mrb[0].mxu0
        %v4153 = vadd.f32 %v3848, %v4152
        %v4154 = vpop.f32.mrb[0].mxu0
        %4155 = vmatprep.mubr.bf16.mxu0 %v3313
        %4156 = vmatmul.mubr.bf16.gmra.mrb[0].mxu0 %v3297
        %v4157 = vpop.f32.mrb[0].mxu0
        %v4158 = vadd.f32 %v3853, %v4157
        %v4159 = vpop.f32.mrb[0].mxu0
        %v4160 = vpop.f32.mrb[0].mxu0
        %v4161 = vadd.f32 %v3856, %v4160
        %v4162 = vpop.f32.mrb[0].mxu0
        %4163 = vmatprep.mubr.bf16.mxu0 %v3314
        %4164 = vmatmul.mubr.bf16.gmra.mrb[0].mxu0 %v3298
        %v4165 = vpop.f32.mrb[0].mxu0
        %v4166 = vadd.f32 %v3861, %v4165
        %v4167 = vpop.f32.mrb[0].mxu0
        %v4168 = vpop.f32.mrb[0].mxu0
        %v4169 = vadd.f32 %v3864, %v4168
        %v4170 = vpop.f32.mrb[0].mxu0
        %4171 = vmatprep.mubr.bf16.mxu0 %v3315
        %4172 = vmatmul.mubr.bf16.gmra.mrb[0].mxu0 %v3299
        %v4173 = vpop.f32.mrb[0].mxu0
        %v4174 = vadd.f32 %v3869, %v4173
        %v4175 = vpop.f32.mrb[0].mxu0
        %v4176 = vpop.f32.mrb[0].mxu0
        %v4177 = vadd.f32 %v3872, %v4176
        %v4178 = vpop.f32.mrb[0].mxu0
        %4179 = vmatprep.mubr.bf16.mxu0 %v3316
        %4180 = vmatmul.mubr.bf16.gmra.mrb[0].mxu0 %v3300
        %v4181 = vpop.f32.mrb[0].mxu0
        %v4182 = vadd.f32 %v3877, %v4181
        %v4183 = vpop.f32.mrb[0].mxu0
        %v4184 = vpop.f32.mrb[0].mxu0
        %v4185 = vadd.f32 %v3880, %v4184
        %v4186 = vpop.f32.mrb[0].mxu0
        %4187 = vmatprep.mubr.bf16.mxu0 %v3317
        %4188 = vmatmul.mubr.bf16.gmra.mrb[0].mxu0 %v3301
        %v4189 = vpop.f32.mrb[0].mxu0
        %v4190 = vadd.f32 %v3885, %v4189
        %v4191 = vpop.f32.mrb[0].mxu0
        %v4192 = vpop.f32.mrb[0].mxu0
        %v4193 = vadd.f32 %v3888, %v4192
        %v4194 = vpop.f32.mrb[0].mxu0
        %4195 = vmatprep.mubr.bf16.mxu0 %v3318
        %4196 = vmatmul.mubr.bf16.gmra.mrb[0].mxu0 %v3302
        %v4197 = vpop.f32.mrb[0].mxu0
        %v4198 = vadd.f32 %v3893, %v4197
        %v4199 = vpop.f32.mrb[0].mxu0
        %v4200 = vpop.f32.mrb[0].mxu0
        %v4201 = vadd.f32 %v3896, %v4200
        %v4202 = vpop.f32.mrb[0].mxu0
        %4203 = vdwg.mxu0
        %4204 = vmatprep.subr.bf16.mxu0 0
        %4205 = vmatpush1.bf16.msra.mxu0 %v4011
        %4206 = vmatprep.subr.bf16.mxu0 0
        %4207 = vmatpush1.bf16.msra.mxu0 %v4012
        %4208 = vmatprep.subr.bf16.mxu0 0
        %4209 = vmatpush1.bf16.msra.mxu0 %v4013
        %4210 = vmatprep.subr.bf16.mxu0 0
        %4211 = vmatpush1.bf16.msra.mxu0 %v4014
        %4212 = vmatprep.subr.bf16.mxu0 0
        %4213 = vmatpush1.bf16.msra.mxu0 %v4015
        %4214 = vmatprep.subr.bf16.mxu0 0
        %4215 = vmatpush1.bf16.msra.mxu0 %v4016
        %4216 = vmatprep.subr.bf16.mxu0 0
        %4217 = vmatpush1.bf16.msra.mxu0 %v4017
        %4218 = vmatprep.subr.bf16.mxu0 0
        %4219 = vmatpush1.bf16.msra.mxu0 %v4018
        %4220 = vmatprep.subr.bf16.mxu0 0
        %4221 = vmatpush1.bf16.msra.mxu0 0
        %4222 = vmatprep.subr.bf16.mxu0 0
        %4223 = vmatpush1.bf16.msra.mxu0 0
        %4224 = vmatprep.subr.bf16.mxu0 0
        %4225 = vmatpush1.bf16.msra.mxu0 0
        %4226 = vmatprep.subr.bf16.mxu0 0
        %4227 = vmatpush1.bf16.msra.mxu0 0
        %4228 = vmatprep.subr.bf16.mxu0 0
        %4229 = vmatpush1.bf16.msra.mxu0 0
        %4230 = vmatprep.subr.bf16.mxu0 0
        %4231 = vmatpush1.bf16.msra.mxu0 0
        %4232 = vmatprep.subr.bf16.mxu0 0
        %4233 = vmatpush1.bf16.msra.mxu0 0
        %4234 = vmatprep.subr.bf16.mxu0 0
        %4235 = vmatpush1.bf16.msra.mxu0 0
        %4236 = vmatprep.mubr.bf16.mxu0 0
        %4237 = vmatmul.mubr.bf16.gmra.mrb[0].mxu0 0
        %v4238 = vpop.f32.mrb[0].mxu0
        %v4239 = vadd.f32 %v4078, %v4238
        %v4240 = vpop.f32.mrb[0].mxu0
        %v4241 = vpop.f32.mrb[0].mxu0
        %v4242 = vadd.f32 %v4081, %v4241
        %v4243 = vpop.f32.mrb[0].mxu0
        %4244 = vmatprep.mubr.bf16.mxu0 0
        %4245 = vmatmul.mubr.bf16.gmra.mrb[0].mxu0 %v3320
        %v4246 = vpop.f32.mrb[0].mxu0
        %v4247 = vadd.f32 %v4086, %v4246
        %v4248 = vpop.f32.mrb[0].mxu0
        %v4249 = vpop.f32.mrb[0].mxu0
        %v4250 = vadd.f32 %v4089, %v4249
        %v4251 = vpop.f32.mrb[0].mxu0
        %4252 = vmatprep.mubr.bf16.mxu0 0
        %4253 = vmatmul.mubr.bf16.gmra.mrb[0].mxu0 %v3321
        %v4254 = vpop.f32.mrb[0].mxu0
        %v4255 = vadd.f32 %v4094, %v4254
        %v4256 = vpop.f32.mrb[0].mxu0
        %v4257 = vpop.f32.mrb[0].mxu0
        %v4258 = vadd.f32 %v4097, %v4257
        %v4259 = vpop.f32.mrb[0].mxu0
        %4260 = vmatprep.mubr.bf16.mxu0 0
        %4261 = vmatmul.mubr.bf16.gmra.mrb[0].mxu0 %v3322
        %v4262 = vpop.f32.mrb[0].mxu0
        %v4263 = vadd.f32 %v4102, %v4262
        %v4264 = vpop.f32.mrb[0].mxu0
        %v4265 = vpop.f32.mrb[0].mxu0
        %v4266 = vadd.f32 %v4105, %v4265
        %v4267 = vpop.f32.mrb[0].mxu0
        %4268 = vmatprep.mubr.bf16.mxu0 0
        %4269 = vmatmul.mubr.bf16.gmra.mrb[0].mxu0 %v3323
        %v4270 = vpop.f32.mrb[0].mxu0
        %v4271 = vadd.f32 %v4110, %v4270
        %v4272 = vpop.f32.mrb[0].mxu0
        %v4273 = vpop.f32.mrb[0].mxu0
        %v4274 = vadd.f32 %v4113, %v4273
        %v4275 = vpop.f32.mrb[0].mxu0
        %4276 = vmatprep.mubr.bf16.mxu0 0
        %4277 = vmatmul.mubr.bf16.gmra.mrb[0].mxu0 %v3324
        %v4278 = vpop.f32.mrb[0].mxu0
        %v4279 = vadd.f32 %v4118, %v4278
        %v4280 = vpop.f32.mrb[0].mxu0
        %v4281 = vpop.f32.mrb[0].mxu0
        %v4282 = vadd.f32 %v4121, %v4281
        %v4283 = vpop.f32.mrb[0].mxu0
        %4284 = vmatprep.mubr.bf16.mxu0 0
        %4285 = vmatmul.mubr.bf16.gmra.mrb[0].mxu0 %v3325
        %v4286 = vpop.f32.mrb[0].mxu0
        %v4287 = vadd.f32 %v4126, %v4286
        %v4288 = vpop.f32.mrb[0].mxu0
        %v4289 = vpop.f32.mrb[0].mxu0
        %v4290 = vadd.f32 %v4129, %v4289
        %v4291 = vpop.f32.mrb[0].mxu0
        %4292 = vmatprep.mubr.bf16.mxu0 0
        %4293 = vmatmul.mubr.bf16.gmra.mrb[0].mxu0 %v3326
        %v4294 = vpop.f32.mrb[0].mxu0
        %v4295 = vadd.f32 %v4134, %v4294
        %v4296 = vpop.f32.mrb[0].mxu0
        %v4297 = vpop.f32.mrb[0].mxu0
        %v4298 = vadd.f32 %v4137, %v4297
        %v4299 = vpop.f32.mrb[0].mxu0
        %4300 = vmatprep.mubr.bf16.mxu0 0
        %4301 = vmatmul.mubr.bf16.gmra.mrb[0].mxu0 %v3327
        %v4302 = vpop.f32.mrb[0].mxu0
        %v4303 = vadd.f32 %v4142, %v4302
        %v4304 = vpop.f32.mrb[0].mxu0
        %v4305 = vpop.f32.mrb[0].mxu0
        %v4306 = vadd.f32 %v4145, %v4305
        %v4307 = vpop.f32.mrb[0].mxu0
        %4308 = vmatprep.mubr.bf16.mxu0 0
        %4309 = vmatmul.mubr.bf16.gmra.mrb[0].mxu0 %v3328
        %v4310 = vpop.f32.mrb[0].mxu0
        %v4311 = vadd.f32 %v4150, %v4310
        %v4312 = vpop.f32.mrb[0].mxu0
        %v4313 = vpop.f32.mrb[0].mxu0
        %v4314 = vadd.f32 %v4153, %v4313
        %v4315 = vpop.f32.mrb[0].mxu0
        %4316 = vmatprep.mubr.bf16.mxu0 0
        %4317 = vmatmul.mubr.bf16.gmra.mrb[0].mxu0 %v3329
        %v4318 = vpop.f32.mrb[0].mxu0
        %v4319 = vadd.f32 %v4158, %v4318
        %v4320 = vpop.f32.mrb[0].mxu0
        %v4321 = vpop.f32.mrb[0].mxu0
        %v4322 = vadd.f32 %v4161, %v4321
        %v4323 = vpop.f32.mrb[0].mxu0
        %4324 = vmatprep.mubr.bf16.mxu0 0
        %4325 = vmatmul.mubr.bf16.gmra.mrb[0].mxu0 %v3330
        %v4326 = vpop.f32.mrb[0].mxu0
        %v4327 = vadd.f32 %v4166, %v4326
        %v4328 = vpop.f32.mrb[0].mxu0
        %v4329 = vpop.f32.mrb[0].mxu0
        %v4330 = vadd.f32 %v4169, %v4329
        %v4331 = vpop.f32.mrb[0].mxu0
        %4332 = vmatprep.mubr.bf16.mxu0 0
        %4333 = vmatmul.mubr.bf16.gmra.mrb[0].mxu0 %v3331
        %v4334 = vpop.f32.mrb[0].mxu0
        %v4335 = vadd.f32 %v4174, %v4334
        %v4336 = vpop.f32.mrb[0].mxu0
        %v4337 = vpop.f32.mrb[0].mxu0
        %v4338 = vadd.f32 %v4177, %v4337
        %v4339 = vpop.f32.mrb[0].mxu0
        %4340 = vmatprep.mubr.bf16.mxu0 0
        %4341 = vmatmul.mubr.bf16.gmra.mrb[0].mxu0 %v3332
        %v4342 = vpop.f32.mrb[0].mxu0
        %v4343 = vadd.f32 %v4182, %v4342
        %v4344 = vpop.f32.mrb[0].mxu0
        %v4345 = vpop.f32.mrb[0].mxu0
        %v4346 = vadd.f32 %v4185, %v4345
        %v4347 = vpop.f32.mrb[0].mxu0
        %4348 = vmatprep.mubr.bf16.mxu0 0
        %4349 = vmatmul.mubr.bf16.gmra.mrb[0].mxu0 %v3333
        %v4350 = vpop.f32.mrb[0].mxu0
        %v4351 = vadd.f32 %v4190, %v4350
        %v4352 = vpop.f32.mrb[0].mxu0
        %v4353 = vpop.f32.mrb[0].mxu0
        %v4354 = vadd.f32 %v4193, %v4353
        %v4355 = vpop.f32.mrb[0].mxu0
        %4356 = vmatprep.mubr.bf16.mxu0 0
        %4357 = vmatmul.mubr.bf16.gmra.mrb[0].mxu0 %v3334
        %v4358 = vpop.f32.mrb[0].mxu0
        %v4359 = vadd.f32 %v4198, %v4358
        %v4360 = vpop.f32.mrb[0].mxu0
        %v4361 = vpop.f32.mrb[0].mxu0
        %v4362 = vadd.f32 %v4201, %v4361
        %v4363 = vpop.f32.mrb[0].mxu0
        %4364 = vdwg.mxu0
        %s4365 = scalar_lea.vmem [#allocation7], 384
        %v4366 = vld [vmem:[%s4365] sm:$0xf]
        %v4367 = vld [vmem:[%s4365 + $0x4] sm:$0xf]
        %v4368 = vld [vmem:[%s4365 + $0x8] sm:$0xf]
        %v4369 = vld [vmem:[%s4365 + $0xc] sm:$0xf]
        %v4370 = vld [vmem:[%s4365 + $0x10] sm:$0xf]
        %v4371 = vld [vmem:[%s4365 + $0x14] sm:$0xf]
        %v4372 = vld [vmem:[%s4365 + $0x18] sm:$0xf]
        %v4373 = vld [vmem:[%s4365 + $0x1c] sm:$0xf]
        %v4374 = vld [vmem:[%s4365 + $0x20] sm:$0xf]
        %v4375 = vld [vmem:[%s4365 + $0x24] sm:$0xf]
        %v4376 = vld [vmem:[%s4365 + $0x28] sm:$0xf]
        %v4377 = vld [vmem:[%s4365 + $0x2c] sm:$0xf]
        %v4378 = vld [vmem:[%s4365 + $0x30] sm:$0xf]
        %v4379 = vld [vmem:[%s4365 + $0x34] sm:$0xf]
        %v4380 = vld [vmem:[%s4365 + $0x38] sm:$0xf]
        %v4381 = vld [vmem:[%s4365 + $0x3c] sm:$0xf]
        %v4382 = vld [vmem:[%s4365 + $0x40] sm:$0xf]
        %v4383 = vld [vmem:[%s4365 + $0x44] sm:$0xf]
        %v4384 = vld [vmem:[%s4365 + $0x48] sm:$0xf]
        %v4385 = vld [vmem:[%s4365 + $0x4c] sm:$0xf]
        %v4386 = vld [vmem:[%s4365 + $0x50] sm:$0xf]
        %v4387 = vld [vmem:[%s4365 + $0x54] sm:$0xf]
        %v4388 = vld [vmem:[%s4365 + $0x58] sm:$0xf]
        %v4389 = vld [vmem:[%s4365 + $0x5c] sm:$0xf]
        %v4390 = vld [vmem:[%s4365 + $0x60] sm:$0xf]
        %v4391 = vld [vmem:[%s4365 + $0x64] sm:$0xf]
        %v4392 = vld [vmem:[%s4365 + $0x68] sm:$0xf]
        %v4393 = vld [vmem:[%s4365 + $0x6c] sm:$0xf]
        %v4394 = vld [vmem:[%s4365 + $0x70] sm:$0xf]
        %v4395 = vld [vmem:[%s4365 + $0x74] sm:$0xf]
        %v4396 = vld [vmem:[%s4365 + $0x78] sm:$0xf]
        %v4397 = vld [vmem:[%s4365 + $0x7c] sm:$0xf]
        %v4398 = vld [vmem:[%s4365 + $0x80] sm:$0xf]
        %v4399 = vld [vmem:[%s4365 + $0x84] sm:$0xf]
        %v4400 = vld [vmem:[%s4365 + $0x88] sm:$0xf]
        %v4401 = vld [vmem:[%s4365 + $0x8c] sm:$0xf]
        %v4402 = vld [vmem:[%s4365 + $0x90] sm:$0xf]
        %v4403 = vld [vmem:[%s4365 + $0x94] sm:$0xf]
        %v4404 = vld [vmem:[%s4365 + $0x98] sm:$0xf]
        %v4405 = vld [vmem:[%s4365 + $0x9c] sm:$0xf]
        %v4406 = vld [vmem:[%s4365 + $0xa0] sm:$0xf]
        %v4407 = vld [vmem:[%s4365 + $0xa4] sm:$0xf]
        %v4408 = vld [vmem:[%s4365 + $0xa8] sm:$0xf]
        %v4409 = vld [vmem:[%s4365 + $0xac] sm:$0xf]
        %v4410 = vld [vmem:[%s4365 + $0xb0] sm:$0xf]
        %v4411 = vld [vmem:[%s4365 + $0xb4] sm:$0xf]
        %v4412 = vld [vmem:[%s4365 + $0xb8] sm:$0xf]
        %v4413 = vld [vmem:[%s4365 + $0xbc] sm:$0xf]
        %v4462 = vunpack.c.l.b16 %v4366
        %v4463 = vunpack.c.l.b16 %v4367
        %v4464 = vunpack.c.l.b16 %v4368
        %v4465 = vunpack.c.l.b16 %v4369
        %v4466 = vunpack.c.l.b16 %v4370
        %v4467 = vunpack.c.l.b16 %v4371
        %v4468 = vunpack.c.l.b16 %v4372
        %v4469 = vunpack.c.l.b16 %v4373
        %v4470 = vunpack.c.l.b16 %v4374
        %v4471 = vunpack.c.l.b16 %v4375
        %v4472 = vunpack.c.l.b16 %v4376
        %v4473 = vunpack.c.l.b16 %v4377
        %v4474 = vunpack.c.l.b16 %v4378
        %v4475 = vunpack.c.l.b16 %v4379
        %v4476 = vunpack.c.l.b16 %v4380
        %v4477 = vunpack.c.l.b16 %v4381
        %v4478 = vunpack.c.l.b16 %v4382
        %v4479 = vunpack.c.l.b16 %v4383
        %v4480 = vunpack.c.l.b16 %v4384
        %v4481 = vunpack.c.l.b16 %v4385
        %v4482 = vunpack.c.l.b16 %v4386
        %v4483 = vunpack.c.l.b16 %v4387
        %v4484 = vunpack.c.l.b16 %v4388
        %v4485 = vunpack.c.l.b16 %v4389
        %v4486 = vunpack.c.l.b16 %v4390
        %v4487 = vunpack.c.l.b16 %v4391
        %v4488 = vunpack.c.l.b16 %v4392
        %v4489 = vunpack.c.l.b16 %v4393
        %v4490 = vunpack.c.l.b16 %v4394
        %v4491 = vunpack.c.l.b16 %v4395
        %v4492 = vunpack.c.l.b16 %v4396
        %v4493 = vunpack.c.l.b16 %v4397
        %v4494 = vunpack.c.l.b16 %v4398
        %v4495 = vunpack.c.l.b16 %v4399
        %v4496 = vunpack.c.l.b16 %v4400
        %v4497 = vunpack.c.l.b16 %v4401
        %v4498 = vunpack.c.l.b16 %v4402
        %v4499 = vunpack.c.l.b16 %v4403
        %v4500 = vunpack.c.l.b16 %v4404
        %v4501 = vunpack.c.l.b16 %v4405
        %v4502 = vunpack.c.l.b16 %v4406
        %v4503 = vunpack.c.l.b16 %v4407
        %v4504 = vunpack.c.l.b16 %v4408
        %v4505 = vunpack.c.l.b16 %v4409
        %v4506 = vunpack.c.l.b16 %v4410
        %v4507 = vunpack.c.l.b16 %v4411
        %v4508 = vunpack.c.l.b16 %v4412
        %v4509 = vunpack.c.l.b16 %v4413
        %v4510 = vpack.c.b16 %v4463, %v4462
        %v4511 = vpack.c.b16 %v4465, %v4464
        %v4512 = vpack.c.b16 %v4467, %v4466
        %v4513 = vpack.c.b16 %v4469, %v4468
        %v4514 = vpack.c.b16 %v4471, %v4470
        %v4515 = vpack.c.b16 %v4473, %v4472
        %v4516 = vpack.c.b16 %v4475, %v4474
        %v4517 = vpack.c.b16 %v4477, %v4476
        %v4518 = vpack.c.b16 %v4479, %v4478
        %v4519 = vpack.c.b16 %v4481, %v4480
        %v4520 = vpack.c.b16 %v4483, %v4482
        %v4521 = vpack.c.b16 %v4485, %v4484
        %v4522 = vpack.c.b16 %v4487, %v4486
        %v4523 = vpack.c.b16 %v4489, %v4488
        %v4524 = vpack.c.b16 %v4491, %v4490
        %v4525 = vpack.c.b16 %v4493, %v4492
        %v4526 = vpack.c.b16 %v4495, %v4494
        %v4527 = vpack.c.b16 %v4497, %v4496
        %v4528 = vpack.c.b16 %v4499, %v4498
        %v4529 = vpack.c.b16 %v4501, %v4500
        %v4530 = vpack.c.b16 %v4503, %v4502
        %v4531 = vpack.c.b16 %v4505, %v4504
        %v4532 = vpack.c.b16 %v4507, %v4506
        %v4533 = vpack.c.b16 %v4509, %v4508
        %4558 = vmatprep.subr.bf16.mxu0 0
        %4559 = vmatpush1.bf16.msra.mxu0 %v4510
        %4560 = vmatprep.subr.bf16.mxu0 0
        %4561 = vmatpush1.bf16.msra.mxu0 %v4511
        %4562 = vmatprep.subr.bf16.mxu0 0
        %4563 = vmatpush1.bf16.msra.mxu0 %v4512
        %4564 = vmatprep.subr.bf16.mxu0 0
        %4565 = vmatpush1.bf16.msra.mxu0 %v4513
        %4566 = vmatprep.subr.bf16.mxu0 0
        %4567 = vmatpush1.bf16.msra.mxu0 %v4514
        %4568 = vmatprep.subr.bf16.mxu0 0
        %4569 = vmatpush1.bf16.msra.mxu0 %v4515
        %4570 = vmatprep.subr.bf16.mxu0 0
        %4571 = vmatpush1.bf16.msra.mxu0 %v4516
        %4572 = vmatprep.subr.bf16.mxu0 0
        %4573 = vmatpush1.bf16.msra.mxu0 %v4517
        %4574 = vmatprep.subr.bf16.mxu0 0
        %4575 = vmatpush1.bf16.msra.mxu0 %v4518
        %4576 = vmatprep.subr.bf16.mxu0 0
        %4577 = vmatpush1.bf16.msra.mxu0 %v4519
        %4578 = vmatprep.subr.bf16.mxu0 0
        %4579 = vmatpush1.bf16.msra.mxu0 %v4520
        %4580 = vmatprep.subr.bf16.mxu0 0
        %4581 = vmatpush1.bf16.msra.mxu0 %v4521
        %4582 = vmatprep.subr.bf16.mxu0 0
        %4583 = vmatpush1.bf16.msra.mxu0 %v4522
        %4584 = vmatprep.subr.bf16.mxu0 0
        %4585 = vmatpush1.bf16.msra.mxu0 %v4523
        %4586 = vmatprep.subr.bf16.mxu0 0
        %4587 = vmatpush1.bf16.msra.mxu0 %v4524
        %4588 = vmatprep.subr.bf16.mxu0 0
        %4589 = vmatpush1.bf16.msra.mxu0 %v4525
        %4590 = vmatprep.mubr.bf16.mxu0 %v3305
        %4591 = vmatmul.mubr.bf16.gmra.mrb[0].mxu0 %v3289
        %v4592 = vpop.f32.mrb[0].mxu0
        %v4593 = vadd.f32 0.0, %v4592
        %v4594 = vpop.f32.mrb[0].mxu0
        %v4595 = vpop.f32.mrb[0].mxu0
        %v4596 = vadd.f32 0.0, %v4595
        %v4597 = vpop.f32.mrb[0].mxu0
        %4598 = vmatprep.mubr.bf16.mxu0 %v3306
        %4599 = vmatmul.mubr.bf16.gmra.mrb[0].mxu0 %v3290
        %v4600 = vpop.f32.mrb[0].mxu0
        %v4601 = vadd.f32 0.0, %v4600
        %v4602 = vpop.f32.mrb[0].mxu0
        %v4603 = vpop.f32.mrb[0].mxu0
        %v4604 = vadd.f32 0.0, %v4603
        %v4605 = vpop.f32.mrb[0].mxu0
        %4606 = vmatprep.mubr.bf16.mxu0 %v3307
        %4607 = vmatmul.mubr.bf16.gmra.mrb[0].mxu0 %v3291
        %v4608 = vpop.f32.mrb[0].mxu0
        %v4609 = vadd.f32 0.0, %v4608
        %v4610 = vpop.f32.mrb[0].mxu0
        %v4611 = vpop.f32.mrb[0].mxu0
        %v4612 = vadd.f32 0.0, %v4611
        %v4613 = vpop.f32.mrb[0].mxu0
        %4614 = vmatprep.mubr.bf16.mxu0 %v3308
        %4615 = vmatmul.mubr.bf16.gmra.mrb[0].mxu0 %v3292
        %v4616 = vpop.f32.mrb[0].mxu0
        %v4617 = vadd.f32 0.0, %v4616
        %v4618 = vpop.f32.mrb[0].mxu0
        %v4619 = vpop.f32.mrb[0].mxu0
        %v4620 = vadd.f32 0.0, %v4619
        %v4621 = vpop.f32.mrb[0].mxu0
        %4622 = vmatprep.mubr.bf16.mxu0 %v3309
        %4623 = vmatmul.mubr.bf16.gmra.mrb[0].mxu0 %v3293
        %v4624 = vpop.f32.mrb[0].mxu0
        %v4625 = vadd.f32 0.0, %v4624
        %v4626 = vpop.f32.mrb[0].mxu0
        %v4627 = vpop.f32.mrb[0].mxu0
        %v4628 = vadd.f32 0.0, %v4627
        %v4629 = vpop.f32.mrb[0].mxu0
        %4630 = vmatprep.mubr.bf16.mxu0 %v3310
        %4631 = vmatmul.mubr.bf16.gmra.mrb[0].mxu0 %v3294
        %v4632 = vpop.f32.mrb[0].mxu0
        %v4633 = vadd.f32 0.0, %v4632
        %v4634 = vpop.f32.mrb[0].mxu0
        %v4635 = vpop.f32.mrb[0].mxu0
        %v4636 = vadd.f32 0.0, %v4635
        %v4637 = vpop.f32.mrb[0].mxu0
        %4638 = vmatprep.mubr.bf16.mxu0 %v3311
        %4639 = vmatmul.mubr.bf16.gmra.mrb[0].mxu0 %v3295
        %v4640 = vpop.f32.mrb[0].mxu0
        %v4641 = vadd.f32 0.0, %v4640
        %v4642 = vpop.f32.mrb[0].mxu0
        %v4643 = vpop.f32.mrb[0].mxu0
        %v4644 = vadd.f32 0.0, %v4643
        %v4645 = vpop.f32.mrb[0].mxu0
        %4646 = vmatprep.mubr.bf16.mxu0 %v3312
        %4647 = vmatmul.mubr.bf16.gmra.mrb[0].mxu0 %v3296
        %v4648 = vpop.f32.mrb[0].mxu0
        %v4649 = vadd.f32 0.0, %v4648
        %v4650 = vpop.f32.mrb[0].mxu0
        %v4651 = vpop.f32.mrb[0].mxu0
        %v4652 = vadd.f32 0.0, %v4651
        %v4653 = vpop.f32.mrb[0].mxu0
        %4654 = vmatprep.mubr.bf16.mxu0 %v3313
        %4655 = vmatmul.mubr.bf16.gmra.mrb[0].mxu0 %v3297
        %v4656 = vpop.f32.mrb[0].mxu0
        %v4657 = vadd.f32 0.0, %v4656
        %v4658 = vpop.f32.mrb[0].mxu0
        %v4659 = vpop.f32.mrb[0].mxu0
        %v4660 = vadd.f32 0.0, %v4659
        %v4661 = vpop.f32.mrb[0].mxu0
        %4662 = vmatprep.mubr.bf16.mxu0 %v3314
        %4663 = vmatmul.mubr.bf16.gmra.mrb[0].mxu0 %v3298
        %v4664 = vpop.f32.mrb[0].mxu0
        %v4665 = vadd.f32 0.0, %v4664
        %v4666 = vpop.f32.mrb[0].mxu0
        %v4667 = vpop.f32.mrb[0].mxu0
        %v4668 = vadd.f32 0.0, %v4667
        %v4669 = vpop.f32.mrb[0].mxu0
        %4670 = vmatprep.mubr.bf16.mxu0 %v3315
        %4671 = vmatmul.mubr.bf16.gmra.mrb[0].mxu0 %v3299
        %v4672 = vpop.f32.mrb[0].mxu0
        %v4673 = vadd.f32 0.0, %v4672
        %v4674 = vpop.f32.mrb[0].mxu0
        %v4675 = vpop.f32.mrb[0].mxu0
        %v4676 = vadd.f32 0.0, %v4675
        %v4677 = vpop.f32.mrb[0].mxu0
        %4678 = vmatprep.mubr.bf16.mxu0 %v3316
        %4679 = vmatmul.mubr.bf16.gmra.mrb[0].mxu0 %v3300
        %v4680 = vpop.f32.mrb[0].mxu0
        %v4681 = vadd.f32 0.0, %v4680
        %v4682 = vpop.f32.mrb[0].mxu0
        %v4683 = vpop.f32.mrb[0].mxu0
        %v4684 = vadd.f32 0.0, %v4683
        %v4685 = vpop.f32.mrb[0].mxu0
        %4686 = vmatprep.mubr.bf16.mxu0 %v3317
        %4687 = vmatmul.mubr.bf16.gmra.mrb[0].mxu0 %v3301
        %v4688 = vpop.f32.mrb[0].mxu0
        %v4689 = vadd.f32 0.0, %v4688
        %v4690 = vpop.f32.mrb[0].mxu0
        %v4691 = vpop.f32.mrb[0].mxu0
        %v4692 = vadd.f32 0.0, %v4691
        %v4693 = vpop.f32.mrb[0].mxu0
        %4694 = vmatprep.mubr.bf16.mxu0 %v3318
        %4695 = vmatmul.mubr.bf16.gmra.mrb[0].mxu0 %v3302
        %v4696 = vpop.f32.mrb[0].mxu0
        %v4697 = vadd.f32 0.0, %v4696
        %v4698 = vpop.f32.mrb[0].mxu0
        %v4699 = vpop.f32.mrb[0].mxu0
        %v4700 = vadd.f32 0.0, %v4699
        %v4701 = vpop.f32.mrb[0].mxu0
        %4702 = vmatprep.mubr.bf16.mxu0 %v3319
        %4703 = vmatmul.mubr.bf16.gmra.mrb[0].mxu0 %v3303
        %v4704 = vpop.f32.mrb[0].mxu0
        %v4705 = vadd.f32 0.0, %v4704
        %v4706 = vpop.f32.mrb[0].mxu0
        %v4707 = vpop.f32.mrb[0].mxu0
        %v4708 = vadd.f32 0.0, %v4707
        %v4709 = vpop.f32.mrb[0].mxu0
        %4710 = vmatprep.mubr.bf16.mxu0 0
        %4711 = vmatmul.mubr.bf16.gmra.mrb[0].mxu0 0
        %v4712 = vpop.f32.mrb[0].mxu0
        %v4713 = vadd.f32 0.0, %v4712
        %v4714 = vpop.f32.mrb[0].mxu0
        %v4715 = vpop.f32.mrb[0].mxu0
        %v4716 = vadd.f32 0.0, %v4715
        %v4717 = vpop.f32.mrb[0].mxu0
        %4718 = vdwg.mxu0
        %4719 = vmatprep.subr.bf16.mxu0 0
        %4720 = vmatpush1.bf16.msra.mxu0 %v4526
        %4721 = vmatprep.subr.bf16.mxu0 0
        %4722 = vmatpush1.bf16.msra.mxu0 %v4527
        %4723 = vmatprep.subr.bf16.mxu0 0
        %4724 = vmatpush1.bf16.msra.mxu0 %v4528
        %4725 = vmatprep.subr.bf16.mxu0 0
        %4726 = vmatpush1.bf16.msra.mxu0 %v4529
        %4727 = vmatprep.subr.bf16.mxu0 0
        %4728 = vmatpush1.bf16.msra.mxu0 %v4530
        %4729 = vmatprep.subr.bf16.mxu0 0
        %4730 = vmatpush1.bf16.msra.mxu0 %v4531
        %4731 = vmatprep.subr.bf16.mxu0 0
        %4732 = vmatpush1.bf16.msra.mxu0 %v4532
        %4733 = vmatprep.subr.bf16.mxu0 0
        %4734 = vmatpush1.bf16.msra.mxu0 %v4533
        %4735 = vmatprep.subr.bf16.mxu0 0
        %4736 = vmatpush1.bf16.msra.mxu0 0
        %4737 = vmatprep.subr.bf16.mxu0 0
        %4738 = vmatpush1.bf16.msra.mxu0 0
        %4739 = vmatprep.subr.bf16.mxu0 0
        %4740 = vmatpush1.bf16.msra.mxu0 0
        %4741 = vmatprep.subr.bf16.mxu0 0
        %4742 = vmatpush1.bf16.msra.mxu0 0
        %4743 = vmatprep.subr.bf16.mxu0 0
        %4744 = vmatpush1.bf16.msra.mxu0 0
        %4745 = vmatprep.subr.bf16.mxu0 0
        %4746 = vmatpush1.bf16.msra.mxu0 0
        %4747 = vmatprep.subr.bf16.mxu0 0
        %4748 = vmatpush1.bf16.msra.mxu0 0
        %4749 = vmatprep.subr.bf16.mxu0 0
        %4750 = vmatpush1.bf16.msra.mxu0 0
        %4751 = vmatprep.mubr.bf16.mxu0 0
        %4752 = vmatmul.mubr.bf16.gmra.mrb[0].mxu0 %v3321
        %v4753 = vpop.f32.mrb[0].mxu0
        %v4754 = vadd.f32 %v4593, %v4753
        %v4755 = vpop.f32.mrb[0].mxu0
        %v4756 = vpop.f32.mrb[0].mxu0
        %v4757 = vadd.f32 %v4596, %v4756
        %v4758 = vpop.f32.mrb[0].mxu0
        %4759 = vmatprep.mubr.bf16.mxu0 0
        %4760 = vmatmul.mubr.bf16.gmra.mrb[0].mxu0 %v3322
        %v4761 = vpop.f32.mrb[0].mxu0
        %v4762 = vadd.f32 %v4601, %v4761
        %v4763 = vpop.f32.mrb[0].mxu0
        %v4764 = vpop.f32.mrb[0].mxu0
        %v4765 = vadd.f32 %v4604, %v4764
        %v4766 = vpop.f32.mrb[0].mxu0
        %4767 = vmatprep.mubr.bf16.mxu0 0
        %4768 = vmatmul.mubr.bf16.gmra.mrb[0].mxu0 %v3323
        %v4769 = vpop.f32.mrb[0].mxu0
        %v4770 = vadd.f32 %v4609, %v4769
        %v4771 = vpop.f32.mrb[0].mxu0
        %v4772 = vpop.f32.mrb[0].mxu0
        %v4773 = vadd.f32 %v4612, %v4772
        %v4774 = vpop.f32.mrb[0].mxu0
        %4775 = vmatprep.mubr.bf16.mxu0 0
        %4776 = vmatmul.mubr.bf16.gmra.mrb[0].mxu0 %v3324
        %v4777 = vpop.f32.mrb[0].mxu0
        %v4778 = vadd.f32 %v4617, %v4777
        %v4779 = vpop.f32.mrb[0].mxu0
        %v4780 = vpop.f32.mrb[0].mxu0
        %v4781 = vadd.f32 %v4620, %v4780
        %v4782 = vpop.f32.mrb[0].mxu0
        %4783 = vmatprep.mubr.bf16.mxu0 0
        %4784 = vmatmul.mubr.bf16.gmra.mrb[0].mxu0 %v3325
        %v4785 = vpop.f32.mrb[0].mxu0
        %v4786 = vadd.f32 %v4625, %v4785
        %v4787 = vpop.f32.mrb[0].mxu0
        %v4788 = vpop.f32.mrb[0].mxu0
        %v4789 = vadd.f32 %v4628, %v4788
        %v4790 = vpop.f32.mrb[0].mxu0
        %4791 = vmatprep.mubr.bf16.mxu0 0
        %4792 = vmatmul.mubr.bf16.gmra.mrb[0].mxu0 %v3326
        %v4793 = vpop.f32.mrb[0].mxu0
        %v4794 = vadd.f32 %v4633, %v4793
        %v4795 = vpop.f32.mrb[0].mxu0
        %v4796 = vpop.f32.mrb[0].mxu0
        %v4797 = vadd.f32 %v4636, %v4796
        %v4798 = vpop.f32.mrb[0].mxu0
        %4799 = vmatprep.mubr.bf16.mxu0 0
        %4800 = vmatmul.mubr.bf16.gmra.mrb[0].mxu0 %v3327
        %v4801 = vpop.f32.mrb[0].mxu0
        %v4802 = vadd.f32 %v4641, %v4801
        %v4803 = vpop.f32.mrb[0].mxu0
        %v4804 = vpop.f32.mrb[0].mxu0
        %v4805 = vadd.f32 %v4644, %v4804
        %v4806 = vpop.f32.mrb[0].mxu0
        %4807 = vmatprep.mubr.bf16.mxu0 0
        %4808 = vmatmul.mubr.bf16.gmra.mrb[0].mxu0 %v3328
        %v4809 = vpop.f32.mrb[0].mxu0
        %v4810 = vadd.f32 %v4649, %v4809
        %v4811 = vpop.f32.mrb[0].mxu0
        %v4812 = vpop.f32.mrb[0].mxu0
        %v4813 = vadd.f32 %v4652, %v4812
        %v4814 = vpop.f32.mrb[0].mxu0
        %4815 = vmatprep.mubr.bf16.mxu0 0
        %4816 = vmatmul.mubr.bf16.gmra.mrb[0].mxu0 %v3329
        %v4817 = vpop.f32.mrb[0].mxu0
        %v4818 = vadd.f32 %v4657, %v4817
        %v4819 = vpop.f32.mrb[0].mxu0
        %v4820 = vpop.f32.mrb[0].mxu0
        %v4821 = vadd.f32 %v4660, %v4820
        %v4822 = vpop.f32.mrb[0].mxu0
        %4823 = vmatprep.mubr.bf16.mxu0 0
        %4824 = vmatmul.mubr.bf16.gmra.mrb[0].mxu0 %v3330
        %v4825 = vpop.f32.mrb[0].mxu0
        %v4826 = vadd.f32 %v4665, %v4825
        %v4827 = vpop.f32.mrb[0].mxu0
        %v4828 = vpop.f32.mrb[0].mxu0
        %v4829 = vadd.f32 %v4668, %v4828
        %v4830 = vpop.f32.mrb[0].mxu0
        %4831 = vmatprep.mubr.bf16.mxu0 0
        %4832 = vmatmul.mubr.bf16.gmra.mrb[0].mxu0 %v3331
        %v4833 = vpop.f32.mrb[0].mxu0
        %v4834 = vadd.f32 %v4673, %v4833
        %v4835 = vpop.f32.mrb[0].mxu0
        %v4836 = vpop.f32.mrb[0].mxu0
        %v4837 = vadd.f32 %v4676, %v4836
        %v4838 = vpop.f32.mrb[0].mxu0
        %4839 = vmatprep.mubr.bf16.mxu0 0
        %4840 = vmatmul.mubr.bf16.gmra.mrb[0].mxu0 %v3332
        %v4841 = vpop.f32.mrb[0].mxu0
        %v4842 = vadd.f32 %v4681, %v4841
        %v4843 = vpop.f32.mrb[0].mxu0
        %v4844 = vpop.f32.mrb[0].mxu0
        %v4845 = vadd.f32 %v4684, %v4844
        %v4846 = vpop.f32.mrb[0].mxu0
        %4847 = vmatprep.mubr.bf16.mxu0 0
        %4848 = vmatmul.mubr.bf16.gmra.mrb[0].mxu0 %v3333
        %v4849 = vpop.f32.mrb[0].mxu0
        %v4850 = vadd.f32 %v4689, %v4849
        %v4851 = vpop.f32.mrb[0].mxu0
        %v4852 = vpop.f32.mrb[0].mxu0
        %v4853 = vadd.f32 %v4692, %v4852
        %v4854 = vpop.f32.mrb[0].mxu0
        %4855 = vmatprep.mubr.bf16.mxu0 0
        %4856 = vmatmul.mubr.bf16.gmra.mrb[0].mxu0 %v3334
        %v4857 = vpop.f32.mrb[0].mxu0
        %v4858 = vadd.f32 %v4697, %v4857
        %v4859 = vpop.f32.mrb[0].mxu0
        %v4860 = vpop.f32.mrb[0].mxu0
        %v4861 = vadd.f32 %v4700, %v4860
        %v4862 = vpop.f32.mrb[0].mxu0
        %4863 = vmatprep.mubr.bf16.mxu0 0
        %4864 = vmatmul.mubr.bf16.gmra.mrb[0].mxu0 %v3335
        %v4865 = vpop.f32.mrb[0].mxu0
        %v4866 = vadd.f32 %v4705, %v4865
        %v4867 = vpop.f32.mrb[0].mxu0
        %v4868 = vpop.f32.mrb[0].mxu0
        %v4869 = vadd.f32 %v4708, %v4868
        %v4870 = vpop.f32.mrb[0].mxu0
        %4871 = vmatprep.mubr.bf16.mxu0 0
        %4872 = vmatmul.mubr.bf16.gmra.mrb[0].mxu0 0
        %v4873 = vpop.f32.mrb[0].mxu0
        %v4874 = vadd.f32 %v4713, %v4873
        %v4875 = vpop.f32.mrb[0].mxu0
        %v4876 = vpop.f32.mrb[0].mxu0
        %v4877 = vadd.f32 %v4716, %v4876
        %v4878 = vpop.f32.mrb[0].mxu0
        %4879 = vdwg.mxu0
        %v4880 = vadd.f32 %v4239, %v4754
        %v4881 = vadd.f32 %v4242, %v4757
        %v4882 = vadd.f32 %v4247, %v4762
        %v4883 = vadd.f32 %v4250, %v4765
        %v4884 = vadd.f32 %v4255, %v4770
        %v4885 = vadd.f32 %v4258, %v4773
        %v4886 = vadd.f32 %v4263, %v4778
        %v4887 = vadd.f32 %v4266, %v4781
        %v4888 = vadd.f32 %v4271, %v4786
        %v4889 = vadd.f32 %v4274, %v4789
        %v4890 = vadd.f32 %v4279, %v4794
        %v4891 = vadd.f32 %v4282, %v4797
        %v4892 = vadd.f32 %v4287, %v4802
        %v4893 = vadd.f32 %v4290, %v4805
        %v4894 = vadd.f32 %v4295, %v4810
        %v4895 = vadd.f32 %v4298, %v4813
        %v4896 = vadd.f32 %v4303, %v4818
        %v4897 = vadd.f32 %v4306, %v4821
        %v4898 = vadd.f32 %v4311, %v4826
        %v4899 = vadd.f32 %v4314, %v4829
        %v4900 = vadd.f32 %v4319, %v4834
        %v4901 = vadd.f32 %v4322, %v4837
        %v4902 = vadd.f32 %v4327, %v4842
        %v4903 = vadd.f32 %v4330, %v4845
        %v4904 = vadd.f32 %v4335, %v4850
        %v4905 = vadd.f32 %v4338, %v4853
        %v4906 = vadd.f32 %v4343, %v4858
        %v4907 = vadd.f32 %v4346, %v4861
        %v4908 = vadd.f32 %v4351, %v4866
        %v4909 = vadd.f32 %v4354, %v4869
        %v4910 = vadd.f32 %v4359, %v4874
        %v4911 = vadd.f32 %v4362, %v4877
        %v4912 = vld [vmem:[%s4] sm:$0x1]
        %v4914 = vlaneseq
        %v4915 = vshrl.u32 %v4914, 7
        %v4916 = vsub.s32 0, %v4915
        %v4917 = vrot.slane %v4912, %v4916
        %v4919 = vadd.f32 %v4880, %v4917
        %v4920 = vadd.f32 %v4881, %v4917
        %v4921 = vadd.f32 %v4882, %v4917
        %v4922 = vadd.f32 %v4883, %v4917
        %v4923 = vadd.f32 %v4884, %v4917
        %v4924 = vadd.f32 %v4885, %v4917
        %v4925 = vadd.f32 %v4886, %v4917
        %v4926 = vadd.f32 %v4887, %v4917
        %v4927 = vadd.f32 %v4888, %v4917
        %v4928 = vadd.f32 %v4889, %v4917
        %v4929 = vadd.f32 %v4890, %v4917
        %v4930 = vadd.f32 %v4891, %v4917
        %v4931 = vadd.f32 %v4892, %v4917
        %v4932 = vadd.f32 %v4893, %v4917
        %v4933 = vadd.f32 %v4894, %v4917
        %v4934 = vadd.f32 %v4895, %v4917
        %v4935 = vadd.f32 %v4896, %v4917
        %v4936 = vadd.f32 %v4897, %v4917
        %v4937 = vadd.f32 %v4898, %v4917
        %v4938 = vadd.f32 %v4899, %v4917
        %v4939 = vadd.f32 %v4900, %v4917
        %v4940 = vadd.f32 %v4901, %v4917
        %v4941 = vadd.f32 %v4902, %v4917
        %v4942 = vadd.f32 %v4903, %v4917
        %v4943 = vadd.f32 %v4904, %v4917
        %v4944 = vadd.f32 %v4905, %v4917
        %v4945 = vadd.f32 %v4906, %v4917
        %v4946 = vadd.f32 %v4907, %v4917
        %v4947 = vadd.f32 %v4908, %v4917
        %v4948 = vadd.f32 %v4909, %v4917
        %v4949 = vadd.f32 %v4910, %v4917
        %v4950 = vadd.f32 %v4911, %v4917
        %v4951 = vadd.f32 %v4919, %v342
        %v4952 = vadd.f32 %v4920, %v343
        %v4953 = vadd.f32 %v4921, %v344
        %v4954 = vadd.f32 %v4922, %v345
        %v4955 = vadd.f32 %v4923, %v346
        %v4956 = vadd.f32 %v4924, %v347
        %v4957 = vadd.f32 %v4925, %v348
        %v4958 = vadd.f32 %v4926, %v349
        %v4959 = vadd.f32 %v4927, %v350
        %v4960 = vadd.f32 %v4928, %v351
        %v4961 = vadd.f32 %v4929, %v352
        %v4962 = vadd.f32 %v4930, %v353
        %v4963 = vadd.f32 %v4931, %v354
        %v4964 = vadd.f32 %v4932, %v355
        %v4965 = vadd.f32 %v4933, %v356
        %v4966 = vadd.f32 %v4934, %v357
        %v4967 = vadd.f32 %v4935, %v358
        %v4968 = vadd.f32 %v4936, %v359
        %v4969 = vadd.f32 %v4937, %v360
        %v4970 = vadd.f32 %v4938, %v361
        %v4971 = vadd.f32 %v4939, %v362
        %v4972 = vadd.f32 %v4940, %v363
        %v4973 = vadd.f32 %v4941, %v364
        %v4974 = vadd.f32 %v4942, %v365
        %v4975 = vadd.f32 %v4943, %v366
        %v4976 = vadd.f32 %v4944, %v367
        %v4977 = vadd.f32 %v4945, %v368
        %v4978 = vadd.f32 %v4946, %v369
        %v4979 = vadd.f32 %v4947, %v370
        %v4980 = vadd.f32 %v4948, %v371
        %v4981 = vadd.f32 %v4949, %v372
        %v4982 = vadd.f32 %v4950, %v373
        %v4983 = vpack.c.bf16 %v4952, %v4951
        %v4984 = vpack.c.bf16 %v4954, %v4953
        %v4985 = vpack.c.bf16 %v4956, %v4955
        %v4986 = vpack.c.bf16 %v4958, %v4957
        %v4987 = vpack.c.bf16 %v4960, %v4959
        %v4988 = vpack.c.bf16 %v4962, %v4961
        %v4989 = vpack.c.bf16 %v4964, %v4963
        %v4990 = vpack.c.bf16 %v4966, %v4965
        %v4991 = vpack.c.bf16 %v4968, %v4967
        %v4992 = vpack.c.bf16 %v4970, %v4969
        %v4993 = vpack.c.bf16 %v4972, %v4971
        %v4994 = vpack.c.bf16 %v4974, %v4973
        %v4995 = vpack.c.bf16 %v4976, %v4975
        %v4996 = vpack.c.bf16 %v4978, %v4977
        %v4997 = vpack.c.bf16 %v4980, %v4979
        %v4998 = vpack.c.bf16 %v4982, %v4981
        %v4999 = vld [vmem:[#allocation8] sm:$0xf]
        %v5000 = vld [vmem:[#allocation8 + $0x4] sm:$0xf]
        %v5001 = vld [vmem:[#allocation8 + $0x8] sm:$0xf]
        %v5002 = vld [vmem:[#allocation8 + $0xc] sm:$0xf]
        %v5003 = vld [vmem:[#allocation8 + $0x10] sm:$0xf]
        %v5004 = vld [vmem:[#allocation8 + $0x14] sm:$0xf]
        %v5005 = vld [vmem:[#allocation8 + $0x18] sm:$0xf]
        %v5006 = vld [vmem:[#allocation8 + $0x1c] sm:$0xf]
        %v5007 = vld [vmem:[#allocation8 + $0x20] sm:$0xf]
        %v5008 = vld [vmem:[#allocation8 + $0x24] sm:$0xf]
        %v5009 = vld [vmem:[#allocation8 + $0x28] sm:$0xf]
        %v5010 = vld [vmem:[#allocation8 + $0x2c] sm:$0xf]
        %v5011 = vld [vmem:[#allocation8 + $0x30] sm:$0xf]
        %v5012 = vld [vmem:[#allocation8 + $0x34] sm:$0xf]
        %v5013 = vld [vmem:[#allocation8 + $0x38] sm:$0xf]
        %v5014 = vld [vmem:[#allocation8 + $0x3c] sm:$0xf]
        %v5015 = vld [vmem:[%s6] sm:$0x1]
        %v5017 = vlaneseq
        %v5018 = vshrl.u32 %v5017, 7
        %v5019 = vsub.s32 0, %v5018
        %v5020 = vrot.slane %v5015, %v5019
        %v5038 = vunpack.c.l.b16 %v4999
        %v5039 = vunpack.c.l.b16 %v5000
        %v5040 = vunpack.c.l.b16 %v5001
        %v5041 = vunpack.c.l.b16 %v5002
        %v5042 = vunpack.c.l.b16 %v5003
        %v5043 = vunpack.c.l.b16 %v5004
        %v5044 = vunpack.c.l.b16 %v5005
        %v5045 = vunpack.c.l.b16 %v5006
        %v5046 = vunpack.c.l.b16 %v5007
        %v5047 = vunpack.c.l.b16 %v5008
        %v5048 = vunpack.c.l.b16 %v5009
        %v5049 = vunpack.c.l.b16 %v5010
        %v5050 = vunpack.c.l.b16 %v5011
        %v5051 = vunpack.c.l.b16 %v5012
        %v5052 = vunpack.c.l.b16 %v5013
        %v5053 = vunpack.c.l.b16 %v5014
        %v5054 = vpack.c.b16 %v5039, %v5038
        %v5055 = vpack.c.b16 %v5041, %v5040
        %v5056 = vpack.c.b16 %v5043, %v5042
        %v5057 = vpack.c.b16 %v5045, %v5044
        %v5058 = vpack.c.b16 %v5047, %v5046
        %v5059 = vpack.c.b16 %v5049, %v5048
        %v5060 = vpack.c.b16 %v5051, %v5050
        %v5061 = vpack.c.b16 %v5053, %v5052
        %5070 = vmatprep.subr.bf16.mxu0 0
        %5071 = vmatpush1.bf16.msra.mxu0 %v5054
        %5072 = vmatprep.subr.bf16.mxu0 0
        %5073 = vmatpush1.bf16.msra.mxu0 %v5055
        %5074 = vmatprep.subr.bf16.mxu0 0
        %5075 = vmatpush1.bf16.msra.mxu0 %v5056
        %5076 = vmatprep.subr.bf16.mxu0 0
        %5077 = vmatpush1.bf16.msra.mxu0 %v5057
        %5078 = vmatprep.subr.bf16.mxu0 0
        %5079 = vmatpush1.bf16.msra.mxu0 %v5058
        %5080 = vmatprep.subr.bf16.mxu0 0
        %5081 = vmatpush1.bf16.msra.mxu0 %v5059
        %5082 = vmatprep.subr.bf16.mxu0 0
        %5083 = vmatpush1.bf16.msra.mxu0 %v5060
        %5084 = vmatprep.subr.bf16.mxu0 0
        %5085 = vmatpush1.bf16.msra.mxu0 %v5061
        %5086 = vmatprep.subr.bf16.mxu0 0
        %5087 = vmatpush1.bf16.msra.mxu0 0
        %5088 = vmatprep.subr.bf16.mxu0 0
        %5089 = vmatpush1.bf16.msra.mxu0 0
        %5090 = vmatprep.subr.bf16.mxu0 0
        %5091 = vmatpush1.bf16.msra.mxu0 0
        %5092 = vmatprep.subr.bf16.mxu0 0
        %5093 = vmatpush1.bf16.msra.mxu0 0
        %5094 = vmatprep.subr.bf16.mxu0 0
        %5095 = vmatpush1.bf16.msra.mxu0 0
        %5096 = vmatprep.subr.bf16.mxu0 0
        %5097 = vmatpush1.bf16.msra.mxu0 0
        %5098 = vmatprep.subr.bf16.mxu0 0
        %5099 = vmatpush1.bf16.msra.mxu0 0
        %5100 = vmatprep.subr.bf16.mxu0 0
        %5101 = vmatpush1.bf16.msra.mxu0 0
        %5102 = vmatprep.mubr.bf16.mxu0 0
        %5103 = vmatmul.mubr.bf16.gmra.mrb[0].mxu0 %v4983
        %v5104 = vpop.f32.mrb[0].mxu0
        %v5105 = vadd.f32 %v5020, %v5104
        %v5106 = vpop.f32.mrb[0].mxu0
        %v5107 = vpop.f32.mrb[0].mxu0
        %v5108 = vadd.f32 %v5020, %v5107
        %v5109 = vpop.f32.mrb[0].mxu0
        %5110 = vmatprep.mubr.bf16.mxu0 0
        %5111 = vmatmul.mubr.bf16.gmra.mrb[0].mxu0 %v4984
        %v5112 = vpop.f32.mrb[0].mxu0
        %v5113 = vadd.f32 %v5020, %v5112
        %v5114 = vpop.f32.mrb[0].mxu0
        %v5115 = vpop.f32.mrb[0].mxu0
        %v5116 = vadd.f32 %v5020, %v5115
        %v5117 = vpop.f32.mrb[0].mxu0
        %5118 = vmatprep.mubr.bf16.mxu0 0
        %5119 = vmatmul.mubr.bf16.gmra.mrb[0].mxu0 %v4985
        %v5120 = vpop.f32.mrb[0].mxu0
        %v5121 = vadd.f32 %v5020, %v5120
        %v5122 = vpop.f32.mrb[0].mxu0
        %v5123 = vpop.f32.mrb[0].mxu0
        %v5124 = vadd.f32 %v5020, %v5123
        %v5125 = vpop.f32.mrb[0].mxu0
        %5126 = vmatprep.mubr.bf16.mxu0 0
        %5127 = vmatmul.mubr.bf16.gmra.mrb[0].mxu0 %v4986
        %v5128 = vpop.f32.mrb[0].mxu0
        %v5129 = vadd.f32 %v5020, %v5128
        %v5130 = vpop.f32.mrb[0].mxu0
        %v5131 = vpop.f32.mrb[0].mxu0
        %v5132 = vadd.f32 %v5020, %v5131
        %v5133 = vpop.f32.mrb[0].mxu0
        %5134 = vmatprep.mubr.bf16.mxu0 0
        %5135 = vmatmul.mubr.bf16.gmra.mrb[0].mxu0 %v4987
        %v5136 = vpop.f32.mrb[0].mxu0
        %v5137 = vadd.f32 %v5020, %v5136
        %v5138 = vpop.f32.mrb[0].mxu0
        %v5139 = vpop.f32.mrb[0].mxu0
        %v5140 = vadd.f32 %v5020, %v5139
        %v5141 = vpop.f32.mrb[0].mxu0
        %5142 = vmatprep.mubr.bf16.mxu0 0
        %5143 = vmatmul.mubr.bf16.gmra.mrb[0].mxu0 %v4988
        %v5144 = vpop.f32.mrb[0].mxu0
        %v5145 = vadd.f32 %v5020, %v5144
        %v5146 = vpop.f32.mrb[0].mxu0
        %v5147 = vpop.f32.mrb[0].mxu0
        %v5148 = vadd.f32 %v5020, %v5147
        %v5149 = vpop.f32.mrb[0].mxu0
        %5150 = vmatprep.mubr.bf16.mxu0 0
        %5151 = vmatmul.mubr.bf16.gmra.mrb[0].mxu0 %v4989
        %v5152 = vpop.f32.mrb[0].mxu0
        %v5153 = vadd.f32 %v5020, %v5152
        %v5154 = vpop.f32.mrb[0].mxu0
        %v5155 = vpop.f32.mrb[0].mxu0
        %v5156 = vadd.f32 %v5020, %v5155
        %v5157 = vpop.f32.mrb[0].mxu0
        %5158 = vmatprep.mubr.bf16.mxu0 0
        %5159 = vmatmul.mubr.bf16.gmra.mrb[0].mxu0 %v4990
        %v5160 = vpop.f32.mrb[0].mxu0
        %v5161 = vadd.f32 %v5020, %v5160
        %v5162 = vpop.f32.mrb[0].mxu0
        %v5163 = vpop.f32.mrb[0].mxu0
        %v5164 = vadd.f32 %v5020, %v5163
        %v5165 = vpop.f32.mrb[0].mxu0
        %5166 = vmatprep.mubr.bf16.mxu0 0
        %5167 = vmatmul.mubr.bf16.gmra.mrb[0].mxu0 %v4991
        %v5168 = vpop.f32.mrb[0].mxu0
        %v5169 = vadd.f32 %v5020, %v5168
        %v5170 = vpop.f32.mrb[0].mxu0
        %v5171 = vpop.f32.mrb[0].mxu0
        %v5172 = vadd.f32 %v5020, %v5171
        %v5173 = vpop.f32.mrb[0].mxu0
        %5174 = vmatprep.mubr.bf16.mxu0 0
        %5175 = vmatmul.mubr.bf16.gmra.mrb[0].mxu0 %v4992
        %v5176 = vpop.f32.mrb[0].mxu0
        %v5177 = vadd.f32 %v5020, %v5176
        %v5178 = vpop.f32.mrb[0].mxu0
        %v5179 = vpop.f32.mrb[0].mxu0
        %v5180 = vadd.f32 %v5020, %v5179
        %v5181 = vpop.f32.mrb[0].mxu0
        %5182 = vmatprep.mubr.bf16.mxu0 0
        %5183 = vmatmul.mubr.bf16.gmra.mrb[0].mxu0 %v4993
        %v5184 = vpop.f32.mrb[0].mxu0
        %v5185 = vadd.f32 %v5020, %v5184
        %v5186 = vpop.f32.mrb[0].mxu0
        %v5187 = vpop.f32.mrb[0].mxu0
        %v5188 = vadd.f32 %v5020, %v5187
        %v5189 = vpop.f32.mrb[0].mxu0
        %5190 = vmatprep.mubr.bf16.mxu0 0
        %5191 = vmatmul.mubr.bf16.gmra.mrb[0].mxu0 %v4994
        %v5192 = vpop.f32.mrb[0].mxu0
        %v5193 = vadd.f32 %v5020, %v5192
        %v5194 = vpop.f32.mrb[0].mxu0
        %v5195 = vpop.f32.mrb[0].mxu0
        %v5196 = vadd.f32 %v5020, %v5195
        %v5197 = vpop.f32.mrb[0].mxu0
        %5198 = vmatprep.mubr.bf16.mxu0 0
        %5199 = vmatmul.mubr.bf16.gmra.mrb[0].mxu0 %v4995
        %v5200 = vpop.f32.mrb[0].mxu0
        %v5201 = vadd.f32 %v5020, %v5200
        %v5202 = vpop.f32.mrb[0].mxu0
        %v5203 = vpop.f32.mrb[0].mxu0
        %v5204 = vadd.f32 %v5020, %v5203
        %v5205 = vpop.f32.mrb[0].mxu0
        %5206 = vmatprep.mubr.bf16.mxu0 0
        %5207 = vmatmul.mubr.bf16.gmra.mrb[0].mxu0 %v4996
        %v5208 = vpop.f32.mrb[0].mxu0
        %v5209 = vadd.f32 %v5020, %v5208
        %v5210 = vpop.f32.mrb[0].mxu0
        %v5211 = vpop.f32.mrb[0].mxu0
        %v5212 = vadd.f32 %v5020, %v5211
        %v5213 = vpop.f32.mrb[0].mxu0
        %5214 = vmatprep.mubr.bf16.mxu0 0
        %5215 = vmatmul.mubr.bf16.gmra.mrb[0].mxu0 %v4997
        %v5216 = vpop.f32.mrb[0].mxu0
        %v5217 = vadd.f32 %v5020, %v5216
        %v5218 = vpop.f32.mrb[0].mxu0
        %v5219 = vpop.f32.mrb[0].mxu0
        %v5220 = vadd.f32 %v5020, %v5219
        %v5221 = vpop.f32.mrb[0].mxu0
        %5222 = vmatprep.mubr.bf16.mxu0 0
        %5223 = vmatmul.mubr.bf16.gmra.mrb[0].mxu0 %v4998
        %v5224 = vpop.f32.mrb[0].mxu0
        %v5225 = vadd.f32 %v5020, %v5224
        %v5226 = vpop.f32.mrb[0].mxu0
        %v5227 = vpop.f32.mrb[0].mxu0
        %v5228 = vadd.f32 %v5020, %v5227
        %v5229 = vpop.f32.mrb[0].mxu0
        %5230 = vdwg.mxu0
        %5231 = vst [vmem:[%s340] sm:$0xff] %v5105
        %5232 = vst [vmem:[%s340 + $0x8] sm:$0xff] %v5108
        %5233 = vst [vmem:[%s340 + $0x10] sm:$0xff] %v5113
        %5234 = vst [vmem:[%s340 + $0x18] sm:$0xff] %v5116
        %5235 = vst [vmem:[%s340 + $0x20] sm:$0xff] %v5121
        %5236 = vst [vmem:[%s340 + $0x28] sm:$0xff] %v5124
        %5237 = vst [vmem:[%s340 + $0x30] sm:$0xff] %v5129
        %5238 = vst [vmem:[%s340 + $0x38] sm:$0xff] %v5132
        %5239 = vst [vmem:[%s340 + $0x40] sm:$0xff] %v5137
        %5240 = vst [vmem:[%s340 + $0x48] sm:$0xff] %v5140
        %5241 = vst [vmem:[%s340 + $0x50] sm:$0xff] %v5145
        %5242 = vst [vmem:[%s340 + $0x58] sm:$0xff] %v5148
        %5243 = vst [vmem:[%s340 + $0x60] sm:$0xff] %v5153
        %5244 = vst [vmem:[%s340 + $0x68] sm:$0xff] %v5156
        %5245 = vst [vmem:[%s340 + $0x70] sm:$0xff] %v5161
        %5246 = vst [vmem:[%s340 + $0x78] sm:$0xff] %v5164
        %5247 = vst [vmem:[%s340 + $0x80] sm:$0xff] %v5169
        %5248 = vst [vmem:[%s340 + $0x88] sm:$0xff] %v5172
        %5249 = vst [vmem:[%s340 + $0x90] sm:$0xff] %v5177
        %5250 = vst [vmem:[%s340 + $0x98] sm:$0xff] %v5180
        %5251 = vst [vmem:[%s340 + $0xa0] sm:$0xff] %v5185
        %5252 = vst [vmem:[%s340 + $0xa8] sm:$0xff] %v5188
        %5253 = vst [vmem:[%s340 + $0xb0] sm:$0xff] %v5193
        %5254 = vst [vmem:[%s340 + $0xb8] sm:$0xff] %v5196
        %5255 = vst [vmem:[%s340 + $0xc0] sm:$0xff] %v5201
        %5256 = vst [vmem:[%s340 + $0xc8] sm:$0xff] %v5204
        %5257 = vst [vmem:[%s340 + $0xd0] sm:$0xff] %v5209
        %5258 = vst [vmem:[%s340 + $0xd8] sm:$0xff] %v5212
        %5259 = vst [vmem:[%s340 + $0xe0] sm:$0xff] %v5217
        %5260 = vst [vmem:[%s340 + $0xe8] sm:$0xff] %v5220
        %5261 = vst [vmem:[%s340 + $0xf0] sm:$0xff] %v5225
        %5262 = vst [vmem:[%s340 + $0xf8] sm:$0xff] %v5228
        %s5263 = sand.u32 %s186, 1
        %s5264 = scalar_lea.sflag [#allocation4], %s5263
        %s5265 = sand.u32 %s186, 1
        %s5266 = smul.addr %s5265, 256
        %s5267 = scalar_lea.vmem [#allocation10], %s5266
        // Predicated region
        $region65: #{tpu_custom_call.1} parent=47 // pred_check
          %p5268 = pneg %p196
        $region66: #{tpu_custom_call.1} parent=47 // pred_check_branch
          %5270 = sbr.rel (%p5268) target = $region68
        $region67: #{tpu_custom_call.1} parent=47 // pred_region
          %s5272 = ssub.s32 4096, 4096
          %5273 = vsyncadd %s5264, %s5272
          %s5274 = smul.addr %s26, 32
          %s5275 = smul.addr %s5274, 128
          %s5276 = scalar_lea.hbm %s7, %s5275
          %s5277 = sshll.u32 %s5267, 4
          %s5278 = int_to_ptr.vmem [resolvable:$true] %s5277
          %5283 = dma.vmem_to_hbm [thread:$0]  %s5278, 4096, %s5276, %s5264, 128, 128, 8
        $region68: #{tpu_custom_call.1} parent=47 // pred_fallthru
          _
      $region48: #{tpu_custom_call.1} parent=5 // pred_fallthru
        _
      %p5284 = scmp.le.s32.totalorder 2, %s21
      // Predicated region
      $region69: #{tpu_custom_call.1} parent=5 // pred_check
        %p5285 = pneg %p5284
      $region70: #{tpu_custom_call.1} parent=5 // pred_check_branch
        %5287 = sbr.rel (%p5285) target = $region72
      $region71: #{tpu_custom_call.1} parent=5 // pred_region
        %s5288 = ssub.s32 %s21, 2
        // Predicated region
        $region73: #{tpu_custom_call.1} parent=71 // pred_check
          %p5289 = pneg %p202
        $region74: #{tpu_custom_call.1} parent=71 // pred_check_branch
          %5291 = sbr.rel (%p5289) target = $region76
        $region75: #{tpu_custom_call.1} parent=71 // pred_region
          %s5292 = sand.u32 %s187, 1
          %s5293 = scalar_lea.sflag [#allocation4], %s5292
          %s5294 = sand.u32 %s187, 1
          %s5295 = smul.addr %s5294, 256
          %s5296 = scalar_lea.vmem [#allocation10], %s5295
          %5297 = dma.done %s5293, 4096
        $region76: #{tpu_custom_call.1} parent=71 // pred_fallthru
          _
      $region72: #{tpu_custom_call.1} parent=5 // pred_fallthru
        _
    $region6: #{tpu_custom_call.1} parent=1 // loop_footer
      %s25 = sadd.s32 1, %s21
    $region7: #{tpu_custom_call.1} parent=1 // loop_footer_branch
      %20 = sbr.rel target = $region3
    $region8: #{tpu_custom_call.1} parent=1 // loop_exit
      _
    %5298 = vsyncpa [#allocation3], 1
    %s5299 = scalar_lea.sflag [#allocation3], 1
    %5300 = vsyncpa %s5299, 1
    %5301 = vsyncpa [#allocation6], 1
    %5302 = vsyncpa [#allocation9], 1
    %5303 = vsyncpa [#allocation4], 1
    %s5304 = scalar_lea.sflag [#allocation4], 1
    %5305 = vsyncpa %s5304, 1

</llo_original>
